<compile_context>
chip_gen: v7x
topology: tpu7x:2x2x1
jax: 0.10.0
libtpu: 0.0.40
codegen_flags: <defaults>
</compile_context>

<pallas_src>
import jax
import jax.numpy as jnp
from jax.experimental import pallas as pl
from jax.experimental.pallas import tpu as pltpu

NUM_LAYERS = 3  # number_layers


def _wo_attention_kernel(
    adj_ref,    # [G, N, N]    bf16 dense 0/1 adjacency, adj[g, dst, src]
    x_ref,      # [G*N, Fin]   bf16 raw node features (graph-major rows)
    mw_ref,     # [Fin, H]     bf16 merge weight
    mb_ref,     # [1, H]       f32 merge bias
    gw_ref,     # [L, H, H]    bf16 GraphConv weights
    gb_ref,     # [L, 1, H]    f32 GraphConv biases
    w0_ref,     # [3H, 2H]     bf16
    b0_ref,     # [1, 2H]      f32
    w1_ref,     # [2H, H]      bf16
    b1_ref,     # [1, H]       f32
    w2t_ref,    # [1, H]       bf16 (last linear weight, pre-transposed to a row)
    b2_ref,     # [1, 1]       f32
    out_ref,    # [1, 1, G*N]  f32 sigmoid probabilities (lane-dense row)
):
    f32 = jnp.float32
    bf16 = jnp.bfloat16

    G, N, _ = adj_ref.shape
    H = gw_ref.shape[-1]
    GN = G * N

    # ---- Degrees on the MXU: adjacency stays exactly 0/1 in bf16; no f32
    # ---- materialization of the [N, N] tile and no XLU reductions.
    ones_col = jnp.ones((N, 1), bf16)
    deg_in_parts, deg_out_parts = [], []
    for g in range(G):
        a = adj_ref[g]                                              # [N, N] bf16
        # in-degree of dst nodes  = row sums:    A @ 1         -> [N, 1]
        deg_in_parts.append(jnp.dot(a, ones_col, preferred_element_type=f32))
        # out-degree of src nodes = column sums: contract dst  -> [N, 1]
        deg_out_parts.append(
            jax.lax.dot_general(a, ones_col, (((0,), (0,)), ((), ())),
                                preferred_element_type=f32))
    inv_in = jax.lax.rsqrt(jnp.maximum(jnp.concatenate(deg_in_parts, axis=0), 1.0))
    inv_out = jax.lax.rsqrt(jnp.maximum(jnp.concatenate(deg_out_parts, axis=0), 1.0))
    # both [G*N, 1] f32

    # ---- merge linear over all G graphs at once: [G*N, Fin] @ [Fin, H]
    h = jnp.dot(x_ref[...], mw_ref[...], preferred_element_type=f32) + mb_ref[...]

    acc0 = jnp.zeros((GN, b0_ref.shape[-1]), f32)   # folded concat @ W0 accumulator

    for i in range(NUM_LAYERS):                      # unrolled, 3 iterations
        # source-side normalization applied to the features (A stays 0/1 bf16)
        h_src = (h * inv_out).astype(bf16)                          # [G*N, H]
        # graph-specific aggregation: A @ (D_out^{-1/2} h), per graph on the MXU
        agg_parts = [
            jnp.dot(adj_ref[g], h_src[g * N:(g + 1) * N, :],
                    preferred_element_type=f32)
            for g in range(G)
        ]
        agg = jnp.concatenate(agg_parts, axis=0) * inv_in           # dst-side norm
        # GraphConv weight + bias + relu, batched over all G graphs
        h = jnp.maximum(
            jnp.dot(agg.astype(bf16), gw_ref[i], preferred_element_type=f32)
            + gb_ref[i],
            0.0,
        )
        # TODO(synk): nn.Dropout is stochastic; identity here (eval-mode semantics).
        # torch.cat(outputs, dim=1) @ mlp_w0 folded into a running accumulation:
        acc0 = acc0 + jnp.dot(
            h.astype(bf16), w0_ref[i * H:(i + 1) * H, :], preferred_element_type=f32)

    # ---- MLP head: (3H -> 2H) relu, (2H -> H) relu, (H -> 1), sigmoid
    y = jnp.maximum(acc0 + b0_ref[...], 0.0)                        # [G*N, 2H]
    y = jnp.maximum(
        jnp.dot(y.astype(bf16), w1_ref[...], preferred_element_type=f32) + b1_ref[...],
        0.0,
    )                                                               # [G*N, H]
    # Last Linear(H->1) emitted directly as a lane-dense [1, G*N] row on the MXU
    # (replaces the old identity-mask column->row flip): contract H with H.
    logit_row = jax.lax.dot_general(
        w2t_ref[...], y.astype(bf16), (((1,), (1,)), ((), ())),
        preferred_element_type=f32) + b2_ref[...]                   # [1, G*N]
    out_ref[0] = jax.nn.sigmoid(logit_row)


def _resident_spec(shape):
    """Full-array block whose index never changes (DMA'd once, stays in VMEM)."""
    ndim = len(shape)
    return pl.BlockSpec(shape, lambda b: (0,) * ndim)


def _grid_dimension_semantics():
    """CORE_PARALLEL is what actually shards the graph-batch axis across v7x's two
    TensorCores; single-core chips (v5e/v6e) keep the known-good 'parallel'."""
    try:
        kind = jax.devices()[0].device_kind.lower()
    except Exception:
        kind = ""
    if "v7" in kind or "7x" in kind:
        return (pltpu.CORE_PARALLEL,)
    return ("parallel",)


def wo_attention_prediction(adj, x, params, *, graphs_per_step=2):
    """Fused forward pass over a batch of graphs. Returns probabilities, shape [B, N]."""
    B, N, _ = adj.shape
    f_in = x.shape[-1]
    H = params["merge_w"].shape[1]
    bf16 = jnp.bfloat16

    G = max(1, min(graphs_per_step, B))
    while B % G:                       # grid steps must tile the batch exactly
        G -= 1
    steps = B // G

    args = (
        adj.astype(bf16),                            # 0/1 entries are exact in bf16
        x.reshape(B * N, f_in).astype(bf16),         # graph-major node rows, bf16 DMA
        params["merge_w"].astype(bf16), params["merge_b"],
        params["gcn_w"].astype(bf16),   params["gcn_b"],
        params["mlp_w0"].astype(bf16),  params["mlp_b0"],
        params["mlp_w1"].astype(bf16),  params["mlp_b1"],
        params["mlp_w2"].reshape(1, H).astype(bf16),  # [H,1] -> [1,H] weight row
        params["mlp_b2"],
    )
    in_specs = [
        pl.BlockSpec((G, N, N), lambda b: (b, 0, 0)),        # adjacency (G graphs/step)
        pl.BlockSpec((G * N, f_in), lambda b: (b, 0)),       # features  (G graphs/step)
        _resident_spec((f_in, H)), _resident_spec((1, H)),   # merge
        _resident_spec((NUM_LAYERS, H, H)),                  # gcn_w
        _resident_spec((NUM_LAYERS, 1, H)),                  # gcn_b
        _resident_spec((3 * H, 2 * H)), _resident_spec((1, 2 * H)),
        _resident_spec((2 * H, H)), _resident_spec((1, H)),
        _resident_spec((1, H)), _resident_spec((1, 1)),
    ]
    out = pl.pallas_call(
        _wo_attention_kernel,
        out_shape=jax.ShapeDtypeStruct((steps, 1, G * N), jnp.float32),
        grid=(steps,),
        in_specs=in_specs,
        out_specs=pl.BlockSpec((1, 1, G * N), lambda b: (b, 0, 0)),
        compiler_params=pltpu.CompilerParams(
            dimension_semantics=_grid_dimension_semantics(),
        ),
    )(*args)
    return out.reshape(B, N)


def _reference_forward(adj, x, p):
    """Pure-JAX f32 reference matching the PyTorch module semantics."""
    deg_in = jnp.maximum(jnp.sum(adj, axis=2, keepdims=True), 1.0)   # [B, N, 1]
    deg_out = jnp.maximum(jnp.sum(adj, axis=1, keepdims=True), 1.0)  # [B, 1, N]
    adj_n = adj * jax.lax.rsqrt(deg_in) * jax.lax.rsqrt(deg_out)
    h = jnp.einsum("bnf,fh->bnh", x, p["merge_w"]) + p["merge_b"]
    outs = []
    for i in range(NUM_LAYERS):
        agg = jnp.einsum("bmn,bnh->bmh", adj_n, h)
        h = jnp.maximum(jnp.einsum("bnh,hk->bnk", agg, p["gcn_w"][i]) + p["gcn_b"][i], 0.0)
        outs.append(h)
    cat = jnp.concatenate(outs, axis=-1)
    y = jnp.maximum(jnp.einsum("bnc,ck->bnk", cat, p["mlp_w0"]) + p["mlp_b0"], 0.0)
    y = jnp.maximum(jnp.einsum("bnc,ck->bnk", y, p["mlp_w1"]) + p["mlp_b1"], 0.0)
    logit = jnp.einsum("bnc,ck->bnk", y, p["mlp_w2"]) + p["mlp_b2"]
    return jax.nn.sigmoid(logit)[..., 0]


def init_params(key, in_feats, hidden):
    """Deterministic synthetic parameter init matching the module's shapes."""
    ks = jax.random.split(key, 16)
    L, H = NUM_LAYERS, hidden

    def lin(k, fan_in, fan_out):
        scale = 1.0 / jnp.sqrt(jnp.float32(fan_in))
        kw, kb = jax.random.split(k)
        w = jax.random.uniform(kw, (fan_in, fan_out), jnp.float32, -scale, scale)
        b = jax.random.uniform(kb, (1, fan_out), jnp.float32, -scale, scale)
        return w, b

    merge_w, merge_b = lin(ks[0], in_feats, H)
    gcn_w = jnp.stack([lin(ks[1 + i], H, H)[0] for i in range(L)], axis=0)  # [L, H, H]
    gcn_b = jnp.zeros((L, 1, H), jnp.float32)  # DGL GraphConv bias init = zeros
    mlp_w0, mlp_b0 = lin(ks[10], 3 * H, 2 * H)
    mlp_w1, mlp_b1 = lin(ks[11], 2 * H, H)
    mlp_w2, mlp_b2 = lin(ks[12], H, 1)

    return dict(
        merge_w=merge_w, merge_b=merge_b,
        gcn_w=gcn_w, gcn_b=gcn_b,
        mlp_w0=mlp_w0, mlp_b0=mlp_b0,
        mlp_w1=mlp_w1, mlp_b1=mlp_b1,
        mlp_w2=mlp_w2, mlp_b2=mlp_b2,
    )


if __name__ == "__main__":
    key = jax.random.PRNGKey(0)
    k_adj, k_x, k_p = jax.random.split(key, 3)

    B = 4          # total graphs; 2 graphs per grid step -> grid=(2,)
    N = 128        # nodes per graph: fills the 128-sublane / 128-lane MXU tiles
    IN_FEATS = 16
    HIDDEN = 32

    # Deterministic random *directed* graphs + self loops (exercises the distinct
    # in-/out-degree normalizations; self loops keep every degree >= 1).
    rand = jax.random.uniform(k_adj, (B, N, N))
    adj = (rand > 0.7).astype(jnp.float32)
    adj = jnp.maximum(adj, jnp.eye(N, dtype=jnp.float32)[None])

    x = jax.random.normal(k_x, (B, N, IN_FEATS), jnp.float32)
    params = init_params(k_p, IN_FEATS, HIDDEN)

    probs = jax.block_until_ready(jax.jit(wo_attention_prediction)(adj, x, params))

    assert probs.shape == (B, N), probs.shape
    assert bool(jnp.all(jnp.isfinite(probs)))
    assert bool(jnp.all((probs >= 0.0) & (probs <= 1.0)))

    ref = _reference_forward(adj, x, params)
    max_err = float(jnp.max(jnp.abs(probs - ref)))
    assert max_err < 5e-2, f"max abs err vs f32 reference: {max_err}"
    print("KERNEL_OK")
</pallas_src>

<mosaic_0001>
module attributes {stable_mosaic.version = 11 : i64} {
  func.func @_wo_attention_kernel(%arg0: i32, %arg1: memref<2x128x128xbf16, #tpu.memory_space<vmem>>, %arg2: memref<256x16xbf16, #tpu.memory_space<vmem>>, %arg3: memref<16x32xbf16, #tpu.memory_space<vmem>>, %arg4: memref<1x32xf32, #tpu.memory_space<vmem>>, %arg5: memref<3x32x32xbf16, #tpu.memory_space<vmem>>, %arg6: memref<3x1x32xf32, #tpu.memory_space<vmem>>, %arg7: memref<96x64xbf16, #tpu.memory_space<vmem>>, %arg8: memref<1x64xf32, #tpu.memory_space<vmem>>, %arg9: memref<64x32xbf16, #tpu.memory_space<vmem>>, %arg10: memref<1x32xf32, #tpu.memory_space<vmem>>, %arg11: memref<1x32xbf16, #tpu.memory_space<vmem>>, %arg12: memref<1x1xf32, #tpu.memory_space<vmem>>, %arg13: memref<1x1x256xf32, #tpu.memory_space<vmem>>) attributes {dimension_semantics = [#tpu.dimension_semantics<parallel>], iteration_bounds = array<i64: 2>, scalar_prefetch = 0 : i64, scratch_operands = 0 : i64, tpu.core_type = #tpu.core_type<tc>, window_params = [{transform_indices = @transform_0, window_bounds = array<i64: 2, 128, 128>}, {transform_indices = @transform_1, window_bounds = array<i64: 256, 16>}, {pipeline_mode = #tpu.pipeline_mode<synchronous>, transform_indices = @transform_2, window_bounds = array<i64: 16, 32>}, {pipeline_mode = #tpu.pipeline_mode<synchronous>, transform_indices = @transform_3, window_bounds = array<i64: 1, 32>}, {pipeline_mode = #tpu.pipeline_mode<synchronous>, transform_indices = @transform_4, window_bounds = array<i64: 3, 32, 32>}, {pipeline_mode = #tpu.pipeline_mode<synchronous>, transform_indices = @transform_5, window_bounds = array<i64: 3, 1, 32>}, {pipeline_mode = #tpu.pipeline_mode<synchronous>, transform_indices = @transform_6, window_bounds = array<i64: 96, 64>}, {pipeline_mode = #tpu.pipeline_mode<synchronous>, transform_indices = @transform_7, window_bounds = array<i64: 1, 64>}, {pipeline_mode = #tpu.pipeline_mode<synchronous>, transform_indices = @transform_8, window_bounds = array<i64: 64, 32>}, {pipeline_mode = #tpu.pipeline_mode<synchronous>, transform_indices = @transform_9, window_bounds = array<i64: 1, 32>}, {pipeline_mode = #tpu.pipeline_mode<synchronous>, transform_indices = @transform_10, window_bounds = array<i64: 1, 32>}, {pipeline_mode = #tpu.pipeline_mode<synchronous>, transform_indices = @transform_11, window_bounds = array<i64: 1, 1>}, {transform_indices = @transform_12, window_bounds = array<i64: 1, 1, 256>}]} {
    %cst = arith.constant 1.000000e+00 : bf16
    %0 = vector.broadcast %cst : bf16 to vector<128x1xbf16>
    %c0 = arith.constant 0 : index
    %c0_0 = arith.constant 0 : index
    %c0_1 = arith.constant 0 : index
    %1 = vector.load %arg1[%c0, %c0_0, %c0_1] : memref<2x128x128xbf16, #tpu.memory_space<vmem>>, vector<1x128x128xbf16>
    %2 = vector.shape_cast %1 : vector<1x128x128xbf16> to vector<128x128xbf16>
    %cst_2 = arith.constant dense<0.000000e+00> : vector<128x1xf32>
    %3 = tpu.matmul %2, %0, %cst_2 {dimension_numbers = #tpu.dot_dimension_numbers<[1], [0], [0], [1], [0, 0, 1, 1], [], []>} : vector<128x128xbf16>, vector<128x1xbf16>, vector<128x1xf32> -> vector<128x1xf32>
    %cst_3 = arith.constant dense<0.000000e+00> : vector<128x1xf32>
    %4 = tpu.matmul %2, %0, %cst_3 {dimension_numbers = #tpu.dot_dimension_numbers<[0], [0], [1], [1], [0, 1, 1, 1], [], []>} : vector<128x128xbf16>, vector<128x1xbf16>, vector<128x1xf32> -> vector<128x1xf32>
    %c1 = arith.constant 1 : index
    %c0_4 = arith.constant 0 : index
    %c0_5 = arith.constant 0 : index
    %5 = vector.load %arg1[%c1, %c0_4, %c0_5] : memref<2x128x128xbf16, #tpu.memory_space<vmem>>, vector<1x128x128xbf16>
    %6 = vector.shape_cast %5 : vector<1x128x128xbf16> to vector<128x128xbf16>
    %cst_6 = arith.constant dense<0.000000e+00> : vector<128x1xf32>
    %7 = tpu.matmul %6, %0, %cst_6 {dimension_numbers = #tpu.dot_dimension_numbers<[1], [0], [0], [1], [0, 0, 1, 1], [], []>} : vector<128x128xbf16>, vector<128x1xbf16>, vector<128x1xf32> -> vector<128x1xf32>
    %cst_7 = arith.constant dense<0.000000e+00> : vector<128x1xf32>
    %8 = tpu.matmul %6, %0, %cst_7 {dimension_numbers = #tpu.dot_dimension_numbers<[0], [0], [1], [1], [0, 1, 1, 1], [], []>} : vector<128x128xbf16>, vector<128x1xbf16>, vector<128x1xf32> -> vector<128x1xf32>
    %9 = tpu.concatenate %3, %7 in 0 : vector<128x1xf32>, vector<128x1xf32> -> vector<256x1xf32>
    %cst_8 = arith.constant 1.000000e+00 : f32
    %10 = vector.broadcast %cst_8 : f32 to vector<256x1xf32>
    %11 = arith.maximumf %9, %10 : vector<256x1xf32>
    %12 = math.rsqrt %11 : vector<256x1xf32>
    %13 = tpu.concatenate %4, %8 in 0 : vector<128x1xf32>, vector<128x1xf32> -> vector<256x1xf32>
    %cst_9 = arith.constant 1.000000e+00 : f32
    %14 = vector.broadcast %cst_9 : f32 to vector<256x1xf32>
    %15 = arith.maximumf %13, %14 : vector<256x1xf32>
    %16 = math.rsqrt %15 : vector<256x1xf32>
    %c0_10 = arith.constant 0 : index
    %c0_11 = arith.constant 0 : index
    %17 = vector.load %arg2[%c0_10, %c0_11] : memref<256x16xbf16, #tpu.memory_space<vmem>>, vector<256x16xbf16>
    %c0_12 = arith.constant 0 : index
    %c0_13 = arith.constant 0 : index
    %18 = vector.load %arg3[%c0_12, %c0_13] : memref<16x32xbf16, #tpu.memory_space<vmem>>, vector<16x32xbf16>
    %cst_14 = arith.constant dense<0.000000e+00> : vector<256x32xf32>
    %19 = tpu.matmul %17, %18, %cst_14 {dimension_numbers = #tpu.dot_dimension_numbers<[1], [0], [0], [1], [0, 0, 1, 1], [], []>} : vector<256x16xbf16>, vector<16x32xbf16>, vector<256x32xf32> -> vector<256x32xf32>
    %c0_15 = arith.constant 0 : index
    %c0_16 = arith.constant 0 : index
    %20 = vector.load %arg4[%c0_15, %c0_16] : memref<1x32xf32, #tpu.memory_space<vmem>>, vector<1x32xf32>
    %21 = vector.broadcast %20 : vector<1x32xf32> to vector<256x32xf32>
    %22 = arith.addf %19, %21 : vector<256x32xf32>
    %cst_17 = arith.constant 0.000000e+00 : f32
    %23 = vector.broadcast %cst_17 : f32 to vector<256x64xf32>
    %24 = vector.broadcast %16 : vector<256x1xf32> to vector<256x32xf32>
    %25 = arith.mulf %22, %24 : vector<256x32xf32>
    %26 = arith.truncf %25 : vector<256x32xf32> to vector<256x32xbf16>
    %c0_18 = arith.constant 0 : index
    %c0_19 = arith.constant 0 : index
    %c0_20 = arith.constant 0 : index
    %27 = vector.load %arg1[%c0_18, %c0_19, %c0_20] : memref<2x128x128xbf16, #tpu.memory_space<vmem>>, vector<1x128x128xbf16>
    %28 = vector.shape_cast %27 : vector<1x128x128xbf16> to vector<128x128xbf16>
    %29 = vector.extract_strided_slice %26 {offsets = [0, 0], sizes = [128, 32], strides = [1, 1]} : vector<256x32xbf16> to vector<128x32xbf16>
    %cst_21 = arith.constant dense<0.000000e+00> : vector<128x32xf32>
    %30 = tpu.matmul %28, %29, %cst_21 {dimension_numbers = #tpu.dot_dimension_numbers<[1], [0], [0], [1], [0, 0, 1, 1], [], []>} : vector<128x128xbf16>, vector<128x32xbf16>, vector<128x32xf32> -> vector<128x32xf32>
    %c1_22 = arith.constant 1 : index
    %c0_23 = arith.constant 0 : index
    %c0_24 = arith.constant 0 : index
    %31 = vector.load %arg1[%c1_22, %c0_23, %c0_24] : memref<2x128x128xbf16, #tpu.memory_space<vmem>>, vector<1x128x128xbf16>
    %32 = vector.shape_cast %31 : vector<1x128x128xbf16> to vector<128x128xbf16>
    %33 = vector.extract_strided_slice %26 {offsets = [128, 0], sizes = [128, 32], strides = [1, 1]} : vector<256x32xbf16> to vector<128x32xbf16>
    %cst_25 = arith.constant dense<0.000000e+00> : vector<128x32xf32>
    %34 = tpu.matmul %32, %33, %cst_25 {dimension_numbers = #tpu.dot_dimension_numbers<[1], [0], [0], [1], [0, 0, 1, 1], [], []>} : vector<128x128xbf16>, vector<128x32xbf16>, vector<128x32xf32> -> vector<128x32xf32>
    %35 = tpu.concatenate %30, %34 in 0 : vector<128x32xf32>, vector<128x32xf32> -> vector<256x32xf32>
    %36 = vector.broadcast %12 : vector<256x1xf32> to vector<256x32xf32>
    %37 = arith.mulf %35, %36 : vector<256x32xf32>
    %38 = arith.truncf %37 : vector<256x32xf32> to vector<256x32xbf16>
    %c0_26 = arith.constant 0 : index
    %c0_27 = arith.constant 0 : index
    %c0_28 = arith.constant 0 : index
    %39 = vector.load %arg5[%c0_26, %c0_27, %c0_28] : memref<3x32x32xbf16, #tpu.memory_space<vmem>>, vector<1x32x32xbf16>
    %40 = vector.shape_cast %39 : vector<1x32x32xbf16> to vector<32x32xbf16>
    %cst_29 = arith.constant dense<0.000000e+00> : vector<256x32xf32>
    %41 = tpu.matmul %38, %40, %cst_29 {dimension_numbers = #tpu.dot_dimension_numbers<[1], [0], [0], [1], [0, 0, 1, 1], [], []>} : vector<256x32xbf16>, vector<32x32xbf16>, vector<256x32xf32> -> vector<256x32xf32>
    %c0_30 = arith.constant 0 : index
    %c0_31 = arith.constant 0 : index
    %c0_32 = arith.constant 0 : index
    %42 = vector.load %arg6[%c0_30, %c0_31, %c0_32] : memref<3x1x32xf32, #tpu.memory_space<vmem>>, vector<1x1x32xf32>
    %43 = vector.shape_cast %42 : vector<1x1x32xf32> to vector<1x32xf32>
    %44 = vector.broadcast %43 : vector<1x32xf32> to vector<256x32xf32>
    %45 = arith.addf %41, %44 : vector<256x32xf32>
    %cst_33 = arith.constant 0.000000e+00 : f32
    %46 = vector.broadcast %cst_33 : f32 to vector<256x32xf32>
    %47 = arith.maximumf %45, %46 : vector<256x32xf32>
    %48 = arith.truncf %47 : vector<256x32xf32> to vector<256x32xbf16>
    %c0_34 = arith.constant 0 : index
    %c0_35 = arith.constant 0 : index
    %49 = vector.load %arg7[%c0_34, %c0_35] : memref<96x64xbf16, #tpu.memory_space<vmem>>, vector<32x64xbf16>
    %cst_36 = arith.constant dense<0.000000e+00> : vector<256x64xf32>
    %50 = tpu.matmul %48, %49, %cst_36 {dimension_numbers = #tpu.dot_dimension_numbers<[1], [0], [0], [1], [0, 0, 1, 1], [], []>} : vector<256x32xbf16>, vector<32x64xbf16>, vector<256x64xf32> -> vector<256x64xf32>
    %51 = arith.addf %23, %50 : vector<256x64xf32>
    %52 = vector.broadcast %16 : vector<256x1xf32> to vector<256x32xf32>
    %53 = arith.mulf %47, %52 : vector<256x32xf32>
    %54 = arith.truncf %53 : vector<256x32xf32> to vector<256x32xbf16>
    %c0_37 = arith.constant 0 : index
    %c0_38 = arith.constant 0 : index
    %c0_39 = arith.constant 0 : index
    %55 = vector.load %arg1[%c0_37, %c0_38, %c0_39] : memref<2x128x128xbf16, #tpu.memory_space<vmem>>, vector<1x128x128xbf16>
    %56 = vector.shape_cast %55 : vector<1x128x128xbf16> to vector<128x128xbf16>
    %57 = vector.extract_strided_slice %54 {offsets = [0, 0], sizes = [128, 32], strides = [1, 1]} : vector<256x32xbf16> to vector<128x32xbf16>
    %cst_40 = arith.constant dense<0.000000e+00> : vector<128x32xf32>
    %58 = tpu.matmul %56, %57, %cst_40 {dimension_numbers = #tpu.dot_dimension_numbers<[1], [0], [0], [1], [0, 0, 1, 1], [], []>} : vector<128x128xbf16>, vector<128x32xbf16>, vector<128x32xf32> -> vector<128x32xf32>
    %c1_41 = arith.constant 1 : index
    %c0_42 = arith.constant 0 : index
    %c0_43 = arith.constant 0 : index
    %59 = vector.load %arg1[%c1_41, %c0_42, %c0_43] : memref<2x128x128xbf16, #tpu.memory_space<vmem>>, vector<1x128x128xbf16>
    %60 = vector.shape_cast %59 : vector<1x128x128xbf16> to vector<128x128xbf16>
    %61 = vector.extract_strided_slice %54 {offsets = [128, 0], sizes = [128, 32], strides = [1, 1]} : vector<256x32xbf16> to vector<128x32xbf16>
    %cst_44 = arith.constant dense<0.000000e+00> : vector<128x32xf32>
    %62 = tpu.matmul %60, %61, %cst_44 {dimension_numbers = #tpu.dot_dimension_numbers<[1], [0], [0], [1], [0, 0, 1, 1], [], []>} : vector<128x128xbf16>, vector<128x32xbf16>, vector<128x32xf32> -> vector<128x32xf32>
    %63 = tpu.concatenate %58, %62 in 0 : vector<128x32xf32>, vector<128x32xf32> -> vector<256x32xf32>
    %64 = vector.broadcast %12 : vector<256x1xf32> to vector<256x32xf32>
    %65 = arith.mulf %63, %64 : vector<256x32xf32>
    %66 = arith.truncf %65 : vector<256x32xf32> to vector<256x32xbf16>
    %c1_45 = arith.constant 1 : index
    %c0_46 = arith.constant 0 : index
    %c0_47 = arith.constant 0 : index
    %67 = vector.load %arg5[%c1_45, %c0_46, %c0_47] : memref<3x32x32xbf16, #tpu.memory_space<vmem>>, vector<1x32x32xbf16>
    %68 = vector.shape_cast %67 : vector<1x32x32xbf16> to vector<32x32xbf16>
    %cst_48 = arith.constant dense<0.000000e+00> : vector<256x32xf32>
    %69 = tpu.matmul %66, %68, %cst_48 {dimension_numbers = #tpu.dot_dimension_numbers<[1], [0], [0], [1], [0, 0, 1, 1], [], []>} : vector<256x32xbf16>, vector<32x32xbf16>, vector<256x32xf32> -> vector<256x32xf32>
    %c1_49 = arith.constant 1 : index
    %c0_50 = arith.constant 0 : index
    %c0_51 = arith.constant 0 : index
    %70 = vector.load %arg6[%c1_49, %c0_50, %c0_51] : memref<3x1x32xf32, #tpu.memory_space<vmem>>, vector<1x1x32xf32>
    %71 = vector.shape_cast %70 : vector<1x1x32xf32> to vector<1x32xf32>
    %72 = vector.broadcast %71 : vector<1x32xf32> to vector<256x32xf32>
    %73 = arith.addf %69, %72 : vector<256x32xf32>
    %cst_52 = arith.constant 0.000000e+00 : f32
    %74 = vector.broadcast %cst_52 : f32 to vector<256x32xf32>
    %75 = arith.maximumf %73, %74 : vector<256x32xf32>
    %76 = arith.truncf %75 : vector<256x32xf32> to vector<256x32xbf16>
    %c32 = arith.constant 32 : index
    %c0_53 = arith.constant 0 : index
    %77 = vector.load %arg7[%c32, %c0_53] : memref<96x64xbf16, #tpu.memory_space<vmem>>, vector<32x64xbf16>
    %cst_54 = arith.constant dense<0.000000e+00> : vector<256x64xf32>
    %78 = tpu.matmul %76, %77, %cst_54 {dimension_numbers = #tpu.dot_dimension_numbers<[1], [0], [0], [1], [0, 0, 1, 1], [], []>} : vector<256x32xbf16>, vector<32x64xbf16>, vector<256x64xf32> -> vector<256x64xf32>
    %79 = arith.addf %51, %78 : vector<256x64xf32>
    %80 = vector.broadcast %16 : vector<256x1xf32> to vector<256x32xf32>
    %81 = arith.mulf %75, %80 : vector<256x32xf32>
    %82 = arith.truncf %81 : vector<256x32xf32> to vector<256x32xbf16>
    %c0_55 = arith.constant 0 : index
    %c0_56 = arith.constant 0 : index
    %c0_57 = arith.constant 0 : index
    %83 = vector.load %arg1[%c0_55, %c0_56, %c0_57] : memref<2x128x128xbf16, #tpu.memory_space<vmem>>, vector<1x128x128xbf16>
    %84 = vector.shape_cast %83 : vector<1x128x128xbf16> to vector<128x128xbf16>
    %85 = vector.extract_strided_slice %82 {offsets = [0, 0], sizes = [128, 32], strides = [1, 1]} : vector<256x32xbf16> to vector<128x32xbf16>
    %cst_58 = arith.constant dense<0.000000e+00> : vector<128x32xf32>
    %86 = tpu.matmul %84, %85, %cst_58 {dimension_numbers = #tpu.dot_dimension_numbers<[1], [0], [0], [1], [0, 0, 1, 1], [], []>} : vector<128x128xbf16>, vector<128x32xbf16>, vector<128x32xf32> -> vector<128x32xf32>
    %c1_59 = arith.constant 1 : index
    %c0_60 = arith.constant 0 : index
    %c0_61 = arith.constant 0 : index
    %87 = vector.load %arg1[%c1_59, %c0_60, %c0_61] : memref<2x128x128xbf16, #tpu.memory_space<vmem>>, vector<1x128x128xbf16>
    %88 = vector.shape_cast %87 : vector<1x128x128xbf16> to vector<128x128xbf16>
    %89 = vector.extract_strided_slice %82 {offsets = [128, 0], sizes = [128, 32], strides = [1, 1]} : vector<256x32xbf16> to vector<128x32xbf16>
    %cst_62 = arith.constant dense<0.000000e+00> : vector<128x32xf32>
    %90 = tpu.matmul %88, %89, %cst_62 {dimension_numbers = #tpu.dot_dimension_numbers<[1], [0], [0], [1], [0, 0, 1, 1], [], []>} : vector<128x128xbf16>, vector<128x32xbf16>, vector<128x32xf32> -> vector<128x32xf32>
    %91 = tpu.concatenate %86, %90 in 0 : vector<128x32xf32>, vector<128x32xf32> -> vector<256x32xf32>
    %92 = vector.broadcast %12 : vector<256x1xf32> to vector<256x32xf32>
    %93 = arith.mulf %91, %92 : vector<256x32xf32>
    %94 = arith.truncf %93 : vector<256x32xf32> to vector<256x32xbf16>
    %c2 = arith.constant 2 : index
    %c0_63 = arith.constant 0 : index
    %c0_64 = arith.constant 0 : index
    %95 = vector.load %arg5[%c2, %c0_63, %c0_64] : memref<3x32x32xbf16, #tpu.memory_space<vmem>>, vector<1x32x32xbf16>
    %96 = vector.shape_cast %95 : vector<1x32x32xbf16> to vector<32x32xbf16>
    %cst_65 = arith.constant dense<0.000000e+00> : vector<256x32xf32>
    %97 = tpu.matmul %94, %96, %cst_65 {dimension_numbers = #tpu.dot_dimension_numbers<[1], [0], [0], [1], [0, 0, 1, 1], [], []>} : vector<256x32xbf16>, vector<32x32xbf16>, vector<256x32xf32> -> vector<256x32xf32>
    %c2_66 = arith.constant 2 : index
    %c0_67 = arith.constant 0 : index
    %c0_68 = arith.constant 0 : index
    %98 = vector.load %arg6[%c2_66, %c0_67, %c0_68] : memref<3x1x32xf32, #tpu.memory_space<vmem>>, vector<1x1x32xf32>
    %99 = vector.shape_cast %98 : vector<1x1x32xf32> to vector<1x32xf32>
    %100 = vector.broadcast %99 : vector<1x32xf32> to vector<256x32xf32>
    %101 = arith.addf %97, %100 : vector<256x32xf32>
    %cst_69 = arith.constant 0.000000e+00 : f32
    %102 = vector.broadcast %cst_69 : f32 to vector<256x32xf32>
    %103 = arith.maximumf %101, %102 : vector<256x32xf32>
    %104 = arith.truncf %103 : vector<256x32xf32> to vector<256x32xbf16>
    %c64 = arith.constant 64 : index
    %c0_70 = arith.constant 0 : index
    %105 = vector.load %arg7[%c64, %c0_70] : memref<96x64xbf16, #tpu.memory_space<vmem>>, vector<32x64xbf16>
    %cst_71 = arith.constant dense<0.000000e+00> : vector<256x64xf32>
    %106 = tpu.matmul %104, %105, %cst_71 {dimension_numbers = #tpu.dot_dimension_numbers<[1], [0], [0], [1], [0, 0, 1, 1], [], []>} : vector<256x32xbf16>, vector<32x64xbf16>, vector<256x64xf32> -> vector<256x64xf32>
    %107 = arith.addf %79, %106 : vector<256x64xf32>
    %c0_72 = arith.constant 0 : index
    %c0_73 = arith.constant 0 : index
    %108 = vector.load %arg8[%c0_72, %c0_73] : memref<1x64xf32, #tpu.memory_space<vmem>>, vector<1x64xf32>
    %109 = vector.broadcast %108 : vector<1x64xf32> to vector<256x64xf32>
    %110 = arith.addf %107, %109 : vector<256x64xf32>
    %cst_74 = arith.constant 0.000000e+00 : f32
    %111 = vector.broadcast %cst_74 : f32 to vector<256x64xf32>
    %112 = arith.maximumf %110, %111 : vector<256x64xf32>
    %113 = arith.truncf %112 : vector<256x64xf32> to vector<256x64xbf16>
    %c0_75 = arith.constant 0 : index
    %c0_76 = arith.constant 0 : index
    %114 = vector.load %arg9[%c0_75, %c0_76] : memref<64x32xbf16, #tpu.memory_space<vmem>>, vector<64x32xbf16>
    %cst_77 = arith.constant dense<0.000000e+00> : vector<256x32xf32>
    %115 = tpu.matmul %113, %114, %cst_77 {dimension_numbers = #tpu.dot_dimension_numbers<[1], [0], [0], [1], [0, 0, 1, 1], [], []>} : vector<256x64xbf16>, vector<64x32xbf16>, vector<256x32xf32> -> vector<256x32xf32>
    %c0_78 = arith.constant 0 : index
    %c0_79 = arith.constant 0 : index
    %116 = vector.load %arg10[%c0_78, %c0_79] : memref<1x32xf32, #tpu.memory_space<vmem>>, vector<1x32xf32>
    %117 = vector.broadcast %116 : vector<1x32xf32> to vector<256x32xf32>
    %118 = arith.addf %115, %117 : vector<256x32xf32>
    %cst_80 = arith.constant 0.000000e+00 : f32
    %119 = vector.broadcast %cst_80 : f32 to vector<256x32xf32>
    %120 = arith.maximumf %118, %119 : vector<256x32xf32>
    %c0_81 = arith.constant 0 : index
    %c0_82 = arith.constant 0 : index
    %121 = vector.load %arg11[%c0_81, %c0_82] : memref<1x32xbf16, #tpu.memory_space<vmem>>, vector<1x32xbf16>
    %122 = arith.truncf %120 : vector<256x32xf32> to vector<256x32xbf16>
    %cst_83 = arith.constant dense<0.000000e+00> : vector<1x256xf32>
    %123 = tpu.matmul %121, %122, %cst_83 {dimension_numbers = #tpu.dot_dimension_numbers<[1], [1], [0], [0], [0, 0, 1, 0], [], []>} : vector<1x32xbf16>, vector<256x32xbf16>, vector<1x256xf32> -> vector<1x256xf32>
    %c0_84 = arith.constant 0 : index
    %c0_85 = arith.constant 0 : index
    %124 = vector.load %arg12[%c0_84, %c0_85] : memref<1x1xf32, #tpu.memory_space<vmem>>, vector<1x1xf32>
    %125 = vector.broadcast %124 : vector<1x1xf32> to vector<1x256xf32>
    %126 = arith.addf %123, %125 : vector<1x256xf32>
    %127 = arith.negf %126 : vector<1x256xf32>
    %128 = math.exp %127 : vector<1x256xf32>
    %cst_86 = arith.constant 1.000000e+00 : f32
    %129 = vector.broadcast %cst_86 : f32 to vector<1x256xf32>
    %130 = arith.addf %129, %128 : vector<1x256xf32>
    %131 = arith.divf %129, %130 : vector<1x256xf32>
    %c0_87 = arith.constant 0 : index
    %c0_88 = arith.constant 0 : index
    %c0_89 = arith.constant 0 : index
    %132 = vector.load %arg13[%c0_87, %c0_88, %c0_89] : memref<1x1x256xf32, #tpu.memory_space<vmem>>, vector<1x1x256xf32>
    %133 = vector.shape_cast %132 : vector<1x1x256xf32> to vector<1x256xf32>
    %134 = vector.shape_cast %131 : vector<1x256xf32> to vector<1x1x256xf32>
    tpu.vector_store %arg13[%c0_87, %c0_88, %c0_89], %134 {strides = array<i32>} : memref<1x1x256xf32, #tpu.memory_space<vmem>>, vector<1x1x256xf32>,
    return
  }
  func.func @transform_0(%arg0: i32) -> (i32, i32, i32) {
    %c0_i32 = arith.constant 0 : i32
    %c0_i32_0 = arith.constant 0 : i32
    %c0_i32_1 = arith.constant 0 : i32
    return %arg0, %c0_i32, %c0_i32_0 : i32, i32, i32
  }
  func.func @transform_1(%arg0: i32) -> (i32, i32) {
    %c0_i32 = arith.constant 0 : i32
    %c0_i32_0 = arith.constant 0 : i32
    return %arg0, %c0_i32 : i32, i32
  }
  func.func @transform_2(%arg0: i32) -> (i32, i32) {
    %c0_i32 = arith.constant 0 : i32
    %c0_i32_0 = arith.constant 0 : i32
    %c0_i32_1 = arith.constant 0 : i32
    return %c0_i32, %c0_i32_0 : i32, i32
  }
  func.func @transform_3(%arg0: i32) -> (i32, i32) {
    %c0_i32 = arith.constant 0 : i32
    %c0_i32_0 = arith.constant 0 : i32
    %c0_i32_1 = arith.constant 0 : i32
    return %c0_i32, %c0_i32_0 : i32, i32
  }
  func.func @transform_4(%arg0: i32) -> (i32, i32, i32) {
    %c0_i32 = arith.constant 0 : i32
    %c0_i32_0 = arith.constant 0 : i32
    %c0_i32_1 = arith.constant 0 : i32
    %c0_i32_2 = arith.constant 0 : i32
    return %c0_i32, %c0_i32_0, %c0_i32_1 : i32, i32, i32
  }
  func.func @transform_5(%arg0: i32) -> (i32, i32, i32) {
    %c0_i32 = arith.constant 0 : i32
    %c0_i32_0 = arith.constant 0 : i32
    %c0_i32_1 = arith.constant 0 : i32
    %c0_i32_2 = arith.constant 0 : i32
    return %c0_i32, %c0_i32_0, %c0_i32_1 : i32, i32, i32
  }
  func.func @transform_6(%arg0: i32) -> (i32, i32) {
    %c0_i32 = arith.constant 0 : i32
    %c0_i32_0 = arith.constant 0 : i32
    %c0_i32_1 = arith.constant 0 : i32
    return %c0_i32, %c0_i32_0 : i32, i32
  }
  func.func @transform_7(%arg0: i32) -> (i32, i32) {
    %c0_i32 = arith.constant 0 : i32
    %c0_i32_0 = arith.constant 0 : i32
    %c0_i32_1 = arith.constant 0 : i32
    return %c0_i32, %c0_i32_0 : i32, i32
  }
  func.func @transform_8(%arg0: i32) -> (i32, i32) {
    %c0_i32 = arith.constant 0 : i32
    %c0_i32_0 = arith.constant 0 : i32
    %c0_i32_1 = arith.constant 0 : i32
    return %c0_i32, %c0_i32_0 : i32, i32
  }
  func.func @transform_9(%arg0: i32) -> (i32, i32) {
    %c0_i32 = arith.constant 0 : i32
    %c0_i32_0 = arith.constant 0 : i32
    %c0_i32_1 = arith.constant 0 : i32
    return %c0_i32, %c0_i32_0 : i32, i32
  }
  func.func @transform_10(%arg0: i32) -> (i32, i32) {
    %c0_i32 = arith.constant 0 : i32
    %c0_i32_0 = arith.constant 0 : i32
    %c0_i32_1 = arith.constant 0 : i32
    return %c0_i32, %c0_i32_0 : i32, i32
  }
  func.func @transform_11(%arg0: i32) -> (i32, i32) {
    %c0_i32 = arith.constant 0 : i32
    %c0_i32_0 = arith.constant 0 : i32
    %c0_i32_1 = arith.constant 0 : i32
    return %c0_i32, %c0_i32_0 : i32, i32
  }
  func.func @transform_12(%arg0: i32) -> (i32, i32, i32) {
    %c0_i32 = arith.constant 0 : i32
    %c0_i32_0 = arith.constant 0 : i32
    %c0_i32_1 = arith.constant 0 : i32
    return %arg0, %c0_i32, %c0_i32_0 : i32, i32, i32
  }
}

</mosaic_0001>

<llo_original>
// kernel: wo_attention_prediction.1
$region0: #{wo_attention_prediction.1}
  #allocation0 [shape = 'u32[]', space=smem, size = 0x4, offset = 0x4, fixed_abs, tag = 'smem constant byte address 0x4 - core index']
  #allocation1 [shape = 'u32[144,128]{1,0:T(1,128)}', space=vmem, size = 0x12000, scoped, tag = 'internal scratch']
  #allocation2 [shape = 'f32[1,1]{1,0:T(1,128)S(1)}', space=vmem, size = 0x200, scoped, tag = 'scoped memory for wo_attention_prediction.1']
  %s0 = inlined_call_operand.vmem [shape: bf16[4,128,128], index: 0, kind: input, shape index: {}]
  %s1 = inlined_call_operand.vmem [shape: bf16[512,16], index: 1, kind: input, shape index: {}]
  %s2 = inlined_call_operand.vmem [shape: bf16[16,32], index: 2, kind: input, shape index: {}]
  %s3 = inlined_call_operand.vmem [shape: f32[1,32], index: 3, kind: input, shape index: {}]
  %s4 = inlined_call_operand.vmem [shape: bf16[3,32,32], index: 4, kind: input, shape index: {}]
  %s5 = inlined_call_operand.vmem [shape: f32[3,1,32], index: 5, kind: input, shape index: {}]
  %s6 = inlined_call_operand.vmem [shape: bf16[96,64], index: 6, kind: input, shape index: {}]
  %s7 = inlined_call_operand.vmem [shape: f32[1,64], index: 7, kind: input, shape index: {}]
  %s8 = inlined_call_operand.vmem [shape: bf16[64,32], index: 8, kind: input, shape index: {}]
  %s9 = inlined_call_operand.vmem [shape: f32[1,32], index: 9, kind: input, shape index: {}]
  %s10 = inlined_call_operand.vmem [shape: bf16[1,32], index: 10, kind: input, shape index: {}]
  %s11 = inlined_call_operand.<no memory space> [shape: f32[1,1], index: 11, kind: input, shape index: {}]
  %s12 = inlined_call_operand.hbm [shape: f32[2,1,256], index: 12, kind: output, shape index: {}]
  %s13 = sld [smem:[#allocation0]]
  $region81: #{wo_attention_prediction.1} parent=0
    _
  %s15 = ssub.s32 1, %s13
  %s16 = scalar_select 0, %s15, %s13
  %v17 = vstv %s11
  %18 = vst [vmem:[#allocation2] sm:$0x1] %v17
  $region1: #{wo_attention_prediction.1} parent=0
    #allocation3 [shape = 'u8[2048]{0}', space=vmem, size = 0x800, scoped, tag = 'output window, operand 0']
    #allocation4 [shape = 's32[2]{0}', space=sflag, size = 0x8, scoped, tag = 'scoped memory for wo_attention_prediction.1']
    %19 = vsyncpa [#allocation4], 0
    %s20 = scalar_lea.sflag [#allocation4], 1
    %21 = vsyncpa %s20, 0
    loop: start=0, step=1, limit=4
    $region2: #{wo_attention_prediction.1} parent=1 // loop_pre_header
      _
    $region3: #{wo_attention_prediction.1} parent=1 // loop_header
      %s23 = sphi 0, %s27
      %p24 = scmp.ge.s32.totalorder %s23, 4
      %s33 = sphi 0, %s35
      %s36 = sphi 0, %s33
      %s37 = sphi 0, %s36
      %s53 = sphi 0, %s37
      %s59 = sphi 0, %s61
      %s62 = sphi 0, %s59
      %s63 = sphi 0, %s62
      %s79 = sphi 0, %s63
      %s83 = sphi 0, %s83
      %s85 = sphi 0, %s83
      %s86 = sphi 0, %s85
      %s100 = sphi 0, %s86
      %s104 = sphi 0, %s104
      %s106 = sphi 0, %s104
      %s107 = sphi 0, %s106
      %s121 = sphi 0, %s107
      %s125 = sphi 0, %s125
      %s127 = sphi 0, %s125
      %s128 = sphi 0, %s127
      %s142 = sphi 0, %s128
      %s146 = sphi 0, %s146
      %s148 = sphi 0, %s146
      %s149 = sphi 0, %s148
      %s163 = sphi 0, %s149
      %s167 = sphi 0, %s167
      %s169 = sphi 0, %s167
      %s170 = sphi 0, %s169
      %s184 = sphi 0, %s170
      %s188 = sphi 0, %s188
      %s190 = sphi 0, %s188
      %s191 = sphi 0, %s190
      %s205 = sphi 0, %s191
      %s209 = sphi 0, %s209
      %s211 = sphi 0, %s209
      %s212 = sphi 0, %s211
      %s226 = sphi 0, %s212
      %s230 = sphi 0, %s230
      %s232 = sphi 0, %s230
      %s233 = sphi 0, %s232
      %s247 = sphi 0, %s233
      %s251 = sphi 0, %s251
      %s253 = sphi 0, %s251
      %s254 = sphi 0, %s253
      %s268 = sphi 0, %s254
      %s272 = sphi 0, %s272
      %s274 = sphi 0, %s272
      %s275 = sphi 0, %s274
      %s289 = sphi 0, %s275
      %s295 = sphi 0, %s297
      %s298 = sphi 0, %s295
      %s299 = sphi 0, %s298
      %s315 = sphi 0, %s299
    $region4: #{wo_attention_prediction.1} parent=1 // loop_header_branch
      %26 = sbr.rel (%p24) target = $region8
    $region5: #{wo_attention_prediction.1} parent=1 // loop_body
      %s28 = ssub.s32 %s23, 1
      %s29 = ssub.s32 %s23, 2
      %s30 = sadd.s32 %s23, 1
      %s31 = ssub.s32 %s23, %s30
      %p32 = scmp.eq.s32.totalorder %s31, 0
      %s34 = sadd.s32 %s33, 1
      %s35 = scalar_select %p32, %s33, %s34
      %p38 = pneg %p32
      %p39 = scmp.eq.s32.totalorder %s23, 1
      %p40 = por %p38, %p39
      %p41 = scmp.ne.s32.totalorder %s33, %s36
      %p42 = scmp.eq.s32.totalorder %s23, 0
      %p43 = por %p41, %p42
      %p44 = scmp.ne.s32.totalorder %s33, %s36
      %p45 = scmp.eq.s32.totalorder %s28, 1
      %p46 = por %p44, %p45
      %p47 = scmp.ne.s32.totalorder %s36, %s37
      %p48 = scmp.eq.s32.totalorder %s28, 0
      %p49 = por %p47, %p48
      %p50 = scmp.ne.s32.totalorder %s36, %s37
      %p51 = scmp.eq.s32.totalorder %s29, 1
      %p52 = por %p50, %p51
      %p54 = scmp.ne.s32.totalorder %s37, %s53
      %p55 = scmp.eq.s32.totalorder %s29, 0
      %p56 = por %p54, %p55
      %s57 = ssub.s32 %s23, %s30
      %p58 = scmp.eq.s32.totalorder %s57, 0
      %s60 = sadd.s32 %s59, 1
      %s61 = scalar_select %p58, %s59, %s60
      %p64 = pneg %p58
      %p65 = scmp.eq.s32.totalorder %s23, 1
      %p66 = por %p64, %p65
      %p67 = scmp.ne.s32.totalorder %s59, %s62
      %p68 = scmp.eq.s32.totalorder %s23, 0
      %p69 = por %p67, %p68
      %p70 = scmp.ne.s32.totalorder %s59, %s62
      %p71 = scmp.eq.s32.totalorder %s28, 1
      %p72 = por %p70, %p71
      %p73 = scmp.ne.s32.totalorder %s62, %s63
      %p74 = scmp.eq.s32.totalorder %s28, 0
      %p75 = por %p73, %p74
      %p76 = scmp.ne.s32.totalorder %s62, %s63
      %p77 = scmp.eq.s32.totalorder %s29, 1
      %p78 = por %p76, %p77
      %p80 = scmp.ne.s32.totalorder %s63, %s79
      %p81 = scmp.eq.s32.totalorder %s29, 0
      %p82 = por %p80, %p81
      %s84 = sadd.s32 %s83, 1
      %p87 = scmp.eq.s32.totalorder %s23, 1
      %p88 = scmp.ne.s32.totalorder %s83, %s85
      %p89 = scmp.eq.s32.totalorder %s23, 0
      %p90 = por %p88, %p89
      %p91 = scmp.ne.s32.totalorder %s83, %s85
      %p92 = scmp.eq.s32.totalorder %s28, 1
      %p93 = por %p91, %p92
      %p94 = scmp.ne.s32.totalorder %s85, %s86
      %p95 = scmp.eq.s32.totalorder %s28, 0
      %p96 = por %p94, %p95
      %p97 = scmp.ne.s32.totalorder %s85, %s86
      %p98 = scmp.eq.s32.totalorder %s29, 1
      %p99 = por %p97, %p98
      %p101 = scmp.ne.s32.totalorder %s86, %s100
      %p102 = scmp.eq.s32.totalorder %s29, 0
      %p103 = por %p101, %p102
      %s105 = sadd.s32 %s104, 1
      %p108 = scmp.eq.s32.totalorder %s23, 1
      %p109 = scmp.ne.s32.totalorder %s104, %s106
      %p110 = scmp.eq.s32.totalorder %s23, 0
      %p111 = por %p109, %p110
      %p112 = scmp.ne.s32.totalorder %s104, %s106
      %p113 = scmp.eq.s32.totalorder %s28, 1
      %p114 = por %p112, %p113
      %p115 = scmp.ne.s32.totalorder %s106, %s107
      %p116 = scmp.eq.s32.totalorder %s28, 0
      %p117 = por %p115, %p116
      %p118 = scmp.ne.s32.totalorder %s106, %s107
      %p119 = scmp.eq.s32.totalorder %s29, 1
      %p120 = por %p118, %p119
      %p122 = scmp.ne.s32.totalorder %s107, %s121
      %p123 = scmp.eq.s32.totalorder %s29, 0
      %p124 = por %p122, %p123
      %s126 = sadd.s32 %s125, 1
      %p129 = scmp.eq.s32.totalorder %s23, 1
      %p130 = scmp.ne.s32.totalorder %s125, %s127
      %p131 = scmp.eq.s32.totalorder %s23, 0
      %p132 = por %p130, %p131
      %p133 = scmp.ne.s32.totalorder %s125, %s127
      %p134 = scmp.eq.s32.totalorder %s28, 1
      %p135 = por %p133, %p134
      %p136 = scmp.ne.s32.totalorder %s127, %s128
      %p137 = scmp.eq.s32.totalorder %s28, 0
      %p138 = por %p136, %p137
      %p139 = scmp.ne.s32.totalorder %s127, %s128
      %p140 = scmp.eq.s32.totalorder %s29, 1
      %p141 = por %p139, %p140
      %p143 = scmp.ne.s32.totalorder %s128, %s142
      %p144 = scmp.eq.s32.totalorder %s29, 0
      %p145 = por %p143, %p144
      %s147 = sadd.s32 %s146, 1
      %p150 = scmp.eq.s32.totalorder %s23, 1
      %p151 = scmp.ne.s32.totalorder %s146, %s148
      %p152 = scmp.eq.s32.totalorder %s23, 0
      %p153 = por %p151, %p152
      %p154 = scmp.ne.s32.totalorder %s146, %s148
      %p155 = scmp.eq.s32.totalorder %s28, 1
      %p156 = por %p154, %p155
      %p157 = scmp.ne.s32.totalorder %s148, %s149
      %p158 = scmp.eq.s32.totalorder %s28, 0
      %p159 = por %p157, %p158
      %p160 = scmp.ne.s32.totalorder %s148, %s149
      %p161 = scmp.eq.s32.totalorder %s29, 1
      %p162 = por %p160, %p161
      %p164 = scmp.ne.s32.totalorder %s149, %s163
      %p165 = scmp.eq.s32.totalorder %s29, 0
      %p166 = por %p164, %p165
      %s168 = sadd.s32 %s167, 1
      %p171 = scmp.eq.s32.totalorder %s23, 1
      %p172 = scmp.ne.s32.totalorder %s167, %s169
      %p173 = scmp.eq.s32.totalorder %s23, 0
      %p174 = por %p172, %p173
      %p175 = scmp.ne.s32.totalorder %s167, %s169
      %p176 = scmp.eq.s32.totalorder %s28, 1
      %p177 = por %p175, %p176
      %p178 = scmp.ne.s32.totalorder %s169, %s170
      %p179 = scmp.eq.s32.totalorder %s28, 0
      %p180 = por %p178, %p179
      %p181 = scmp.ne.s32.totalorder %s169, %s170
      %p182 = scmp.eq.s32.totalorder %s29, 1
      %p183 = por %p181, %p182
      %p185 = scmp.ne.s32.totalorder %s170, %s184
      %p186 = scmp.eq.s32.totalorder %s29, 0
      %p187 = por %p185, %p186
      %s189 = sadd.s32 %s188, 1
      %p192 = scmp.eq.s32.totalorder %s23, 1
      %p193 = scmp.ne.s32.totalorder %s188, %s190
      %p194 = scmp.eq.s32.totalorder %s23, 0
      %p195 = por %p193, %p194
      %p196 = scmp.ne.s32.totalorder %s188, %s190
      %p197 = scmp.eq.s32.totalorder %s28, 1
      %p198 = por %p196, %p197
      %p199 = scmp.ne.s32.totalorder %s190, %s191
      %p200 = scmp.eq.s32.totalorder %s28, 0
      %p201 = por %p199, %p200
      %p202 = scmp.ne.s32.totalorder %s190, %s191
      %p203 = scmp.eq.s32.totalorder %s29, 1
      %p204 = por %p202, %p203
      %p206 = scmp.ne.s32.totalorder %s191, %s205
      %p207 = scmp.eq.s32.totalorder %s29, 0
      %p208 = por %p206, %p207
      %s210 = sadd.s32 %s209, 1
      %p213 = scmp.eq.s32.totalorder %s23, 1
      %p214 = scmp.ne.s32.totalorder %s209, %s211
      %p215 = scmp.eq.s32.totalorder %s23, 0
      %p216 = por %p214, %p215
      %p217 = scmp.ne.s32.totalorder %s209, %s211
      %p218 = scmp.eq.s32.totalorder %s28, 1
      %p219 = por %p217, %p218
      %p220 = scmp.ne.s32.totalorder %s211, %s212
      %p221 = scmp.eq.s32.totalorder %s28, 0
      %p222 = por %p220, %p221
      %p223 = scmp.ne.s32.totalorder %s211, %s212
      %p224 = scmp.eq.s32.totalorder %s29, 1
      %p225 = por %p223, %p224
      %p227 = scmp.ne.s32.totalorder %s212, %s226
      %p228 = scmp.eq.s32.totalorder %s29, 0
      %p229 = por %p227, %p228
      %s231 = sadd.s32 %s230, 1
      %p234 = scmp.eq.s32.totalorder %s23, 1
      %p235 = scmp.ne.s32.totalorder %s230, %s232
      %p236 = scmp.eq.s32.totalorder %s23, 0
      %p237 = por %p235, %p236
      %p238 = scmp.ne.s32.totalorder %s230, %s232
      %p239 = scmp.eq.s32.totalorder %s28, 1
      %p240 = por %p238, %p239
      %p241 = scmp.ne.s32.totalorder %s232, %s233
      %p242 = scmp.eq.s32.totalorder %s28, 0
      %p243 = por %p241, %p242
      %p244 = scmp.ne.s32.totalorder %s232, %s233
      %p245 = scmp.eq.s32.totalorder %s29, 1
      %p246 = por %p244, %p245
      %p248 = scmp.ne.s32.totalorder %s233, %s247
      %p249 = scmp.eq.s32.totalorder %s29, 0
      %p250 = por %p248, %p249
      %s252 = sadd.s32 %s251, 1
      %p255 = scmp.eq.s32.totalorder %s23, 1
      %p256 = scmp.ne.s32.totalorder %s251, %s253
      %p257 = scmp.eq.s32.totalorder %s23, 0
      %p258 = por %p256, %p257
      %p259 = scmp.ne.s32.totalorder %s251, %s253
      %p260 = scmp.eq.s32.totalorder %s28, 1
      %p261 = por %p259, %p260
      %p262 = scmp.ne.s32.totalorder %s253, %s254
      %p263 = scmp.eq.s32.totalorder %s28, 0
      %p264 = por %p262, %p263
      %p265 = scmp.ne.s32.totalorder %s253, %s254
      %p266 = scmp.eq.s32.totalorder %s29, 1
      %p267 = por %p265, %p266
      %p269 = scmp.ne.s32.totalorder %s254, %s268
      %p270 = scmp.eq.s32.totalorder %s29, 0
      %p271 = por %p269, %p270
      %s273 = sadd.s32 %s272, 1
      %p276 = scmp.eq.s32.totalorder %s23, 1
      %p277 = scmp.ne.s32.totalorder %s272, %s274
      %p278 = scmp.eq.s32.totalorder %s23, 0
      %p279 = por %p277, %p278
      %p280 = scmp.ne.s32.totalorder %s272, %s274
      %p281 = scmp.eq.s32.totalorder %s28, 1
      %p282 = por %p280, %p281
      %p283 = scmp.ne.s32.totalorder %s274, %s275
      %p284 = scmp.eq.s32.totalorder %s28, 0
      %p285 = por %p283, %p284
      %p286 = scmp.ne.s32.totalorder %s274, %s275
      %p287 = scmp.eq.s32.totalorder %s29, 1
      %p288 = por %p286, %p287
      %p290 = scmp.ne.s32.totalorder %s275, %s289
      %p291 = scmp.eq.s32.totalorder %s29, 0
      %p292 = por %p290, %p291
      %s293 = ssub.s32 %s23, %s30
      %p294 = scmp.eq.s32.totalorder %s293, 0
      %s296 = sadd.s32 %s295, 1
      %s297 = scalar_select %p294, %s295, %s296
      %p300 = pneg %p294
      %p301 = scmp.eq.s32.totalorder %s23, 1
      %p302 = por %p300, %p301
      %p303 = scmp.ne.s32.totalorder %s295, %s298
      %p304 = scmp.eq.s32.totalorder %s23, 0
      %p305 = por %p303, %p304
      %p306 = scmp.ne.s32.totalorder %s295, %s298
      %p307 = scmp.eq.s32.totalorder %s28, 1
      %p308 = por %p306, %p307
      %p309 = scmp.ne.s32.totalorder %s298, %s299
      %p310 = scmp.eq.s32.totalorder %s28, 0
      %p311 = por %p309, %p310
      %p312 = scmp.ne.s32.totalorder %s298, %s299
      %p313 = scmp.eq.s32.totalorder %s29, 1
      %p314 = por %p312, %p313
      %p316 = scmp.ne.s32.totalorder %s299, %s315
      %p317 = scmp.eq.s32.totalorder %s29, 0
      %p318 = por %p316, %p317
      %p319 = scmp.le.s32.totalorder 1, %s23
      %p320 = scmp.lt.s32.totalorder %s23, 3
      %p321 = pnand %p319, %p320
      %p322 = pneg %p321
      // Predicated region
      $region9: #{wo_attention_prediction.1} parent=5 // pred_check
        _
      $region10: #{wo_attention_prediction.1} parent=5 // pred_check_branch
        %324 = sbr.rel (%p321) target = $region12
      $region11: #{wo_attention_prediction.1} parent=5 // pred_region
        %s325 = ssub.s32 %s23, 1
        // Predicated region
        $region13: #{wo_attention_prediction.1} parent=11 // pred_check
          %p326 = pneg %p96
        $region14: #{wo_attention_prediction.1} parent=11 // pred_check_branch
          %328 = sbr.rel (%p326) target = $region16
        $region15: #{wo_attention_prediction.1} parent=11 // pred_region
          _
        $region16: #{wo_attention_prediction.1} parent=11 // pred_fallthru
          _
        // Predicated region
        $region17: #{wo_attention_prediction.1} parent=11 // pred_check
          %p329 = pneg %p117
        $region18: #{wo_attention_prediction.1} parent=11 // pred_check_branch
          %331 = sbr.rel (%p329) target = $region20
        $region19: #{wo_attention_prediction.1} parent=11 // pred_region
          _
        $region20: #{wo_attention_prediction.1} parent=11 // pred_fallthru
          _
        // Predicated region
        $region21: #{wo_attention_prediction.1} parent=11 // pred_check
          %p332 = pneg %p138
        $region22: #{wo_attention_prediction.1} parent=11 // pred_check_branch
          %334 = sbr.rel (%p332) target = $region24
        $region23: #{wo_attention_prediction.1} parent=11 // pred_region
          _
        $region24: #{wo_attention_prediction.1} parent=11 // pred_fallthru
          _
        // Predicated region
        $region25: #{wo_attention_prediction.1} parent=11 // pred_check
          %p335 = pneg %p159
        $region26: #{wo_attention_prediction.1} parent=11 // pred_check_branch
          %337 = sbr.rel (%p335) target = $region28
        $region27: #{wo_attention_prediction.1} parent=11 // pred_region
          _
        $region28: #{wo_attention_prediction.1} parent=11 // pred_fallthru
          _
        // Predicated region
        $region29: #{wo_attention_prediction.1} parent=11 // pred_check
          %p338 = pneg %p180
        $region30: #{wo_attention_prediction.1} parent=11 // pred_check_branch
          %340 = sbr.rel (%p338) target = $region32
        $region31: #{wo_attention_prediction.1} parent=11 // pred_region
          _
        $region32: #{wo_attention_prediction.1} parent=11 // pred_fallthru
          _
        // Predicated region
        $region33: #{wo_attention_prediction.1} parent=11 // pred_check
          %p341 = pneg %p201
        $region34: #{wo_attention_prediction.1} parent=11 // pred_check_branch
          %343 = sbr.rel (%p341) target = $region36
        $region35: #{wo_attention_prediction.1} parent=11 // pred_region
          _
        $region36: #{wo_attention_prediction.1} parent=11 // pred_fallthru
          _
        // Predicated region
        $region37: #{wo_attention_prediction.1} parent=11 // pred_check
          %p344 = pneg %p222
        $region38: #{wo_attention_prediction.1} parent=11 // pred_check_branch
          %346 = sbr.rel (%p344) target = $region40
        $region39: #{wo_attention_prediction.1} parent=11 // pred_region
          _
        $region40: #{wo_attention_prediction.1} parent=11 // pred_fallthru
          _
        // Predicated region
        $region41: #{wo_attention_prediction.1} parent=11 // pred_check
          %p347 = pneg %p243
        $region42: #{wo_attention_prediction.1} parent=11 // pred_check_branch
          %349 = sbr.rel (%p347) target = $region44
        $region43: #{wo_attention_prediction.1} parent=11 // pred_region
          _
        $region44: #{wo_attention_prediction.1} parent=11 // pred_fallthru
          _
        // Predicated region
        $region45: #{wo_attention_prediction.1} parent=11 // pred_check
          %p350 = pneg %p264
        $region46: #{wo_attention_prediction.1} parent=11 // pred_check_branch
          %352 = sbr.rel (%p350) target = $region48
        $region47: #{wo_attention_prediction.1} parent=11 // pred_region
          _
        $region48: #{wo_attention_prediction.1} parent=11 // pred_fallthru
          _
        // Predicated region
        $region49: #{wo_attention_prediction.1} parent=11 // pred_check
          %p353 = pneg %p285
        $region50: #{wo_attention_prediction.1} parent=11 // pred_check_branch
          %355 = sbr.rel (%p353) target = $region52
        $region51: #{wo_attention_prediction.1} parent=11 // pred_region
          _
        $region52: #{wo_attention_prediction.1} parent=11 // pred_fallthru
          _
      $region12: #{wo_attention_prediction.1} parent=5 // pred_fallthru
        _
      %p356 = scmp.lt.s32.totalorder %s23, 2
      // Predicated region
      $region53: #{wo_attention_prediction.1} parent=5 // pred_check
        %p357 = pneg %p356
      $region54: #{wo_attention_prediction.1} parent=5 // pred_check_branch
        %359 = sbr.rel (%p357) target = $region56
      $region55: #{wo_attention_prediction.1} parent=5 // pred_region
        // Predicated region
        $region57: #{wo_attention_prediction.1} parent=55 // pred_check
          %p360 = pneg %p43
        $region58: #{wo_attention_prediction.1} parent=55 // pred_check_branch
          %362 = sbr.rel (%p360) target = $region60
        $region59: #{wo_attention_prediction.1} parent=55 // pred_region
          %s363 = smul.u32 2, %s23
          %p364 = scmp.lt.s32.totalorder %s363, 3
          %s365 = scalar_select %p364, %s363, 3
          %s366 = smul.addr %s365, 16
          %s367 = smul.addr %s366, 4
          %s368 = scalar_lea.vmem %s0, %s367
          %s369 = smul.u32 2, %s23
        $region60: #{wo_attention_prediction.1} parent=55 // pred_fallthru
          _
        // Predicated region
        $region61: #{wo_attention_prediction.1} parent=55 // pred_check
          %p370 = pneg %p69
        $region62: #{wo_attention_prediction.1} parent=55 // pred_check_branch
          %372 = sbr.rel (%p370) target = $region64
        $region63: #{wo_attention_prediction.1} parent=55 // pred_region
          %s373 = smul.u32 32, %s23
          %p374 = scmp.lt.s32.totalorder %s373, 63
          %s375 = scalar_select %p374, %s373, 63
          %s376 = smul.addr %s375, 4
          %s377 = scalar_lea.vmem %s1, %s376
          %s378 = smul.u32 32, %s23
        $region64: #{wo_attention_prediction.1} parent=55 // pred_fallthru
          _
      $region56: #{wo_attention_prediction.1} parent=5 // pred_fallthru
        _
      %p379 = scmp.le.s32.totalorder 1, %s23
      %p380 = scmp.lt.s32.totalorder %s23, 3
      %p381 = pnand %p379, %p380
      %p382 = pneg %p381
      // Predicated region
      $region65: #{wo_attention_prediction.1} parent=5 // pred_check
        _
      $region66: #{wo_attention_prediction.1} parent=5 // pred_check_branch
        %384 = sbr.rel (%p381) target = $region68
      $region67: #{wo_attention_prediction.1} parent=5 // pred_region
        %s385 = ssub.s32 %s23, 1
        %s386 = smul.u32 2, %s28
        %p387 = scmp.lt.s32.totalorder %s386, 3
        %s388 = scalar_select %p387, %s386, 3
        %s389 = smul.addr %s388, 16
        %s390 = smul.addr %s389, 4
        %s391 = scalar_lea.vmem %s0, %s390
        %p392 = pneg %p49
        %p393 = pneg %p46
        %s394 = smul.u32 32, %s28
        %p395 = scmp.lt.s32.totalorder %s394, 63
        %s396 = scalar_select %p395, %s394, 63
        %s397 = smul.addr %s396, 4
        %s398 = scalar_lea.vmem %s1, %s397
        %p399 = pneg %p75
        %p400 = pneg %p72
        %p401 = pneg %p96
        %p402 = pneg %p93
        %p403 = pneg %p117
        %p404 = pneg %p114
        %p405 = pneg %p138
        %p406 = pneg %p135
        %p407 = pneg %p159
        %p408 = pneg %p156
        %p409 = pneg %p180
        %p410 = pneg %p177
        %p411 = pneg %p201
        %p412 = pneg %p198
        %p413 = pneg %p222
        %p414 = pneg %p219
        %p415 = pneg %p243
        %p416 = pneg %p240
        %p417 = pneg %p264
        %p418 = pneg %p261
        %p419 = pneg %p285
        %p420 = pneg %p282
        %p421 = pneg %p311
        %p422 = pneg %p308
        %s423 = sand.u32 %s298, 1
        %s424 = scalar_lea.sflag [#allocation4], %s423
        %s425 = sand.u32 %s298, 1
        %s426 = smul.addr %s425, 2
        %s427 = scalar_lea.vmem [#allocation3], %s426
        %s428 = smul.u32 2, %s28
        %p429 = scmp.lt.s32.totalorder %s428, 3
        %s430 = scalar_select %p429, %s428, 3
        %s431 = smul.addr %s430, 16
        %s432 = smul.addr %s431, 4
        %s433 = scalar_lea.vmem %s0, %s432
        %s434 = smul.u32 2, %s28
        %s435 = smul.u32 32, %s28
        %p436 = scmp.lt.s32.totalorder %s435, 63
        %s437 = scalar_select %p436, %s435, 63
        %s438 = smul.addr %s437, 4
        %s439 = scalar_lea.vmem %s1, %s438
        %s440 = smul.u32 32, %s28
        %v443 = vld [vmem:[%s433] sm:$0xf]
        %v444 = vld [vmem:[%s433 + $0x4] sm:$0xf]
        %v445 = vld [vmem:[%s433 + $0x8] sm:$0xf]
        %v446 = vld [vmem:[%s433 + $0xc] sm:$0xf]
        %v447 = vld [vmem:[%s433 + $0x10] sm:$0xf]
        %v448 = vld [vmem:[%s433 + $0x14] sm:$0xf]
        %v449 = vld [vmem:[%s433 + $0x18] sm:$0xf]
        %v450 = vld [vmem:[%s433 + $0x1c] sm:$0xf]
        %v451 = vld [vmem:[%s433 + $0x20] sm:$0xf]
        %v452 = vld [vmem:[%s433 + $0x24] sm:$0xf]
        %v453 = vld [vmem:[%s433 + $0x28] sm:$0xf]
        %v454 = vld [vmem:[%s433 + $0x2c] sm:$0xf]
        %v455 = vld [vmem:[%s433 + $0x30] sm:$0xf]
        %v456 = vld [vmem:[%s433 + $0x34] sm:$0xf]
        %v457 = vld [vmem:[%s433 + $0x38] sm:$0xf]
        %v458 = vld [vmem:[%s433 + $0x3c] sm:$0xf]
        %v475 = vunpack.c.l.b16 %v443
        %v476 = vunpack.c.l.b16 %v444
        %v477 = vunpack.c.l.b16 %v445
        %v478 = vunpack.c.l.b16 %v446
        %v479 = vunpack.c.l.b16 %v447
        %v480 = vunpack.c.l.b16 %v448
        %v481 = vunpack.c.l.b16 %v449
        %v482 = vunpack.c.l.b16 %v450
        %v483 = vunpack.c.l.b16 %v451
        %v484 = vunpack.c.l.b16 %v452
        %v485 = vunpack.c.l.b16 %v453
        %v486 = vunpack.c.l.b16 %v454
        %v487 = vunpack.c.l.b16 %v455
        %v488 = vunpack.c.l.b16 %v456
        %v489 = vunpack.c.l.b16 %v457
        %v490 = vunpack.c.l.b16 %v458
        %v491 = vpack.c.b16 %v476, %v475
        %v492 = vpack.c.b16 %v478, %v477
        %v493 = vpack.c.b16 %v480, %v479
        %v494 = vpack.c.b16 %v482, %v481
        %v495 = vpack.c.b16 %v484, %v483
        %v496 = vpack.c.b16 %v486, %v485
        %v497 = vpack.c.b16 %v488, %v487
        %v498 = vpack.c.b16 %v490, %v489
        %507 = vmatprep.subr.bf16.mxu0 0
        %508 = vmatpush1.bf16.msra.mxu0 1065369472
        %509 = vmatprep.subr.bf16.mxu0 0
        %510 = vmatpush1.bf16.msra.mxu0 1065369472
        %511 = vmatprep.subr.bf16.mxu0 0
        %512 = vmatpush1.bf16.msra.mxu0 1065369472
        %513 = vmatprep.subr.bf16.mxu0 0
        %514 = vmatpush1.bf16.msra.mxu0 1065369472
        %515 = vmatprep.subr.bf16.mxu0 0
        %516 = vmatpush1.bf16.msra.mxu0 1065369472
        %517 = vmatprep.subr.bf16.mxu0 0
        %518 = vmatpush1.bf16.msra.mxu0 1065369472
        %519 = vmatprep.subr.bf16.mxu0 0
        %520 = vmatpush1.bf16.msra.mxu0 1065369472
        %521 = vmatprep.subr.bf16.mxu0 0
        %522 = vmatpush1.bf16.msra.mxu0 1065369472
        %523 = vmatprep.subr.bf16.mxu0 0
        %524 = vmatpush1.bf16.msra.mxu0 0
        %525 = vmatprep.subr.bf16.mxu0 0
        %526 = vmatpush1.bf16.msra.mxu0 0
        %527 = vmatprep.subr.bf16.mxu0 0
        %528 = vmatpush1.bf16.msra.mxu0 0
        %529 = vmatprep.subr.bf16.mxu0 0
        %530 = vmatpush1.bf16.msra.mxu0 0
        %531 = vmatprep.subr.bf16.mxu0 0
        %532 = vmatpush1.bf16.msra.mxu0 0
        %533 = vmatprep.subr.bf16.mxu0 0
        %534 = vmatpush1.bf16.msra.mxu0 0
        %535 = vmatprep.subr.bf16.mxu0 0
        %536 = vmatpush1.bf16.msra.mxu0 0
        %537 = vmatprep.subr.bf16.mxu0 0
        %538 = vmatpush1.bf16.msra.mxu0 0
        %539 = vmatprep.mubr.bf16.mxu0 0
        %540 = vmatmul.mubr.bf16.gmra.mrb[0].mxu0 %v491
        %v541 = vpop.f32.mrb[0].mxu0
        %v542 = vadd.f32 0.0, %v541
        %v543 = vpop.f32.mrb[0].mxu0
        %v544 = vpop.f32.mrb[0].mxu0
        %v545 = vadd.f32 0.0, %v544
        %v546 = vpop.f32.mrb[0].mxu0
        %547 = vmatprep.mubr.bf16.mxu0 0
        %548 = vmatmul.mubr.bf16.gmra.mrb[0].mxu0 %v492
        %v549 = vpop.f32.mrb[0].mxu0
        %v550 = vadd.f32 0.0, %v549
        %v551 = vpop.f32.mrb[0].mxu0
        %v552 = vpop.f32.mrb[0].mxu0
        %v553 = vadd.f32 0.0, %v552
        %v554 = vpop.f32.mrb[0].mxu0
        %555 = vmatprep.mubr.bf16.mxu0 0
        %556 = vmatmul.mubr.bf16.gmra.mrb[0].mxu0 %v493
        %v557 = vpop.f32.mrb[0].mxu0
        %v558 = vadd.f32 0.0, %v557
        %v559 = vpop.f32.mrb[0].mxu0
        %v560 = vpop.f32.mrb[0].mxu0
        %v561 = vadd.f32 0.0, %v560
        %v562 = vpop.f32.mrb[0].mxu0
        %563 = vmatprep.mubr.bf16.mxu0 0
        %564 = vmatmul.mubr.bf16.gmra.mrb[0].mxu0 %v494
        %v565 = vpop.f32.mrb[0].mxu0
        %v566 = vadd.f32 0.0, %v565
        %v567 = vpop.f32.mrb[0].mxu0
        %v568 = vpop.f32.mrb[0].mxu0
        %v569 = vadd.f32 0.0, %v568
        %v570 = vpop.f32.mrb[0].mxu0
        %571 = vmatprep.mubr.bf16.mxu0 0
        %572 = vmatmul.mubr.bf16.gmra.mrb[0].mxu0 %v495
        %v573 = vpop.f32.mrb[0].mxu0
        %v574 = vadd.f32 0.0, %v573
        %v575 = vpop.f32.mrb[0].mxu0
        %v576 = vpop.f32.mrb[0].mxu0
        %v577 = vadd.f32 0.0, %v576
        %v578 = vpop.f32.mrb[0].mxu0
        %579 = vmatprep.mubr.bf16.mxu0 0
        %580 = vmatmul.mubr.bf16.gmra.mrb[0].mxu0 %v496
        %v581 = vpop.f32.mrb[0].mxu0
        %v582 = vadd.f32 0.0, %v581
        %v583 = vpop.f32.mrb[0].mxu0
        %v584 = vpop.f32.mrb[0].mxu0
        %v585 = vadd.f32 0.0, %v584
        %v586 = vpop.f32.mrb[0].mxu0
        %587 = vmatprep.mubr.bf16.mxu0 0
        %588 = vmatmul.mubr.bf16.gmra.mrb[0].mxu0 %v497
        %v589 = vpop.f32.mrb[0].mxu0
        %v590 = vadd.f32 0.0, %v589
        %v591 = vpop.f32.mrb[0].mxu0
        %v592 = vpop.f32.mrb[0].mxu0
        %v593 = vadd.f32 0.0, %v592
        %v594 = vpop.f32.mrb[0].mxu0
        %595 = vmatprep.mubr.bf16.mxu0 0
        %596 = vmatmul.mubr.bf16.gmra.mrb[0].mxu0 %v498
        %v597 = vpop.f32.mrb[0].mxu0
        %v598 = vadd.f32 0.0, %v597
        %v599 = vpop.f32.mrb[0].mxu0
        %v600 = vpop.f32.mrb[0].mxu0
        %v601 = vadd.f32 0.0, %v600
        %v602 = vpop.f32.mrb[0].mxu0
        %603 = vdwg.mxu0
        %604 = vxpose.xlu0.c.b16.start [1/8] %v491, 128
        %605 = vxpose.xlu0.c.b16.cont [2/8] %v492, 128
        %606 = vxpose.xlu0.c.b16.cont [3/8] %v493, 128
        %607 = vxpose.xlu0.c.b16.cont [4/8] %v494, 128
        %608 = vxpose.xlu0.c.b16.cont [5/8] %v495, 128
        %609 = vxpose.xlu0.c.b16.cont [6/8] %v496, 128
        %610 = vxpose.xlu0.c.b16.cont [7/8] %v497, 128
        %611 = vxpose.xlu0.c.b16.end [8/8] %v498, 128
        %v612 = vpop.trf.xlu0
        %v613 = vpop.trf.xlu0
        %v614 = vpop.trf.xlu0
        %v615 = vpop.trf.xlu0
        %v616 = vpop.trf.xlu0
        %v617 = vpop.trf.xlu0
        %v618 = vpop.trf.xlu0
        %v619 = vpop.trf.xlu0
        %620 = vmatprep.subr.bf16.mxu0 0
        %621 = vmatpush1.bf16.msra.mxu0 1065369472
        %622 = vmatprep.subr.bf16.mxu0 0
        %623 = vmatpush1.bf16.msra.mxu0 1065369472
        %624 = vmatprep.subr.bf16.mxu0 0
        %625 = vmatpush1.bf16.msra.mxu0 1065369472
        %626 = vmatprep.subr.bf16.mxu0 0
        %627 = vmatpush1.bf16.msra.mxu0 1065369472
        %628 = vmatprep.subr.bf16.mxu0 0
        %629 = vmatpush1.bf16.msra.mxu0 1065369472
        %630 = vmatprep.subr.bf16.mxu0 0
        %631 = vmatpush1.bf16.msra.mxu0 1065369472
        %632 = vmatprep.subr.bf16.mxu0 0
        %633 = vmatpush1.bf16.msra.mxu0 1065369472
        %634 = vmatprep.subr.bf16.mxu0 0
        %635 = vmatpush1.bf16.msra.mxu0 1065369472
        %636 = vmatprep.subr.bf16.mxu0 0
        %637 = vmatpush1.bf16.msra.mxu0 0
        %638 = vmatprep.subr.bf16.mxu0 0
        %639 = vmatpush1.bf16.msra.mxu0 0
        %640 = vmatprep.subr.bf16.mxu0 0
        %641 = vmatpush1.bf16.msra.mxu0 0
        %642 = vmatprep.subr.bf16.mxu0 0
        %643 = vmatpush1.bf16.msra.mxu0 0
        %644 = vmatprep.subr.bf16.mxu0 0
        %645 = vmatpush1.bf16.msra.mxu0 0
        %646 = vmatprep.subr.bf16.mxu0 0
        %647 = vmatpush1.bf16.msra.mxu0 0
        %648 = vmatprep.subr.bf16.mxu0 0
        %649 = vmatpush1.bf16.msra.mxu0 0
        %650 = vmatprep.subr.bf16.mxu0 0
        %651 = vmatpush1.bf16.msra.mxu0 0
        %652 = vmatprep.mubr.bf16.mxu0 0
        %653 = vmatmul.mubr.bf16.gmra.mrb[0].mxu0 %v612
        %v654 = vpop.f32.mrb[0].mxu0
        %v655 = vadd.f32 0.0, %v654
        %v656 = vpop.f32.mrb[0].mxu0
        %v657 = vpop.f32.mrb[0].mxu0
        %v658 = vadd.f32 0.0, %v657
        %v659 = vpop.f32.mrb[0].mxu0
        %660 = vmatprep.mubr.bf16.mxu0 0
        %661 = vmatmul.mubr.bf16.gmra.mrb[0].mxu0 %v613
        %v662 = vpop.f32.mrb[0].mxu0
        %v663 = vadd.f32 0.0, %v662
        %v664 = vpop.f32.mrb[0].mxu0
        %v665 = vpop.f32.mrb[0].mxu0
        %v666 = vadd.f32 0.0, %v665
        %v667 = vpop.f32.mrb[0].mxu0
        %668 = vmatprep.mubr.bf16.mxu0 0
        %669 = vmatmul.mubr.bf16.gmra.mrb[0].mxu0 %v614
        %v670 = vpop.f32.mrb[0].mxu0
        %v671 = vadd.f32 0.0, %v670
        %v672 = vpop.f32.mrb[0].mxu0
        %v673 = vpop.f32.mrb[0].mxu0
        %v674 = vadd.f32 0.0, %v673
        %v675 = vpop.f32.mrb[0].mxu0
        %676 = vmatprep.mubr.bf16.mxu0 0
        %677 = vmatmul.mubr.bf16.gmra.mrb[0].mxu0 %v615
        %v678 = vpop.f32.mrb[0].mxu0
        %v679 = vadd.f32 0.0, %v678
        %v680 = vpop.f32.mrb[0].mxu0
        %v681 = vpop.f32.mrb[0].mxu0
        %v682 = vadd.f32 0.0, %v681
        %v683 = vpop.f32.mrb[0].mxu0
        %684 = vmatprep.mubr.bf16.mxu0 0
        %685 = vmatmul.mubr.bf16.gmra.mrb[0].mxu0 %v616
        %v686 = vpop.f32.mrb[0].mxu0
        %v687 = vadd.f32 0.0, %v686
        %v688 = vpop.f32.mrb[0].mxu0
        %v689 = vpop.f32.mrb[0].mxu0
        %v690 = vadd.f32 0.0, %v689
        %v691 = vpop.f32.mrb[0].mxu0
        %692 = vmatprep.mubr.bf16.mxu0 0
        %693 = vmatmul.mubr.bf16.gmra.mrb[0].mxu0 %v617
        %v694 = vpop.f32.mrb[0].mxu0
        %v695 = vadd.f32 0.0, %v694
        %v696 = vpop.f32.mrb[0].mxu0
        %v697 = vpop.f32.mrb[0].mxu0
        %v698 = vadd.f32 0.0, %v697
        %v699 = vpop.f32.mrb[0].mxu0
        %700 = vmatprep.mubr.bf16.mxu0 0
        %701 = vmatmul.mubr.bf16.gmra.mrb[0].mxu0 %v618
        %v702 = vpop.f32.mrb[0].mxu0
        %v703 = vadd.f32 0.0, %v702
        %v704 = vpop.f32.mrb[0].mxu0
        %v705 = vpop.f32.mrb[0].mxu0
        %v706 = vadd.f32 0.0, %v705
        %v707 = vpop.f32.mrb[0].mxu0
        %708 = vmatprep.mubr.bf16.mxu0 0
        %709 = vmatmul.mubr.bf16.gmra.mrb[0].mxu0 %v619
        %v710 = vpop.f32.mrb[0].mxu0
        %v711 = vadd.f32 0.0, %v710
        %v712 = vpop.f32.mrb[0].mxu0
        %v713 = vpop.f32.mrb[0].mxu0
        %v714 = vadd.f32 0.0, %v713
        %v715 = vpop.f32.mrb[0].mxu0
        %716 = vdwg.mxu0
        %s717 = scalar_lea.vmem %s433, 64
        %v718 = vld [vmem:[%s717] sm:$0xf]
        %v719 = vld [vmem:[%s717 + $0x4] sm:$0xf]
        %v720 = vld [vmem:[%s717 + $0x8] sm:$0xf]
        %v721 = vld [vmem:[%s717 + $0xc] sm:$0xf]
        %v722 = vld [vmem:[%s717 + $0x10] sm:$0xf]
        %v723 = vld [vmem:[%s717 + $0x14] sm:$0xf]
        %v724 = vld [vmem:[%s717 + $0x18] sm:$0xf]
        %v725 = vld [vmem:[%s717 + $0x1c] sm:$0xf]
        %v726 = vld [vmem:[%s717 + $0x20] sm:$0xf]
        %v727 = vld [vmem:[%s717 + $0x24] sm:$0xf]
        %v728 = vld [vmem:[%s717 + $0x28] sm:$0xf]
        %v729 = vld [vmem:[%s717 + $0x2c] sm:$0xf]
        %v730 = vld [vmem:[%s717 + $0x30] sm:$0xf]
        %v731 = vld [vmem:[%s717 + $0x34] sm:$0xf]
        %v732 = vld [vmem:[%s717 + $0x38] sm:$0xf]
        %v733 = vld [vmem:[%s717 + $0x3c] sm:$0xf]
        %v750 = vunpack.c.l.b16 %v718
        %v751 = vunpack.c.l.b16 %v719
        %v752 = vunpack.c.l.b16 %v720
        %v753 = vunpack.c.l.b16 %v721
        %v754 = vunpack.c.l.b16 %v722
        %v755 = vunpack.c.l.b16 %v723
        %v756 = vunpack.c.l.b16 %v724
        %v757 = vunpack.c.l.b16 %v725
        %v758 = vunpack.c.l.b16 %v726
        %v759 = vunpack.c.l.b16 %v727
        %v760 = vunpack.c.l.b16 %v728
        %v761 = vunpack.c.l.b16 %v729
        %v762 = vunpack.c.l.b16 %v730
        %v763 = vunpack.c.l.b16 %v731
        %v764 = vunpack.c.l.b16 %v732
        %v765 = vunpack.c.l.b16 %v733
        %v766 = vpack.c.b16 %v751, %v750
        %v767 = vpack.c.b16 %v753, %v752
        %v768 = vpack.c.b16 %v755, %v754
        %v769 = vpack.c.b16 %v757, %v756
        %v770 = vpack.c.b16 %v759, %v758
        %v771 = vpack.c.b16 %v761, %v760
        %v772 = vpack.c.b16 %v763, %v762
        %v773 = vpack.c.b16 %v765, %v764
        %782 = vmatprep.subr.bf16.mxu0 0
        %783 = vmatpush1.bf16.msra.mxu0 1065369472
        %784 = vmatprep.subr.bf16.mxu0 0
        %785 = vmatpush1.bf16.msra.mxu0 1065369472
        %786 = vmatprep.subr.bf16.mxu0 0
        %787 = vmatpush1.bf16.msra.mxu0 1065369472
        %788 = vmatprep.subr.bf16.mxu0 0
        %789 = vmatpush1.bf16.msra.mxu0 1065369472
        %790 = vmatprep.subr.bf16.mxu0 0
        %791 = vmatpush1.bf16.msra.mxu0 1065369472
        %792 = vmatprep.subr.bf16.mxu0 0
        %793 = vmatpush1.bf16.msra.mxu0 1065369472
        %794 = vmatprep.subr.bf16.mxu0 0
        %795 = vmatpush1.bf16.msra.mxu0 1065369472
        %796 = vmatprep.subr.bf16.mxu0 0
        %797 = vmatpush1.bf16.msra.mxu0 1065369472
        %798 = vmatprep.subr.bf16.mxu0 0
        %799 = vmatpush1.bf16.msra.mxu0 0
        %800 = vmatprep.subr.bf16.mxu0 0
        %801 = vmatpush1.bf16.msra.mxu0 0
        %802 = vmatprep.subr.bf16.mxu0 0
        %803 = vmatpush1.bf16.msra.mxu0 0
        %804 = vmatprep.subr.bf16.mxu0 0
        %805 = vmatpush1.bf16.msra.mxu0 0
        %806 = vmatprep.subr.bf16.mxu0 0
        %807 = vmatpush1.bf16.msra.mxu0 0
        %808 = vmatprep.subr.bf16.mxu0 0
        %809 = vmatpush1.bf16.msra.mxu0 0
        %810 = vmatprep.subr.bf16.mxu0 0
        %811 = vmatpush1.bf16.msra.mxu0 0
        %812 = vmatprep.subr.bf16.mxu0 0
        %813 = vmatpush1.bf16.msra.mxu0 0
        %814 = vmatprep.mubr.bf16.mxu0 0
        %815 = vmatmul.mubr.bf16.gmra.mrb[0].mxu0 %v766
        %v816 = vpop.f32.mrb[0].mxu0
        %v817 = vadd.f32 0.0, %v816
        %v818 = vpop.f32.mrb[0].mxu0
        %v819 = vpop.f32.mrb[0].mxu0
        %v820 = vadd.f32 0.0, %v819
        %v821 = vpop.f32.mrb[0].mxu0
        %822 = vmatprep.mubr.bf16.mxu0 0
        %823 = vmatmul.mubr.bf16.gmra.mrb[0].mxu0 %v767
        %v824 = vpop.f32.mrb[0].mxu0
        %v825 = vadd.f32 0.0, %v824
        %v826 = vpop.f32.mrb[0].mxu0
        %v827 = vpop.f32.mrb[0].mxu0
        %v828 = vadd.f32 0.0, %v827
        %v829 = vpop.f32.mrb[0].mxu0
        %830 = vmatprep.mubr.bf16.mxu0 0
        %831 = vmatmul.mubr.bf16.gmra.mrb[0].mxu0 %v768
        %v832 = vpop.f32.mrb[0].mxu0
        %v833 = vadd.f32 0.0, %v832
        %v834 = vpop.f32.mrb[0].mxu0
        %v835 = vpop.f32.mrb[0].mxu0
        %v836 = vadd.f32 0.0, %v835
        %v837 = vpop.f32.mrb[0].mxu0
        %838 = vmatprep.mubr.bf16.mxu0 0
        %839 = vmatmul.mubr.bf16.gmra.mrb[0].mxu0 %v769
        %v840 = vpop.f32.mrb[0].mxu0
        %v841 = vadd.f32 0.0, %v840
        %v842 = vpop.f32.mrb[0].mxu0
        %v843 = vpop.f32.mrb[0].mxu0
        %v844 = vadd.f32 0.0, %v843
        %v845 = vpop.f32.mrb[0].mxu0
        %846 = vmatprep.mubr.bf16.mxu0 0
        %847 = vmatmul.mubr.bf16.gmra.mrb[0].mxu0 %v770
        %v848 = vpop.f32.mrb[0].mxu0
        %v849 = vadd.f32 0.0, %v848
        %v850 = vpop.f32.mrb[0].mxu0
        %v851 = vpop.f32.mrb[0].mxu0
        %v852 = vadd.f32 0.0, %v851
        %v853 = vpop.f32.mrb[0].mxu0
        %854 = vmatprep.mubr.bf16.mxu0 0
        %855 = vmatmul.mubr.bf16.gmra.mrb[0].mxu0 %v771
        %v856 = vpop.f32.mrb[0].mxu0
        %v857 = vadd.f32 0.0, %v856
        %v858 = vpop.f32.mrb[0].mxu0
        %v859 = vpop.f32.mrb[0].mxu0
        %v860 = vadd.f32 0.0, %v859
        %v861 = vpop.f32.mrb[0].mxu0
        %862 = vmatprep.mubr.bf16.mxu0 0
        %863 = vmatmul.mubr.bf16.gmra.mrb[0].mxu0 %v772
        %v864 = vpop.f32.mrb[0].mxu0
        %v865 = vadd.f32 0.0, %v864
        %v866 = vpop.f32.mrb[0].mxu0
        %v867 = vpop.f32.mrb[0].mxu0
        %v868 = vadd.f32 0.0, %v867
        %v869 = vpop.f32.mrb[0].mxu0
        %870 = vmatprep.mubr.bf16.mxu0 0
        %871 = vmatmul.mubr.bf16.gmra.mrb[0].mxu0 %v773
        %v872 = vpop.f32.mrb[0].mxu0
        %v873 = vadd.f32 0.0, %v872
        %v874 = vpop.f32.mrb[0].mxu0
        %v875 = vpop.f32.mrb[0].mxu0
        %v876 = vadd.f32 0.0, %v875
        %v877 = vpop.f32.mrb[0].mxu0
        %878 = vdwg.mxu0
        %879 = vxpose.xlu0.c.b16.start [1/8] %v766, 128
        %880 = vxpose.xlu0.c.b16.cont [2/8] %v767, 128
        %881 = vxpose.xlu0.c.b16.cont [3/8] %v768, 128
        %882 = vxpose.xlu0.c.b16.cont [4/8] %v769, 128
        %883 = vxpose.xlu0.c.b16.cont [5/8] %v770, 128
        %884 = vxpose.xlu0.c.b16.cont [6/8] %v771, 128
        %885 = vxpose.xlu0.c.b16.cont [7/8] %v772, 128
        %886 = vxpose.xlu0.c.b16.end [8/8] %v773, 128
        %v887 = vpop.trf.xlu0
        %v888 = vpop.trf.xlu0
        %v889 = vpop.trf.xlu0
        %v890 = vpop.trf.xlu0
        %v891 = vpop.trf.xlu0
        %v892 = vpop.trf.xlu0
        %v893 = vpop.trf.xlu0
        %v894 = vpop.trf.xlu0
        %895 = vmatprep.subr.bf16.mxu0 0
        %896 = vmatpush1.bf16.msra.mxu0 1065369472
        %897 = vmatprep.subr.bf16.mxu0 0
        %898 = vmatpush1.bf16.msra.mxu0 1065369472
        %899 = vmatprep.subr.bf16.mxu0 0
        %900 = vmatpush1.bf16.msra.mxu0 1065369472
        %901 = vmatprep.subr.bf16.mxu0 0
        %902 = vmatpush1.bf16.msra.mxu0 1065369472
        %903 = vmatprep.subr.bf16.mxu0 0
        %904 = vmatpush1.bf16.msra.mxu0 1065369472
        %905 = vmatprep.subr.bf16.mxu0 0
        %906 = vmatpush1.bf16.msra.mxu0 1065369472
        %907 = vmatprep.subr.bf16.mxu0 0
        %908 = vmatpush1.bf16.msra.mxu0 1065369472
        %909 = vmatprep.subr.bf16.mxu0 0
        %910 = vmatpush1.bf16.msra.mxu0 1065369472
        %911 = vmatprep.subr.bf16.mxu0 0
        %912 = vmatpush1.bf16.msra.mxu0 0
        %913 = vmatprep.subr.bf16.mxu0 0
        %914 = vmatpush1.bf16.msra.mxu0 0
        %915 = vmatprep.subr.bf16.mxu0 0
        %916 = vmatpush1.bf16.msra.mxu0 0
        %917 = vmatprep.subr.bf16.mxu0 0
        %918 = vmatpush1.bf16.msra.mxu0 0
        %919 = vmatprep.subr.bf16.mxu0 0
        %920 = vmatpush1.bf16.msra.mxu0 0
        %921 = vmatprep.subr.bf16.mxu0 0
        %922 = vmatpush1.bf16.msra.mxu0 0
        %923 = vmatprep.subr.bf16.mxu0 0
        %924 = vmatpush1.bf16.msra.mxu0 0
        %925 = vmatprep.subr.bf16.mxu0 0
        %926 = vmatpush1.bf16.msra.mxu0 0
        %927 = vmatprep.mubr.bf16.mxu0 0
        %928 = vmatmul.mubr.bf16.gmra.mrb[0].mxu0 %v887
        %v929 = vpop.f32.mrb[0].mxu0
        %v930 = vadd.f32 0.0, %v929
        %v931 = vpop.f32.mrb[0].mxu0
        %v932 = vpop.f32.mrb[0].mxu0
        %v933 = vadd.f32 0.0, %v932
        %v934 = vpop.f32.mrb[0].mxu0
        %935 = vmatprep.mubr.bf16.mxu0 0
        %936 = vmatmul.mubr.bf16.gmra.mrb[0].mxu0 %v888
        %v937 = vpop.f32.mrb[0].mxu0
        %v938 = vadd.f32 0.0, %v937
        %v939 = vpop.f32.mrb[0].mxu0
        %v940 = vpop.f32.mrb[0].mxu0
        %v941 = vadd.f32 0.0, %v940
        %v942 = vpop.f32.mrb[0].mxu0
        %943 = vmatprep.mubr.bf16.mxu0 0
        %944 = vmatmul.mubr.bf16.gmra.mrb[0].mxu0 %v889
        %v945 = vpop.f32.mrb[0].mxu0
        %v946 = vadd.f32 0.0, %v945
        %v947 = vpop.f32.mrb[0].mxu0
        %v948 = vpop.f32.mrb[0].mxu0
        %v949 = vadd.f32 0.0, %v948
        %v950 = vpop.f32.mrb[0].mxu0
        %951 = vmatprep.mubr.bf16.mxu0 0
        %952 = vmatmul.mubr.bf16.gmra.mrb[0].mxu0 %v890
        %v953 = vpop.f32.mrb[0].mxu0
        %v954 = vadd.f32 0.0, %v953
        %v955 = vpop.f32.mrb[0].mxu0
        %v956 = vpop.f32.mrb[0].mxu0
        %v957 = vadd.f32 0.0, %v956
        %v958 = vpop.f32.mrb[0].mxu0
        %959 = vmatprep.mubr.bf16.mxu0 0
        %960 = vmatmul.mubr.bf16.gmra.mrb[0].mxu0 %v891
        %v961 = vpop.f32.mrb[0].mxu0
        %v962 = vadd.f32 0.0, %v961
        %v963 = vpop.f32.mrb[0].mxu0
        %v964 = vpop.f32.mrb[0].mxu0
        %v965 = vadd.f32 0.0, %v964
        %v966 = vpop.f32.mrb[0].mxu0
        %967 = vmatprep.mubr.bf16.mxu0 0
        %968 = vmatmul.mubr.bf16.gmra.mrb[0].mxu0 %v892
        %v969 = vpop.f32.mrb[0].mxu0
        %v970 = vadd.f32 0.0, %v969
        %v971 = vpop.f32.mrb[0].mxu0
        %v972 = vpop.f32.mrb[0].mxu0
        %v973 = vadd.f32 0.0, %v972
        %v974 = vpop.f32.mrb[0].mxu0
        %975 = vmatprep.mubr.bf16.mxu0 0
        %976 = vmatmul.mubr.bf16.gmra.mrb[0].mxu0 %v893
        %v977 = vpop.f32.mrb[0].mxu0
        %v978 = vadd.f32 0.0, %v977
        %v979 = vpop.f32.mrb[0].mxu0
        %v980 = vpop.f32.mrb[0].mxu0
        %v981 = vadd.f32 0.0, %v980
        %v982 = vpop.f32.mrb[0].mxu0
        %983 = vmatprep.mubr.bf16.mxu0 0
        %984 = vmatmul.mubr.bf16.gmra.mrb[0].mxu0 %v894
        %v985 = vpop.f32.mrb[0].mxu0
        %v986 = vadd.f32 0.0, %v985
        %v987 = vpop.f32.mrb[0].mxu0
        %v988 = vpop.f32.mrb[0].mxu0
        %v989 = vadd.f32 0.0, %v988
        %v990 = vpop.f32.mrb[0].mxu0
        %991 = vdwg.mxu0
        %v992 = vmax.f32 %v542, 1.0
        %v993 = vmax.f32 %v545, 1.0
        %v994 = vmax.f32 %v550, 1.0
        %v995 = vmax.f32 %v553, 1.0
        %v996 = vmax.f32 %v558, 1.0
        %v997 = vmax.f32 %v561, 1.0
        %v998 = vmax.f32 %v566, 1.0
        %v999 = vmax.f32 %v569, 1.0
        %v1000 = vmax.f32 %v574, 1.0
        %v1001 = vmax.f32 %v577, 1.0
        %v1002 = vmax.f32 %v582, 1.0
        %v1003 = vmax.f32 %v585, 1.0
        %v1004 = vmax.f32 %v590, 1.0
        %v1005 = vmax.f32 %v593, 1.0
        %v1006 = vmax.f32 %v598, 1.0
        %v1007 = vmax.f32 %v601, 1.0
        %v1008 = vmax.f32 %v817, 1.0
        %v1009 = vmax.f32 %v820, 1.0
        %v1010 = vmax.f32 %v825, 1.0
        %v1011 = vmax.f32 %v828, 1.0
        %v1012 = vmax.f32 %v833, 1.0
        %v1013 = vmax.f32 %v836, 1.0
        %v1014 = vmax.f32 %v841, 1.0
        %v1015 = vmax.f32 %v844, 1.0
        %v1016 = vmax.f32 %v849, 1.0
        %v1017 = vmax.f32 %v852, 1.0
        %v1018 = vmax.f32 %v857, 1.0
        %v1019 = vmax.f32 %v860, 1.0
        %v1020 = vmax.f32 %v865, 1.0
        %v1021 = vmax.f32 %v868, 1.0
        %v1022 = vmax.f32 %v873, 1.0
        %v1023 = vmax.f32 %v876, 1.0
        %v1024 = vrsqrt.pop %v992
        %v1025 = vrsqrt.pop %v993
        %v1026 = vrsqrt.pop %v994
        %v1027 = vrsqrt.pop %v995
        %v1028 = vrsqrt.pop %v996
        %v1029 = vrsqrt.pop %v997
        %v1030 = vrsqrt.pop %v998
        %v1031 = vrsqrt.pop %v999
        %v1032 = vrsqrt.pop %v1000
        %v1033 = vrsqrt.pop %v1001
        %v1034 = vrsqrt.pop %v1002
        %v1035 = vrsqrt.pop %v1003
        %v1036 = vrsqrt.pop %v1004
        %v1037 = vrsqrt.pop %v1005
        %v1038 = vrsqrt.pop %v1006
        %v1039 = vrsqrt.pop %v1007
        %v1040 = vrsqrt.pop %v1008
        %v1041 = vrsqrt.pop %v1009
        %v1042 = vrsqrt.pop %v1010
        %v1043 = vrsqrt.pop %v1011
        %v1044 = vrsqrt.pop %v1012
        %v1045 = vrsqrt.pop %v1013
        %v1046 = vrsqrt.pop %v1014
        %v1047 = vrsqrt.pop %v1015
        %v1048 = vrsqrt.pop %v1016
        %v1049 = vrsqrt.pop %v1017
        %v1050 = vrsqrt.pop %v1018
        %v1051 = vrsqrt.pop %v1019
        %v1052 = vrsqrt.pop %v1020
        %v1053 = vrsqrt.pop %v1021
        %v1054 = vrsqrt.pop %v1022
        %v1055 = vrsqrt.pop %v1023
        %v1056 = vmax.f32 %v655, 1.0
        %v1057 = vmax.f32 %v658, 1.0
        %v1058 = vmax.f32 %v663, 1.0
        %v1059 = vmax.f32 %v666, 1.0
        %v1060 = vmax.f32 %v671, 1.0
        %v1061 = vmax.f32 %v674, 1.0
        %v1062 = vmax.f32 %v679, 1.0
        %v1063 = vmax.f32 %v682, 1.0
        %v1064 = vmax.f32 %v687, 1.0
        %v1065 = vmax.f32 %v690, 1.0
        %v1066 = vmax.f32 %v695, 1.0
        %v1067 = vmax.f32 %v698, 1.0
        %v1068 = vmax.f32 %v703, 1.0
        %v1069 = vmax.f32 %v706, 1.0
        %v1070 = vmax.f32 %v711, 1.0
        %v1071 = vmax.f32 %v714, 1.0
        %v1072 = vmax.f32 %v930, 1.0
        %v1073 = vmax.f32 %v933, 1.0
        %v1074 = vmax.f32 %v938, 1.0
        %v1075 = vmax.f32 %v941, 1.0
        %v1076 = vmax.f32 %v946, 1.0
        %v1077 = vmax.f32 %v949, 1.0
        %v1078 = vmax.f32 %v954, 1.0
        %v1079 = vmax.f32 %v957, 1.0
        %v1080 = vmax.f32 %v962, 1.0
        %v1081 = vmax.f32 %v965, 1.0
        %v1082 = vmax.f32 %v970, 1.0
        %v1083 = vmax.f32 %v973, 1.0
        %v1084 = vmax.f32 %v978, 1.0
        %v1085 = vmax.f32 %v981, 1.0
        %v1086 = vmax.f32 %v986, 1.0
        %v1087 = vmax.f32 %v989, 1.0
        %v1088 = vrsqrt.pop %v1056
        %v1089 = vrsqrt.pop %v1057
        %v1090 = vrsqrt.pop %v1058
        %v1091 = vrsqrt.pop %v1059
        %v1092 = vrsqrt.pop %v1060
        %v1093 = vrsqrt.pop %v1061
        %v1094 = vrsqrt.pop %v1062
        %v1095 = vrsqrt.pop %v1063
        %v1096 = vrsqrt.pop %v1064
        %v1097 = vrsqrt.pop %v1065
        %v1098 = vrsqrt.pop %v1066
        %v1099 = vrsqrt.pop %v1067
        %v1100 = vrsqrt.pop %v1068
        %v1101 = vrsqrt.pop %v1069
        %v1102 = vrsqrt.pop %v1070
        %v1103 = vrsqrt.pop %v1071
        %v1104 = vrsqrt.pop %v1072
        %v1105 = vrsqrt.pop %v1073
        %v1106 = vrsqrt.pop %v1074
        %v1107 = vrsqrt.pop %v1075
        %v1108 = vrsqrt.pop %v1076
        %v1109 = vrsqrt.pop %v1077
        %v1110 = vrsqrt.pop %v1078
        %v1111 = vrsqrt.pop %v1079
        %v1112 = vrsqrt.pop %v1080
        %v1113 = vrsqrt.pop %v1081
        %v1114 = vrsqrt.pop %v1082
        %v1115 = vrsqrt.pop %v1083
        %v1116 = vrsqrt.pop %v1084
        %v1117 = vrsqrt.pop %v1085
        %v1118 = vrsqrt.pop %v1086
        %v1119 = vrsqrt.pop %v1087
        %v1120 = vld [vmem:[%s439] sm:$0xf]
        %v1121 = vld [vmem:[%s439 + $0x4] sm:$0xf]
        %v1122 = vld [vmem:[%s439 + $0x8] sm:$0xf]
        %v1123 = vld [vmem:[%s439 + $0xc] sm:$0xf]
        %v1124 = vld [vmem:[%s439 + $0x10] sm:$0xf]
        %v1125 = vld [vmem:[%s439 + $0x14] sm:$0xf]
        %v1126 = vld [vmem:[%s439 + $0x18] sm:$0xf]
        %v1127 = vld [vmem:[%s439 + $0x1c] sm:$0xf]
        %v1128 = vld [vmem:[%s439 + $0x20] sm:$0xf]
        %v1129 = vld [vmem:[%s439 + $0x24] sm:$0xf]
        %v1130 = vld [vmem:[%s439 + $0x28] sm:$0xf]
        %v1131 = vld [vmem:[%s439 + $0x2c] sm:$0xf]
        %v1132 = vld [vmem:[%s439 + $0x30] sm:$0xf]
        %v1133 = vld [vmem:[%s439 + $0x34] sm:$0xf]
        %v1134 = vld [vmem:[%s439 + $0x38] sm:$0xf]
        %v1135 = vld [vmem:[%s439 + $0x3c] sm:$0xf]
        %v1136 = vld [vmem:[%s439 + $0x40] sm:$0xf]
        %v1137 = vld [vmem:[%s439 + $0x44] sm:$0xf]
        %v1138 = vld [vmem:[%s439 + $0x48] sm:$0xf]
        %v1139 = vld [vmem:[%s439 + $0x4c] sm:$0xf]
        %v1140 = vld [vmem:[%s439 + $0x50] sm:$0xf]
        %v1141 = vld [vmem:[%s439 + $0x54] sm:$0xf]
        %v1142 = vld [vmem:[%s439 + $0x58] sm:$0xf]
        %v1143 = vld [vmem:[%s439 + $0x5c] sm:$0xf]
        %v1144 = vld [vmem:[%s439 + $0x60] sm:$0xf]
        %v1145 = vld [vmem:[%s439 + $0x64] sm:$0xf]
        %v1146 = vld [vmem:[%s439 + $0x68] sm:$0xf]
        %v1147 = vld [vmem:[%s439 + $0x6c] sm:$0xf]
        %v1148 = vld [vmem:[%s439 + $0x70] sm:$0xf]
        %v1149 = vld [vmem:[%s439 + $0x74] sm:$0xf]
        %v1150 = vld [vmem:[%s439 + $0x78] sm:$0xf]
        %v1151 = vld [vmem:[%s439 + $0x7c] sm:$0xf]
        %v1152 = vld [vmem:[%s2] sm:$0xf]
        %v1153 = vld [vmem:[%s2 + $0x4] sm:$0xf]
        %v1154 = vld [vmem:[%s3] sm:$0x1]
        %v1156 = vlaneseq
        %v1157 = vshrl.u32 %v1156, 7
        %v1158 = vsub.s32 0, %v1157
        %v1159 = vrot.slane %v1154, %v1158
        %v1193 = vunpack.c.l.b16 %v1120
        %v1194 = vunpack.c.l.b16 %v1121
        %v1195 = vunpack.c.l.b16 %v1122
        %v1196 = vunpack.c.l.b16 %v1123
        %v1197 = vunpack.c.l.b16 %v1124
        %v1198 = vunpack.c.l.b16 %v1125
        %v1199 = vunpack.c.l.b16 %v1126
        %v1200 = vunpack.c.l.b16 %v1127
        %v1201 = vunpack.c.l.b16 %v1128
        %v1202 = vunpack.c.l.b16 %v1129
        %v1203 = vunpack.c.l.b16 %v1130
        %v1204 = vunpack.c.l.b16 %v1131
        %v1205 = vunpack.c.l.b16 %v1132
        %v1206 = vunpack.c.l.b16 %v1133
        %v1207 = vunpack.c.l.b16 %v1134
        %v1208 = vunpack.c.l.b16 %v1135
        %v1209 = vunpack.c.l.b16 %v1136
        %v1210 = vunpack.c.l.b16 %v1137
        %v1211 = vunpack.c.l.b16 %v1138
        %v1212 = vunpack.c.l.b16 %v1139
        %v1213 = vunpack.c.l.b16 %v1140
        %v1214 = vunpack.c.l.b16 %v1141
        %v1215 = vunpack.c.l.b16 %v1142
        %v1216 = vunpack.c.l.b16 %v1143
        %v1217 = vunpack.c.l.b16 %v1144
        %v1218 = vunpack.c.l.b16 %v1145
        %v1219 = vunpack.c.l.b16 %v1146
        %v1220 = vunpack.c.l.b16 %v1147
        %v1221 = vunpack.c.l.b16 %v1148
        %v1222 = vunpack.c.l.b16 %v1149
        %v1223 = vunpack.c.l.b16 %v1150
        %v1224 = vunpack.c.l.b16 %v1151
        %v1225 = vpack.c.b16 %v1194, %v1193
        %v1226 = vpack.c.b16 %v1196, %v1195
        %v1227 = vpack.c.b16 %v1198, %v1197
        %v1228 = vpack.c.b16 %v1200, %v1199
        %v1229 = vpack.c.b16 %v1202, %v1201
        %v1230 = vpack.c.b16 %v1204, %v1203
        %v1231 = vpack.c.b16 %v1206, %v1205
        %v1232 = vpack.c.b16 %v1208, %v1207
        %v1233 = vpack.c.b16 %v1210, %v1209
        %v1234 = vpack.c.b16 %v1212, %v1211
        %v1235 = vpack.c.b16 %v1214, %v1213
        %v1236 = vpack.c.b16 %v1216, %v1215
        %v1237 = vpack.c.b16 %v1218, %v1217
        %v1238 = vpack.c.b16 %v1220, %v1219
        %v1239 = vpack.c.b16 %v1222, %v1221
        %v1240 = vpack.c.b16 %v1224, %v1223
        %v1243 = vunpack.c.l.b16 %v1152
        %v1244 = vunpack.c.l.b16 %v1153
        %v1245 = vpack.c.b16 %v1244, %v1243
        %vm1247 = vcmask 130048
        %v1249 = vsel %vm1247, %v1225, 0
        %v1252 = vsel %vm1247, %v1226, 0
        %v1255 = vsel %vm1247, %v1227, 0
        %v1258 = vsel %vm1247, %v1228, 0
        %v1261 = vsel %vm1247, %v1229, 0
        %v1264 = vsel %vm1247, %v1230, 0
        %v1267 = vsel %vm1247, %v1231, 0
        %v1270 = vsel %vm1247, %v1232, 0
        %v1273 = vsel %vm1247, %v1233, 0
        %v1276 = vsel %vm1247, %v1234, 0
        %v1279 = vsel %vm1247, %v1235, 0
        %v1282 = vsel %vm1247, %v1236, 0
        %v1285 = vsel %vm1247, %v1237, 0
        %v1288 = vsel %vm1247, %v1238, 0
        %v1291 = vsel %vm1247, %v1239, 0
        %v1294 = vsel %vm1247, %v1240, 0
        %1296 = vmatprep.subr.bf16.mxu0 0
        %1297 = vmatpush1.bf16.msra.mxu0 %v1245
        %1298 = vmatprep.subr.bf16.mxu0 0
        %1299 = vmatpush1.bf16.msra.mxu0 0
        %1300 = vmatprep.subr.bf16.mxu0 0
        %1301 = vmatpush1.bf16.msra.mxu0 0
        %1302 = vmatprep.subr.bf16.mxu0 0
        %1303 = vmatpush1.bf16.msra.mxu0 0
        %1304 = vmatprep.subr.bf16.mxu0 0
        %1305 = vmatpush1.bf16.msra.mxu0 0
        %1306 = vmatprep.subr.bf16.mxu0 0
        %1307 = vmatpush1.bf16.msra.mxu0 0
        %1308 = vmatprep.subr.bf16.mxu0 0
        %1309 = vmatpush1.bf16.msra.mxu0 0
        %1310 = vmatprep.subr.bf16.mxu0 0
        %1311 = vmatpush1.bf16.msra.mxu0 0
        %1312 = vmatprep.subr.bf16.mxu0 0
        %1313 = vmatpush1.bf16.msra.mxu0 0
        %1314 = vmatprep.subr.bf16.mxu0 0
        %1315 = vmatpush1.bf16.msra.mxu0 0
        %1316 = vmatprep.subr.bf16.mxu0 0
        %1317 = vmatpush1.bf16.msra.mxu0 0
        %1318 = vmatprep.subr.bf16.mxu0 0
        %1319 = vmatpush1.bf16.msra.mxu0 0
        %1320 = vmatprep.subr.bf16.mxu0 0
        %1321 = vmatpush1.bf16.msra.mxu0 0
        %1322 = vmatprep.subr.bf16.mxu0 0
        %1323 = vmatpush1.bf16.msra.mxu0 0
        %1324 = vmatprep.subr.bf16.mxu0 0
        %1325 = vmatpush1.bf16.msra.mxu0 0
        %1326 = vmatprep.subr.bf16.mxu0 0
        %1327 = vmatpush1.bf16.msra.mxu0 0
        %1328 = vmatprep.mubr.bf16.mxu0 0
        %1329 = vmatmul.mubr.bf16.gmra.mrb[0].mxu0 %v1249
        %v1330 = vpop.f32.mrb[0].mxu0
        %v1331 = vadd.f32 %v1159, %v1330
        %v1332 = vpop.f32.mrb[0].mxu0
        %v1333 = vpop.f32.mrb[0].mxu0
        %v1334 = vadd.f32 %v1159, %v1333
        %v1335 = vpop.f32.mrb[0].mxu0
        %1336 = vmatprep.mubr.bf16.mxu0 0
        %1337 = vmatmul.mubr.bf16.gmra.mrb[0].mxu0 %v1252
        %v1338 = vpop.f32.mrb[0].mxu0
        %v1339 = vadd.f32 %v1159, %v1338
        %v1340 = vpop.f32.mrb[0].mxu0
        %v1341 = vpop.f32.mrb[0].mxu0
        %v1342 = vadd.f32 %v1159, %v1341
        %v1343 = vpop.f32.mrb[0].mxu0
        %1344 = vmatprep.mubr.bf16.mxu0 0
        %1345 = vmatmul.mubr.bf16.gmra.mrb[0].mxu0 %v1255
        %v1346 = vpop.f32.mrb[0].mxu0
        %v1347 = vadd.f32 %v1159, %v1346
        %v1348 = vpop.f32.mrb[0].mxu0
        %v1349 = vpop.f32.mrb[0].mxu0
        %v1350 = vadd.f32 %v1159, %v1349
        %v1351 = vpop.f32.mrb[0].mxu0
        %1352 = vmatprep.mubr.bf16.mxu0 0
        %1353 = vmatmul.mubr.bf16.gmra.mrb[0].mxu0 %v1258
        %v1354 = vpop.f32.mrb[0].mxu0
        %v1355 = vadd.f32 %v1159, %v1354
        %v1356 = vpop.f32.mrb[0].mxu0
        %v1357 = vpop.f32.mrb[0].mxu0
        %v1358 = vadd.f32 %v1159, %v1357
        %v1359 = vpop.f32.mrb[0].mxu0
        %1360 = vmatprep.mubr.bf16.mxu0 0
        %1361 = vmatmul.mubr.bf16.gmra.mrb[0].mxu0 %v1261
        %v1362 = vpop.f32.mrb[0].mxu0
        %v1363 = vadd.f32 %v1159, %v1362
        %v1364 = vpop.f32.mrb[0].mxu0
        %v1365 = vpop.f32.mrb[0].mxu0
        %v1366 = vadd.f32 %v1159, %v1365
        %v1367 = vpop.f32.mrb[0].mxu0
        %1368 = vmatprep.mubr.bf16.mxu0 0
        %1369 = vmatmul.mubr.bf16.gmra.mrb[0].mxu0 %v1264
        %v1370 = vpop.f32.mrb[0].mxu0
        %v1371 = vadd.f32 %v1159, %v1370
        %v1372 = vpop.f32.mrb[0].mxu0
        %v1373 = vpop.f32.mrb[0].mxu0
        %v1374 = vadd.f32 %v1159, %v1373
        %v1375 = vpop.f32.mrb[0].mxu0
        %1376 = vmatprep.mubr.bf16.mxu0 0
        %1377 = vmatmul.mubr.bf16.gmra.mrb[0].mxu0 %v1267
        %v1378 = vpop.f32.mrb[0].mxu0
        %v1379 = vadd.f32 %v1159, %v1378
        %v1380 = vpop.f32.mrb[0].mxu0
        %v1381 = vpop.f32.mrb[0].mxu0
        %v1382 = vadd.f32 %v1159, %v1381
        %v1383 = vpop.f32.mrb[0].mxu0
        %1384 = vmatprep.mubr.bf16.mxu0 0
        %1385 = vmatmul.mubr.bf16.gmra.mrb[0].mxu0 %v1270
        %v1386 = vpop.f32.mrb[0].mxu0
        %v1387 = vadd.f32 %v1159, %v1386
        %v1388 = vpop.f32.mrb[0].mxu0
        %v1389 = vpop.f32.mrb[0].mxu0
        %v1390 = vadd.f32 %v1159, %v1389
        %v1391 = vpop.f32.mrb[0].mxu0
        %1392 = vmatprep.mubr.bf16.mxu0 0
        %1393 = vmatmul.mubr.bf16.gmra.mrb[0].mxu0 %v1273
        %v1394 = vpop.f32.mrb[0].mxu0
        %v1395 = vadd.f32 %v1159, %v1394
        %v1396 = vpop.f32.mrb[0].mxu0
        %v1397 = vpop.f32.mrb[0].mxu0
        %v1398 = vadd.f32 %v1159, %v1397
        %v1399 = vpop.f32.mrb[0].mxu0
        %1400 = vmatprep.mubr.bf16.mxu0 0
        %1401 = vmatmul.mubr.bf16.gmra.mrb[0].mxu0 %v1276
        %v1402 = vpop.f32.mrb[0].mxu0
        %v1403 = vadd.f32 %v1159, %v1402
        %v1404 = vpop.f32.mrb[0].mxu0
        %v1405 = vpop.f32.mrb[0].mxu0
        %v1406 = vadd.f32 %v1159, %v1405
        %v1407 = vpop.f32.mrb[0].mxu0
        %1408 = vmatprep.mubr.bf16.mxu0 0
        %1409 = vmatmul.mubr.bf16.gmra.mrb[0].mxu0 %v1279
        %v1410 = vpop.f32.mrb[0].mxu0
        %v1411 = vadd.f32 %v1159, %v1410
        %v1412 = vpop.f32.mrb[0].mxu0
        %v1413 = vpop.f32.mrb[0].mxu0
        %v1414 = vadd.f32 %v1159, %v1413
        %v1415 = vpop.f32.mrb[0].mxu0
        %1416 = vmatprep.mubr.bf16.mxu0 0
        %1417 = vmatmul.mubr.bf16.gmra.mrb[0].mxu0 %v1282
        %v1418 = vpop.f32.mrb[0].mxu0
        %v1419 = vadd.f32 %v1159, %v1418
        %v1420 = vpop.f32.mrb[0].mxu0
        %v1421 = vpop.f32.mrb[0].mxu0
        %v1422 = vadd.f32 %v1159, %v1421
        %v1423 = vpop.f32.mrb[0].mxu0
        %1424 = vmatprep.mubr.bf16.mxu0 0
        %1425 = vmatmul.mubr.bf16.gmra.mrb[0].mxu0 %v1285
        %v1426 = vpop.f32.mrb[0].mxu0
        %v1427 = vadd.f32 %v1159, %v1426
        %v1428 = vpop.f32.mrb[0].mxu0
        %v1429 = vpop.f32.mrb[0].mxu0
        %v1430 = vadd.f32 %v1159, %v1429
        %v1431 = vpop.f32.mrb[0].mxu0
        %1432 = vmatprep.mubr.bf16.mxu0 0
        %1433 = vmatmul.mubr.bf16.gmra.mrb[0].mxu0 %v1288
        %v1434 = vpop.f32.mrb[0].mxu0
        %v1435 = vadd.f32 %v1159, %v1434
        %v1436 = vpop.f32.mrb[0].mxu0
        %v1437 = vpop.f32.mrb[0].mxu0
        %v1438 = vadd.f32 %v1159, %v1437
        %v1439 = vpop.f32.mrb[0].mxu0
        %1440 = vmatprep.mubr.bf16.mxu0 0
        %1441 = vmatmul.mubr.bf16.gmra.mrb[0].mxu0 %v1291
        %v1442 = vpop.f32.mrb[0].mxu0
        %v1443 = vadd.f32 %v1159, %v1442
        %v1444 = vpop.f32.mrb[0].mxu0
        %v1445 = vpop.f32.mrb[0].mxu0
        %v1446 = vadd.f32 %v1159, %v1445
        %v1447 = vpop.f32.mrb[0].mxu0
        %1448 = vmatprep.mubr.bf16.mxu0 0
        %1449 = vmatmul.mubr.bf16.gmra.mrb[0].mxu0 %v1294
        %v1450 = vpop.f32.mrb[0].mxu0
        %v1451 = vadd.f32 %v1159, %v1450
        %v1452 = vpop.f32.mrb[0].mxu0
        %v1453 = vpop.f32.mrb[0].mxu0
        %v1454 = vadd.f32 %v1159, %v1453
        %v1455 = vpop.f32.mrb[0].mxu0
        %1456 = vdwg.mxu0
        %1458 = vset.pattern.permute.xlu0 0
        %1459 = vperm.xlu0 %1458, %v1088
        %v1460 = vpop.permute.xlu0 %1459
        %1463 = vset.pattern.permute.xlu0 0
        %1464 = vperm.xlu0 %1463, %v1089
        %v1465 = vpop.permute.xlu0 %1464
        %1468 = vset.pattern.permute.xlu0 0
        %1469 = vperm.xlu0 %1468, %v1090
        %v1470 = vpop.permute.xlu0 %1469
        %1473 = vset.pattern.permute.xlu0 0
        %1474 = vperm.xlu0 %1473, %v1091
        %v1475 = vpop.permute.xlu0 %1474
        %1478 = vset.pattern.permute.xlu0 0
        %1479 = vperm.xlu0 %1478, %v1092
        %v1480 = vpop.permute.xlu0 %1479
        %1483 = vset.pattern.permute.xlu0 0
        %1484 = vperm.xlu0 %1483, %v1093
        %v1485 = vpop.permute.xlu0 %1484
        %1488 = vset.pattern.permute.xlu0 0
        %1489 = vperm.xlu0 %1488, %v1094
        %v1490 = vpop.permute.xlu0 %1489
        %1493 = vset.pattern.permute.xlu0 0
        %1494 = vperm.xlu0 %1493, %v1095
        %v1495 = vpop.permute.xlu0 %1494
        %1498 = vset.pattern.permute.xlu0 0
        %1499 = vperm.xlu0 %1498, %v1096
        %v1500 = vpop.permute.xlu0 %1499
        %1503 = vset.pattern.permute.xlu0 0
        %1504 = vperm.xlu0 %1503, %v1097
        %v1505 = vpop.permute.xlu0 %1504
        %1508 = vset.pattern.permute.xlu0 0
        %1509 = vperm.xlu0 %1508, %v1098
        %v1510 = vpop.permute.xlu0 %1509
        %1513 = vset.pattern.permute.xlu0 0
        %1514 = vperm.xlu0 %1513, %v1099
        %v1515 = vpop.permute.xlu0 %1514
        %1518 = vset.pattern.permute.xlu0 0
        %1519 = vperm.xlu0 %1518, %v1100
        %v1520 = vpop.permute.xlu0 %1519
        %1523 = vset.pattern.permute.xlu0 0
        %1524 = vperm.xlu0 %1523, %v1101
        %v1525 = vpop.permute.xlu0 %1524
        %1528 = vset.pattern.permute.xlu0 0
        %1529 = vperm.xlu0 %1528, %v1102
        %v1530 = vpop.permute.xlu0 %1529
        %1533 = vset.pattern.permute.xlu0 0
        %1534 = vperm.xlu0 %1533, %v1103
        %v1535 = vpop.permute.xlu0 %1534
        %1538 = vset.pattern.permute.xlu0 0
        %1539 = vperm.xlu0 %1538, %v1104
        %v1540 = vpop.permute.xlu0 %1539
        %1543 = vset.pattern.permute.xlu0 0
        %1544 = vperm.xlu0 %1543, %v1105
        %v1545 = vpop.permute.xlu0 %1544
        %1548 = vset.pattern.permute.xlu0 0
        %1549 = vperm.xlu0 %1548, %v1106
        %v1550 = vpop.permute.xlu0 %1549
        %1553 = vset.pattern.permute.xlu0 0
        %1554 = vperm.xlu0 %1553, %v1107
        %v1555 = vpop.permute.xlu0 %1554
        %1558 = vset.pattern.permute.xlu0 0
        %1559 = vperm.xlu0 %1558, %v1108
        %v1560 = vpop.permute.xlu0 %1559
        %1563 = vset.pattern.permute.xlu0 0
        %1564 = vperm.xlu0 %1563, %v1109
        %v1565 = vpop.permute.xlu0 %1564
        %1568 = vset.pattern.permute.xlu0 0
        %1569 = vperm.xlu0 %1568, %v1110
        %v1570 = vpop.permute.xlu0 %1569
        %1573 = vset.pattern.permute.xlu0 0
        %1574 = vperm.xlu0 %1573, %v1111
        %v1575 = vpop.permute.xlu0 %1574
        %1578 = vset.pattern.permute.xlu0 0
        %1579 = vperm.xlu0 %1578, %v1112
        %v1580 = vpop.permute.xlu0 %1579
        %1583 = vset.pattern.permute.xlu0 0
        %1584 = vperm.xlu0 %1583, %v1113
        %v1585 = vpop.permute.xlu0 %1584
        %1588 = vset.pattern.permute.xlu0 0
        %1589 = vperm.xlu0 %1588, %v1114
        %v1590 = vpop.permute.xlu0 %1589
        %1593 = vset.pattern.permute.xlu0 0
        %1594 = vperm.xlu0 %1593, %v1115
        %v1595 = vpop.permute.xlu0 %1594
        %1598 = vset.pattern.permute.xlu0 0
        %1599 = vperm.xlu0 %1598, %v1116
        %v1600 = vpop.permute.xlu0 %1599
        %1603 = vset.pattern.permute.xlu0 0
        %1604 = vperm.xlu0 %1603, %v1117
        %v1605 = vpop.permute.xlu0 %1604
        %1608 = vset.pattern.permute.xlu0 0
        %1609 = vperm.xlu0 %1608, %v1118
        %v1610 = vpop.permute.xlu0 %1609
        %1613 = vset.pattern.permute.xlu0 0
        %1614 = vperm.xlu0 %1613, %v1119
        %v1615 = vpop.permute.xlu0 %1614
        %v1617 = vmul.f32 %v1331, %v1460
        %v1618 = vmul.f32 %v1334, %v1465
        %v1619 = vmul.f32 %v1339, %v1470
        %v1620 = vmul.f32 %v1342, %v1475
        %v1621 = vmul.f32 %v1347, %v1480
        %v1622 = vmul.f32 %v1350, %v1485
        %v1623 = vmul.f32 %v1355, %v1490
        %v1624 = vmul.f32 %v1358, %v1495
        %v1625 = vmul.f32 %v1363, %v1500
        %v1626 = vmul.f32 %v1366, %v1505
        %v1627 = vmul.f32 %v1371, %v1510
        %v1628 = vmul.f32 %v1374, %v1515
        %v1629 = vmul.f32 %v1379, %v1520
        %v1630 = vmul.f32 %v1382, %v1525
        %v1631 = vmul.f32 %v1387, %v1530
        %v1632 = vmul.f32 %v1390, %v1535
        %v1633 = vmul.f32 %v1395, %v1540
        %v1634 = vmul.f32 %v1398, %v1545
        %v1635 = vmul.f32 %v1403, %v1550
        %v1636 = vmul.f32 %v1406, %v1555
        %v1637 = vmul.f32 %v1411, %v1560
        %v1638 = vmul.f32 %v1414, %v1565
        %v1639 = vmul.f32 %v1419, %v1570
        %v1640 = vmul.f32 %v1422, %v1575
        %v1641 = vmul.f32 %v1427, %v1580
        %v1642 = vmul.f32 %v1430, %v1585
        %v1643 = vmul.f32 %v1435, %v1590
        %v1644 = vmul.f32 %v1438, %v1595
        %v1645 = vmul.f32 %v1443, %v1600
        %v1646 = vmul.f32 %v1446, %v1605
        %v1647 = vmul.f32 %v1451, %v1610
        %v1648 = vmul.f32 %v1454, %v1615
        %v1649 = vpack.c.bf16 %v1618, %v1617
        %v1650 = vpack.c.bf16 %v1620, %v1619
        %v1651 = vpack.c.bf16 %v1622, %v1621
        %v1652 = vpack.c.bf16 %v1624, %v1623
        %v1653 = vpack.c.bf16 %v1626, %v1625
        %v1654 = vpack.c.bf16 %v1628, %v1627
        %v1655 = vpack.c.bf16 %v1630, %v1629
        %v1656 = vpack.c.bf16 %v1632, %v1631
        %v1657 = vpack.c.bf16 %v1634, %v1633
        %v1658 = vpack.c.bf16 %v1636, %v1635
        %v1659 = vpack.c.bf16 %v1638, %v1637
        %v1660 = vpack.c.bf16 %v1640, %v1639
        %v1661 = vpack.c.bf16 %v1642, %v1641
        %v1662 = vpack.c.bf16 %v1644, %v1643
        %v1663 = vpack.c.bf16 %v1646, %v1645
        %v1664 = vpack.c.bf16 %v1648, %v1647
        %1665 = vmatprep.subr.bf16.mxu0 0
        %1666 = vmatpush1.bf16.msra.mxu0 %v1649
        %1667 = vmatprep.subr.bf16.mxu0 0
        %1668 = vmatpush1.bf16.msra.mxu0 %v1650
        %1669 = vmatprep.subr.bf16.mxu0 0
        %1670 = vmatpush1.bf16.msra.mxu0 %v1651
        %1671 = vmatprep.subr.bf16.mxu0 0
        %1672 = vmatpush1.bf16.msra.mxu0 %v1652
        %1673 = vmatprep.subr.bf16.mxu0 0
        %1674 = vmatpush1.bf16.msra.mxu0 %v1653
        %1675 = vmatprep.subr.bf16.mxu0 0
        %1676 = vmatpush1.bf16.msra.mxu0 %v1654
        %1677 = vmatprep.subr.bf16.mxu0 0
        %1678 = vmatpush1.bf16.msra.mxu0 %v1655
        %1679 = vmatprep.subr.bf16.mxu0 0
        %1680 = vmatpush1.bf16.msra.mxu0 %v1656
        %1681 = vmatprep.subr.bf16.mxu0 0
        %1682 = vmatpush1.bf16.msra.mxu0 0
        %1683 = vmatprep.subr.bf16.mxu0 0
        %1684 = vmatpush1.bf16.msra.mxu0 0
        %1685 = vmatprep.subr.bf16.mxu0 0
        %1686 = vmatpush1.bf16.msra.mxu0 0
        %1687 = vmatprep.subr.bf16.mxu0 0
        %1688 = vmatpush1.bf16.msra.mxu0 0
        %1689 = vmatprep.subr.bf16.mxu0 0
        %1690 = vmatpush1.bf16.msra.mxu0 0
        %1691 = vmatprep.subr.bf16.mxu0 0
        %1692 = vmatpush1.bf16.msra.mxu0 0
        %1693 = vmatprep.subr.bf16.mxu0 0
        %1694 = vmatpush1.bf16.msra.mxu0 0
        %1695 = vmatprep.subr.bf16.mxu0 0
        %1696 = vmatpush1.bf16.msra.mxu0 0
        %1697 = vmatprep.mubr.bf16.mxu0 0
        %1698 = vmatmul.mubr.bf16.gmra.mrb[0].mxu0 %v491
        %v1699 = vpop.f32.mrb[0].mxu0
        %v1700 = vadd.f32 0.0, %v1699
        %v1701 = vpop.f32.mrb[0].mxu0
        %v1702 = vpop.f32.mrb[0].mxu0
        %v1703 = vadd.f32 0.0, %v1702
        %v1704 = vpop.f32.mrb[0].mxu0
        %1705 = vmatprep.mubr.bf16.mxu0 0
        %1706 = vmatmul.mubr.bf16.gmra.mrb[0].mxu0 %v492
        %v1707 = vpop.f32.mrb[0].mxu0
        %v1708 = vadd.f32 0.0, %v1707
        %v1709 = vpop.f32.mrb[0].mxu0
        %v1710 = vpop.f32.mrb[0].mxu0
        %v1711 = vadd.f32 0.0, %v1710
        %v1712 = vpop.f32.mrb[0].mxu0
        %1713 = vmatprep.mubr.bf16.mxu0 0
        %1714 = vmatmul.mubr.bf16.gmra.mrb[0].mxu0 %v493
        %v1715 = vpop.f32.mrb[0].mxu0
        %v1716 = vadd.f32 0.0, %v1715
        %v1717 = vpop.f32.mrb[0].mxu0
        %v1718 = vpop.f32.mrb[0].mxu0
        %v1719 = vadd.f32 0.0, %v1718
        %v1720 = vpop.f32.mrb[0].mxu0
        %1721 = vmatprep.mubr.bf16.mxu0 0
        %1722 = vmatmul.mubr.bf16.gmra.mrb[0].mxu0 %v494
        %v1723 = vpop.f32.mrb[0].mxu0
        %v1724 = vadd.f32 0.0, %v1723
        %v1725 = vpop.f32.mrb[0].mxu0
        %v1726 = vpop.f32.mrb[0].mxu0
        %v1727 = vadd.f32 0.0, %v1726
        %v1728 = vpop.f32.mrb[0].mxu0
        %1729 = vmatprep.mubr.bf16.mxu0 0
        %1730 = vmatmul.mubr.bf16.gmra.mrb[0].mxu0 %v495
        %v1731 = vpop.f32.mrb[0].mxu0
        %v1732 = vadd.f32 0.0, %v1731
        %v1733 = vpop.f32.mrb[0].mxu0
        %v1734 = vpop.f32.mrb[0].mxu0
        %v1735 = vadd.f32 0.0, %v1734
        %v1736 = vpop.f32.mrb[0].mxu0
        %1737 = vmatprep.mubr.bf16.mxu0 0
        %1738 = vmatmul.mubr.bf16.gmra.mrb[0].mxu0 %v496
        %v1739 = vpop.f32.mrb[0].mxu0
        %v1740 = vadd.f32 0.0, %v1739
        %v1741 = vpop.f32.mrb[0].mxu0
        %v1742 = vpop.f32.mrb[0].mxu0
        %v1743 = vadd.f32 0.0, %v1742
        %v1744 = vpop.f32.mrb[0].mxu0
        %1745 = vmatprep.mubr.bf16.mxu0 0
        %1746 = vmatmul.mubr.bf16.gmra.mrb[0].mxu0 %v497
        %v1747 = vpop.f32.mrb[0].mxu0
        %v1748 = vadd.f32 0.0, %v1747
        %v1749 = vpop.f32.mrb[0].mxu0
        %v1750 = vpop.f32.mrb[0].mxu0
        %v1751 = vadd.f32 0.0, %v1750
        %v1752 = vpop.f32.mrb[0].mxu0
        %1753 = vmatprep.mubr.bf16.mxu0 0
        %1754 = vmatmul.mubr.bf16.gmra.mrb[0].mxu0 %v498
        %v1755 = vpop.f32.mrb[0].mxu0
        %v1756 = vadd.f32 0.0, %v1755
        %v1757 = vpop.f32.mrb[0].mxu0
        %v1758 = vpop.f32.mrb[0].mxu0
        %v1759 = vadd.f32 0.0, %v1758
        %v1760 = vpop.f32.mrb[0].mxu0
        %1761 = vdwg.mxu0
        %1762 = vmatprep.subr.bf16.mxu0 0
        %1763 = vmatpush1.bf16.msra.mxu0 %v1657
        %1764 = vmatprep.subr.bf16.mxu0 0
        %1765 = vmatpush1.bf16.msra.mxu0 %v1658
        %1766 = vmatprep.subr.bf16.mxu0 0
        %1767 = vmatpush1.bf16.msra.mxu0 %v1659
        %1768 = vmatprep.subr.bf16.mxu0 0
        %1769 = vmatpush1.bf16.msra.mxu0 %v1660
        %1770 = vmatprep.subr.bf16.mxu0 0
        %1771 = vmatpush1.bf16.msra.mxu0 %v1661
        %1772 = vmatprep.subr.bf16.mxu0 0
        %1773 = vmatpush1.bf16.msra.mxu0 %v1662
        %1774 = vmatprep.subr.bf16.mxu0 0
        %1775 = vmatpush1.bf16.msra.mxu0 %v1663
        %1776 = vmatprep.subr.bf16.mxu0 0
        %1777 = vmatpush1.bf16.msra.mxu0 %v1664
        %1778 = vmatprep.subr.bf16.mxu0 0
        %1779 = vmatpush1.bf16.msra.mxu0 0
        %1780 = vmatprep.subr.bf16.mxu0 0
        %1781 = vmatpush1.bf16.msra.mxu0 0
        %1782 = vmatprep.subr.bf16.mxu0 0
        %1783 = vmatpush1.bf16.msra.mxu0 0
        %1784 = vmatprep.subr.bf16.mxu0 0
        %1785 = vmatpush1.bf16.msra.mxu0 0
        %1786 = vmatprep.subr.bf16.mxu0 0
        %1787 = vmatpush1.bf16.msra.mxu0 0
        %1788 = vmatprep.subr.bf16.mxu0 0
        %1789 = vmatpush1.bf16.msra.mxu0 0
        %1790 = vmatprep.subr.bf16.mxu0 0
        %1791 = vmatpush1.bf16.msra.mxu0 0
        %1792 = vmatprep.subr.bf16.mxu0 0
        %1793 = vmatpush1.bf16.msra.mxu0 0
        %1794 = vmatprep.mubr.bf16.mxu0 0
        %1795 = vmatmul.mubr.bf16.gmra.mrb[0].mxu0 %v766
        %v1796 = vpop.f32.mrb[0].mxu0
        %v1797 = vadd.f32 0.0, %v1796
        %v1798 = vpop.f32.mrb[0].mxu0
        %v1799 = vpop.f32.mrb[0].mxu0
        %v1800 = vadd.f32 0.0, %v1799
        %v1801 = vpop.f32.mrb[0].mxu0
        %1802 = vmatprep.mubr.bf16.mxu0 0
        %1803 = vmatmul.mubr.bf16.gmra.mrb[0].mxu0 %v767
        %v1804 = vpop.f32.mrb[0].mxu0
        %v1805 = vadd.f32 0.0, %v1804
        %v1806 = vpop.f32.mrb[0].mxu0
        %v1807 = vpop.f32.mrb[0].mxu0
        %v1808 = vadd.f32 0.0, %v1807
        %v1809 = vpop.f32.mrb[0].mxu0
        %1810 = vmatprep.mubr.bf16.mxu0 0
        %1811 = vmatmul.mubr.bf16.gmra.mrb[0].mxu0 %v768
        %v1812 = vpop.f32.mrb[0].mxu0
        %v1813 = vadd.f32 0.0, %v1812
        %v1814 = vpop.f32.mrb[0].mxu0
        %v1815 = vpop.f32.mrb[0].mxu0
        %v1816 = vadd.f32 0.0, %v1815
        %v1817 = vpop.f32.mrb[0].mxu0
        %1818 = vmatprep.mubr.bf16.mxu0 0
        %1819 = vmatmul.mubr.bf16.gmra.mrb[0].mxu0 %v769
        %v1820 = vpop.f32.mrb[0].mxu0
        %v1821 = vadd.f32 0.0, %v1820
        %v1822 = vpop.f32.mrb[0].mxu0
        %v1823 = vpop.f32.mrb[0].mxu0
        %v1824 = vadd.f32 0.0, %v1823
        %v1825 = vpop.f32.mrb[0].mxu0
        %1826 = vmatprep.mubr.bf16.mxu0 0
        %1827 = vmatmul.mubr.bf16.gmra.mrb[0].mxu0 %v770
        %v1828 = vpop.f32.mrb[0].mxu0
        %v1829 = vadd.f32 0.0, %v1828
        %v1830 = vpop.f32.mrb[0].mxu0
        %v1831 = vpop.f32.mrb[0].mxu0
        %v1832 = vadd.f32 0.0, %v1831
        %v1833 = vpop.f32.mrb[0].mxu0
        %1834 = vmatprep.mubr.bf16.mxu0 0
        %1835 = vmatmul.mubr.bf16.gmra.mrb[0].mxu0 %v771
        %v1836 = vpop.f32.mrb[0].mxu0
        %v1837 = vadd.f32 0.0, %v1836
        %v1838 = vpop.f32.mrb[0].mxu0
        %v1839 = vpop.f32.mrb[0].mxu0
        %v1840 = vadd.f32 0.0, %v1839
        %v1841 = vpop.f32.mrb[0].mxu0
        %1842 = vmatprep.mubr.bf16.mxu0 0
        %1843 = vmatmul.mubr.bf16.gmra.mrb[0].mxu0 %v772
        %v1844 = vpop.f32.mrb[0].mxu0
        %v1845 = vadd.f32 0.0, %v1844
        %v1846 = vpop.f32.mrb[0].mxu0
        %v1847 = vpop.f32.mrb[0].mxu0
        %v1848 = vadd.f32 0.0, %v1847
        %v1849 = vpop.f32.mrb[0].mxu0
        %1850 = vmatprep.mubr.bf16.mxu0 0
        %1851 = vmatmul.mubr.bf16.gmra.mrb[0].mxu0 %v773
        %v1852 = vpop.f32.mrb[0].mxu0
        %v1853 = vadd.f32 0.0, %v1852
        %v1854 = vpop.f32.mrb[0].mxu0
        %v1855 = vpop.f32.mrb[0].mxu0
        %v1856 = vadd.f32 0.0, %v1855
        %v1857 = vpop.f32.mrb[0].mxu0
        %1858 = vdwg.mxu0
        %1860 = vset.pattern.permute.xlu0 0
        %1861 = vperm.xlu0 %1860, %v1024
        %v1862 = vpop.permute.xlu0 %1861
        %1865 = vset.pattern.permute.xlu0 0
        %1866 = vperm.xlu0 %1865, %v1025
        %v1867 = vpop.permute.xlu0 %1866
        %1870 = vset.pattern.permute.xlu0 0
        %1871 = vperm.xlu0 %1870, %v1026
        %v1872 = vpop.permute.xlu0 %1871
        %1875 = vset.pattern.permute.xlu0 0
        %1876 = vperm.xlu0 %1875, %v1027
        %v1877 = vpop.permute.xlu0 %1876
        %1880 = vset.pattern.permute.xlu0 0
        %1881 = vperm.xlu0 %1880, %v1028
        %v1882 = vpop.permute.xlu0 %1881
        %1885 = vset.pattern.permute.xlu0 0
        %1886 = vperm.xlu0 %1885, %v1029
        %v1887 = vpop.permute.xlu0 %1886
        %1890 = vset.pattern.permute.xlu0 0
        %1891 = vperm.xlu0 %1890, %v1030
        %v1892 = vpop.permute.xlu0 %1891
        %1895 = vset.pattern.permute.xlu0 0
        %1896 = vperm.xlu0 %1895, %v1031
        %v1897 = vpop.permute.xlu0 %1896
        %1900 = vset.pattern.permute.xlu0 0
        %1901 = vperm.xlu0 %1900, %v1032
        %v1902 = vpop.permute.xlu0 %1901
        %1905 = vset.pattern.permute.xlu0 0
        %1906 = vperm.xlu0 %1905, %v1033
        %v1907 = vpop.permute.xlu0 %1906
        %1910 = vset.pattern.permute.xlu0 0
        %1911 = vperm.xlu0 %1910, %v1034
        %v1912 = vpop.permute.xlu0 %1911
        %1915 = vset.pattern.permute.xlu0 0
        %1916 = vperm.xlu0 %1915, %v1035
        %v1917 = vpop.permute.xlu0 %1916
        %1920 = vset.pattern.permute.xlu0 0
        %1921 = vperm.xlu0 %1920, %v1036
        %v1922 = vpop.permute.xlu0 %1921
        %1925 = vset.pattern.permute.xlu0 0
        %1926 = vperm.xlu0 %1925, %v1037
        %v1927 = vpop.permute.xlu0 %1926
        %1930 = vset.pattern.permute.xlu0 0
        %1931 = vperm.xlu0 %1930, %v1038
        %v1932 = vpop.permute.xlu0 %1931
        %1935 = vset.pattern.permute.xlu0 0
        %1936 = vperm.xlu0 %1935, %v1039
        %v1937 = vpop.permute.xlu0 %1936
        %1940 = vset.pattern.permute.xlu0 0
        %1941 = vperm.xlu0 %1940, %v1040
        %v1942 = vpop.permute.xlu0 %1941
        %1945 = vset.pattern.permute.xlu0 0
        %1946 = vperm.xlu0 %1945, %v1041
        %v1947 = vpop.permute.xlu0 %1946
        %1950 = vset.pattern.permute.xlu0 0
        %1951 = vperm.xlu0 %1950, %v1042
        %v1952 = vpop.permute.xlu0 %1951
        %1955 = vset.pattern.permute.xlu0 0
        %1956 = vperm.xlu0 %1955, %v1043
        %v1957 = vpop.permute.xlu0 %1956
        %1960 = vset.pattern.permute.xlu0 0
        %1961 = vperm.xlu0 %1960, %v1044
        %v1962 = vpop.permute.xlu0 %1961
        %1965 = vset.pattern.permute.xlu0 0
        %1966 = vperm.xlu0 %1965, %v1045
        %v1967 = vpop.permute.xlu0 %1966
        %1970 = vset.pattern.permute.xlu0 0
        %1971 = vperm.xlu0 %1970, %v1046
        %v1972 = vpop.permute.xlu0 %1971
        %1975 = vset.pattern.permute.xlu0 0
        %1976 = vperm.xlu0 %1975, %v1047
        %v1977 = vpop.permute.xlu0 %1976
        %1980 = vset.pattern.permute.xlu0 0
        %1981 = vperm.xlu0 %1980, %v1048
        %v1982 = vpop.permute.xlu0 %1981
        %1985 = vset.pattern.permute.xlu0 0
        %1986 = vperm.xlu0 %1985, %v1049
        %v1987 = vpop.permute.xlu0 %1986
        %1990 = vset.pattern.permute.xlu0 0
        %1991 = vperm.xlu0 %1990, %v1050
        %v1992 = vpop.permute.xlu0 %1991
        %1995 = vset.pattern.permute.xlu0 0
        %1996 = vperm.xlu0 %1995, %v1051
        %v1997 = vpop.permute.xlu0 %1996
        %2000 = vset.pattern.permute.xlu0 0
        %2001 = vperm.xlu0 %2000, %v1052
        %v2002 = vpop.permute.xlu0 %2001
        %2005 = vset.pattern.permute.xlu0 0
        %2006 = vperm.xlu0 %2005, %v1053
        %v2007 = vpop.permute.xlu0 %2006
        %2010 = vset.pattern.permute.xlu0 0
        %2011 = vperm.xlu0 %2010, %v1054
        %v2012 = vpop.permute.xlu0 %2011
        %2015 = vset.pattern.permute.xlu0 0
        %2016 = vperm.xlu0 %2015, %v1055
        %v2017 = vpop.permute.xlu0 %2016
        %v2019 = vmul.f32 %v1700, %v1862
        %v2020 = vmul.f32 %v1703, %v1867
        %v2021 = vmul.f32 %v1708, %v1872
        %v2022 = vmul.f32 %v1711, %v1877
        %v2023 = vmul.f32 %v1716, %v1882
        %v2024 = vmul.f32 %v1719, %v1887
        %v2025 = vmul.f32 %v1724, %v1892
        %v2026 = vmul.f32 %v1727, %v1897
        %v2027 = vmul.f32 %v1732, %v1902
        %v2028 = vmul.f32 %v1735, %v1907
        %v2029 = vmul.f32 %v1740, %v1912
        %v2030 = vmul.f32 %v1743, %v1917
        %v2031 = vmul.f32 %v1748, %v1922
        %v2032 = vmul.f32 %v1751, %v1927
        %v2033 = vmul.f32 %v1756, %v1932
        %v2034 = vmul.f32 %v1759, %v1937
        %v2035 = vmul.f32 %v1797, %v1942
        %v2036 = vmul.f32 %v1800, %v1947
        %v2037 = vmul.f32 %v1805, %v1952
        %v2038 = vmul.f32 %v1808, %v1957
        %v2039 = vmul.f32 %v1813, %v1962
        %v2040 = vmul.f32 %v1816, %v1967
        %v2041 = vmul.f32 %v1821, %v1972
        %v2042 = vmul.f32 %v1824, %v1977
        %v2043 = vmul.f32 %v1829, %v1982
        %v2044 = vmul.f32 %v1832, %v1987
        %v2045 = vmul.f32 %v1837, %v1992
        %v2046 = vmul.f32 %v1840, %v1997
        %v2047 = vmul.f32 %v1845, %v2002
        %v2048 = vmul.f32 %v1848, %v2007
        %v2049 = vmul.f32 %v1853, %v2012
        %v2050 = vmul.f32 %v1856, %v2017
        %v2051 = vpack.c.bf16 %v2020, %v2019
        %v2052 = vpack.c.bf16 %v2022, %v2021
        %v2053 = vpack.c.bf16 %v2024, %v2023
        %v2054 = vpack.c.bf16 %v2026, %v2025
        %v2055 = vpack.c.bf16 %v2028, %v2027
        %v2056 = vpack.c.bf16 %v2030, %v2029
        %v2057 = vpack.c.bf16 %v2032, %v2031
        %v2058 = vpack.c.bf16 %v2034, %v2033
        %v2059 = vpack.c.bf16 %v2036, %v2035
        %v2060 = vpack.c.bf16 %v2038, %v2037
        %v2061 = vpack.c.bf16 %v2040, %v2039
        %v2062 = vpack.c.bf16 %v2042, %v2041
        %v2063 = vpack.c.bf16 %v2044, %v2043
        %v2064 = vpack.c.bf16 %v2046, %v2045
        %v2065 = vpack.c.bf16 %v2048, %v2047
        %v2066 = vpack.c.bf16 %v2050, %v2049
        %v2067 = vld [vmem:[%s4] sm:$0xf]
        %v2068 = vld [vmem:[%s4 + $0x4] sm:$0xf]
        %v2069 = vld [vmem:[%s4 + $0x8] sm:$0xf]
        %v2070 = vld [vmem:[%s4 + $0xc] sm:$0xf]
        %v2071 = vld [vmem:[%s5] sm:$0x1]
        %v2073 = vlaneseq
        %v2074 = vshrl.u32 %v2073, 7
        %v2075 = vsub.s32 0, %v2074
        %v2076 = vrot.slane %v2071, %v2075
        %v2082 = vunpack.c.l.b16 %v2067
        %v2083 = vunpack.c.l.b16 %v2068
        %v2084 = vunpack.c.l.b16 %v2069
        %v2085 = vunpack.c.l.b16 %v2070
        %v2086 = vpack.c.b16 %v2083, %v2082
        %v2087 = vpack.c.b16 %v2085, %v2084
        %vm2090 = vcmask 261120
        %v2092 = vsel %vm2090, %v2051, 0
        %v2095 = vsel %vm2090, %v2052, 0
        %v2098 = vsel %vm2090, %v2053, 0
        %v2101 = vsel %vm2090, %v2054, 0
        %v2104 = vsel %vm2090, %v2055, 0
        %v2107 = vsel %vm2090, %v2056, 0
        %v2110 = vsel %vm2090, %v2057, 0
        %v2113 = vsel %vm2090, %v2058, 0
        %v2116 = vsel %vm2090, %v2059, 0
        %v2119 = vsel %vm2090, %v2060, 0
        %v2122 = vsel %vm2090, %v2061, 0
        %v2125 = vsel %vm2090, %v2062, 0
        %v2128 = vsel %vm2090, %v2063, 0
        %v2131 = vsel %vm2090, %v2064, 0
        %v2134 = vsel %vm2090, %v2065, 0
        %v2137 = vsel %vm2090, %v2066, 0
        %2139 = vmatprep.subr.bf16.mxu0 0
        %2140 = vmatpush1.bf16.msra.mxu0 %v2086
        %2141 = vmatprep.subr.bf16.mxu0 0
        %2142 = vmatpush1.bf16.msra.mxu0 %v2087
        %2143 = vmatprep.subr.bf16.mxu0 0
        %2144 = vmatpush1.bf16.msra.mxu0 0
        %2145 = vmatprep.subr.bf16.mxu0 0
        %2146 = vmatpush1.bf16.msra.mxu0 0
        %2147 = vmatprep.subr.bf16.mxu0 0
        %2148 = vmatpush1.bf16.msra.mxu0 0
        %2149 = vmatprep.subr.bf16.mxu0 0
        %2150 = vmatpush1.bf16.msra.mxu0 0
        %2151 = vmatprep.subr.bf16.mxu0 0
        %2152 = vmatpush1.bf16.msra.mxu0 0
        %2153 = vmatprep.subr.bf16.mxu0 0
        %2154 = vmatpush1.bf16.msra.mxu0 0
        %2155 = vmatprep.subr.bf16.mxu0 0
        %2156 = vmatpush1.bf16.msra.mxu0 0
        %2157 = vmatprep.subr.bf16.mxu0 0
        %2158 = vmatpush1.bf16.msra.mxu0 0
        %2159 = vmatprep.subr.bf16.mxu0 0
        %2160 = vmatpush1.bf16.msra.mxu0 0
        %2161 = vmatprep.subr.bf16.mxu0 0
        %2162 = vmatpush1.bf16.msra.mxu0 0
        %2163 = vmatprep.subr.bf16.mxu0 0
        %2164 = vmatpush1.bf16.msra.mxu0 0
        %2165 = vmatprep.subr.bf16.mxu0 0
        %2166 = vmatpush1.bf16.msra.mxu0 0
        %2167 = vmatprep.subr.bf16.mxu0 0
        %2168 = vmatpush1.bf16.msra.mxu0 0
        %2169 = vmatprep.subr.bf16.mxu0 0
        %2170 = vmatpush1.bf16.msra.mxu0 0
        %2171 = vmatprep.mubr.bf16.mxu0 0
        %2172 = vmatmul.mubr.bf16.gmra.mrb[0].mxu0 %v2092
        %v2173 = vpop.f32.mrb[0].mxu0
        %v2174 = vadd.f32 %v2076, %v2173
        %v2175 = vpop.f32.mrb[0].mxu0
        %v2176 = vpop.f32.mrb[0].mxu0
        %v2177 = vadd.f32 %v2076, %v2176
        %v2178 = vpop.f32.mrb[0].mxu0
        %2179 = vmatprep.mubr.bf16.mxu0 0
        %2180 = vmatmul.mubr.bf16.gmra.mrb[0].mxu0 %v2095
        %v2181 = vpop.f32.mrb[0].mxu0
        %v2182 = vadd.f32 %v2076, %v2181
        %v2183 = vpop.f32.mrb[0].mxu0
        %v2184 = vpop.f32.mrb[0].mxu0
        %v2185 = vadd.f32 %v2076, %v2184
        %v2186 = vpop.f32.mrb[0].mxu0
        %2187 = vmatprep.mubr.bf16.mxu0 0
        %2188 = vmatmul.mubr.bf16.gmra.mrb[0].mxu0 %v2098
        %v2189 = vpop.f32.mrb[0].mxu0
        %v2190 = vadd.f32 %v2076, %v2189
        %v2191 = vpop.f32.mrb[0].mxu0
        %v2192 = vpop.f32.mrb[0].mxu0
        %v2193 = vadd.f32 %v2076, %v2192
        %v2194 = vpop.f32.mrb[0].mxu0
        %2195 = vmatprep.mubr.bf16.mxu0 0
        %2196 = vmatmul.mubr.bf16.gmra.mrb[0].mxu0 %v2101
        %v2197 = vpop.f32.mrb[0].mxu0
        %v2198 = vadd.f32 %v2076, %v2197
        %v2199 = vpop.f32.mrb[0].mxu0
        %v2200 = vpop.f32.mrb[0].mxu0
        %v2201 = vadd.f32 %v2076, %v2200
        %v2202 = vpop.f32.mrb[0].mxu0
        %2203 = vmatprep.mubr.bf16.mxu0 0
        %2204 = vmatmul.mubr.bf16.gmra.mrb[0].mxu0 %v2104
        %v2205 = vpop.f32.mrb[0].mxu0
        %v2206 = vadd.f32 %v2076, %v2205
        %v2207 = vpop.f32.mrb[0].mxu0
        %v2208 = vpop.f32.mrb[0].mxu0
        %v2209 = vadd.f32 %v2076, %v2208
        %v2210 = vpop.f32.mrb[0].mxu0
        %2211 = vmatprep.mubr.bf16.mxu0 0
        %2212 = vmatmul.mubr.bf16.gmra.mrb[0].mxu0 %v2107
        %v2213 = vpop.f32.mrb[0].mxu0
        %v2214 = vadd.f32 %v2076, %v2213
        %v2215 = vpop.f32.mrb[0].mxu0
        %v2216 = vpop.f32.mrb[0].mxu0
        %v2217 = vadd.f32 %v2076, %v2216
        %v2218 = vpop.f32.mrb[0].mxu0
        %2219 = vmatprep.mubr.bf16.mxu0 0
        %2220 = vmatmul.mubr.bf16.gmra.mrb[0].mxu0 %v2110
        %v2221 = vpop.f32.mrb[0].mxu0
        %v2222 = vadd.f32 %v2076, %v2221
        %v2223 = vpop.f32.mrb[0].mxu0
        %v2224 = vpop.f32.mrb[0].mxu0
        %v2225 = vadd.f32 %v2076, %v2224
        %v2226 = vpop.f32.mrb[0].mxu0
        %2227 = vmatprep.mubr.bf16.mxu0 0
        %2228 = vmatmul.mubr.bf16.gmra.mrb[0].mxu0 %v2113
        %v2229 = vpop.f32.mrb[0].mxu0
        %v2230 = vadd.f32 %v2076, %v2229
        %v2231 = vpop.f32.mrb[0].mxu0
        %v2232 = vpop.f32.mrb[0].mxu0
        %v2233 = vadd.f32 %v2076, %v2232
        %v2234 = vpop.f32.mrb[0].mxu0
        %2235 = vmatprep.mubr.bf16.mxu0 0
        %2236 = vmatmul.mubr.bf16.gmra.mrb[0].mxu0 %v2116
        %v2237 = vpop.f32.mrb[0].mxu0
        %v2238 = vadd.f32 %v2076, %v2237
        %v2239 = vpop.f32.mrb[0].mxu0
        %v2240 = vpop.f32.mrb[0].mxu0
        %v2241 = vadd.f32 %v2076, %v2240
        %v2242 = vpop.f32.mrb[0].mxu0
        %2243 = vmatprep.mubr.bf16.mxu0 0
        %2244 = vmatmul.mubr.bf16.gmra.mrb[0].mxu0 %v2119
        %v2245 = vpop.f32.mrb[0].mxu0
        %v2246 = vadd.f32 %v2076, %v2245
        %v2247 = vpop.f32.mrb[0].mxu0
        %v2248 = vpop.f32.mrb[0].mxu0
        %v2249 = vadd.f32 %v2076, %v2248
        %v2250 = vpop.f32.mrb[0].mxu0
        %2251 = vmatprep.mubr.bf16.mxu0 0
        %2252 = vmatmul.mubr.bf16.gmra.mrb[0].mxu0 %v2122
        %v2253 = vpop.f32.mrb[0].mxu0
        %v2254 = vadd.f32 %v2076, %v2253
        %v2255 = vpop.f32.mrb[0].mxu0
        %v2256 = vpop.f32.mrb[0].mxu0
        %v2257 = vadd.f32 %v2076, %v2256
        %v2258 = vpop.f32.mrb[0].mxu0
        %2259 = vmatprep.mubr.bf16.mxu0 0
        %2260 = vmatmul.mubr.bf16.gmra.mrb[0].mxu0 %v2125
        %v2261 = vpop.f32.mrb[0].mxu0
        %v2262 = vadd.f32 %v2076, %v2261
        %v2263 = vpop.f32.mrb[0].mxu0
        %v2264 = vpop.f32.mrb[0].mxu0
        %v2265 = vadd.f32 %v2076, %v2264
        %v2266 = vpop.f32.mrb[0].mxu0
        %2267 = vmatprep.mubr.bf16.mxu0 0
        %2268 = vmatmul.mubr.bf16.gmra.mrb[0].mxu0 %v2128
        %v2269 = vpop.f32.mrb[0].mxu0
        %v2270 = vadd.f32 %v2076, %v2269
        %v2271 = vpop.f32.mrb[0].mxu0
        %v2272 = vpop.f32.mrb[0].mxu0
        %v2273 = vadd.f32 %v2076, %v2272
        %v2274 = vpop.f32.mrb[0].mxu0
        %2275 = vmatprep.mubr.bf16.mxu0 0
        %2276 = vmatmul.mubr.bf16.gmra.mrb[0].mxu0 %v2131
        %v2277 = vpop.f32.mrb[0].mxu0
        %v2278 = vadd.f32 %v2076, %v2277
        %v2279 = vpop.f32.mrb[0].mxu0
        %v2280 = vpop.f32.mrb[0].mxu0
        %v2281 = vadd.f32 %v2076, %v2280
        %v2282 = vpop.f32.mrb[0].mxu0
        %2283 = vmatprep.mubr.bf16.mxu0 0
        %2284 = vmatmul.mubr.bf16.gmra.mrb[0].mxu0 %v2134
        %v2285 = vpop.f32.mrb[0].mxu0
        %v2286 = vadd.f32 %v2076, %v2285
        %v2287 = vpop.f32.mrb[0].mxu0
        %v2288 = vpop.f32.mrb[0].mxu0
        %v2289 = vadd.f32 %v2076, %v2288
        %v2290 = vpop.f32.mrb[0].mxu0
        %2291 = vmatprep.mubr.bf16.mxu0 0
        %2292 = vmatmul.mubr.bf16.gmra.mrb[0].mxu0 %v2137
        %v2293 = vpop.f32.mrb[0].mxu0
        %v2294 = vadd.f32 %v2076, %v2293
        %v2295 = vpop.f32.mrb[0].mxu0
        %v2296 = vpop.f32.mrb[0].mxu0
        %v2297 = vadd.f32 %v2076, %v2296
        %v2298 = vpop.f32.mrb[0].mxu0
        %2299 = vdwg.mxu0
        %v2300 = vmax.f32 %v2174, 0.0
        %v2301 = vmax.f32 %v2177, 0.0
        %v2302 = vmax.f32 %v2182, 0.0
        %v2303 = vmax.f32 %v2185, 0.0
        %v2304 = vmax.f32 %v2190, 0.0
        %v2305 = vmax.f32 %v2193, 0.0
        %v2306 = vmax.f32 %v2198, 0.0
        %v2307 = vmax.f32 %v2201, 0.0
        %v2308 = vmax.f32 %v2206, 0.0
        %v2309 = vmax.f32 %v2209, 0.0
        %v2310 = vmax.f32 %v2214, 0.0
        %v2311 = vmax.f32 %v2217, 0.0
        %v2312 = vmax.f32 %v2222, 0.0
        %v2313 = vmax.f32 %v2225, 0.0
        %v2314 = vmax.f32 %v2230, 0.0
        %v2315 = vmax.f32 %v2233, 0.0
        %v2316 = vmax.f32 %v2238, 0.0
        %v2317 = vmax.f32 %v2241, 0.0
        %v2318 = vmax.f32 %v2246, 0.0
        %v2319 = vmax.f32 %v2249, 0.0
        %v2320 = vmax.f32 %v2254, 0.0
        %v2321 = vmax.f32 %v2257, 0.0
        %v2322 = vmax.f32 %v2262, 0.0
        %v2323 = vmax.f32 %v2265, 0.0
        %v2324 = vmax.f32 %v2270, 0.0
        %v2325 = vmax.f32 %v2273, 0.0
        %v2326 = vmax.f32 %v2278, 0.0
        %v2327 = vmax.f32 %v2281, 0.0
        %v2328 = vmax.f32 %v2286, 0.0
        %v2329 = vmax.f32 %v2289, 0.0
        %v2330 = vmax.f32 %v2294, 0.0
        %v2331 = vmax.f32 %v2297, 0.0
        %v2332 = vpack.c.bf16 %v2301, %v2300
        %v2333 = vpack.c.bf16 %v2303, %v2302
        %v2334 = vpack.c.bf16 %v2305, %v2304
        %v2335 = vpack.c.bf16 %v2307, %v2306
        %v2336 = vpack.c.bf16 %v2309, %v2308
        %v2337 = vpack.c.bf16 %v2311, %v2310
        %v2338 = vpack.c.bf16 %v2313, %v2312
        %v2339 = vpack.c.bf16 %v2315, %v2314
        %v2340 = vpack.c.bf16 %v2317, %v2316
        %v2341 = vpack.c.bf16 %v2319, %v2318
        %v2342 = vpack.c.bf16 %v2321, %v2320
        %v2343 = vpack.c.bf16 %v2323, %v2322
        %v2344 = vpack.c.bf16 %v2325, %v2324
        %v2345 = vpack.c.bf16 %v2327, %v2326
        %v2346 = vpack.c.bf16 %v2329, %v2328
        %v2347 = vpack.c.bf16 %v2331, %v2330
        %v2348 = vld [vmem:[%s6] sm:$0xf]
        %v2349 = vld [vmem:[%s6 + $0x4] sm:$0xf]
        %v2350 = vld [vmem:[%s6 + $0x8] sm:$0xf]
        %v2351 = vld [vmem:[%s6 + $0xc] sm:$0xf]
        %v2352 = vmul.f32 %v2300, %v1460
        %v2353 = vmul.f32 %v2301, %v1465
        %v2354 = vmul.f32 %v2302, %v1470
        %v2355 = vmul.f32 %v2303, %v1475
        %v2356 = vmul.f32 %v2304, %v1480
        %v2357 = vmul.f32 %v2305, %v1485
        %v2358 = vmul.f32 %v2306, %v1490
        %v2359 = vmul.f32 %v2307, %v1495
        %v2360 = vmul.f32 %v2308, %v1500
        %v2361 = vmul.f32 %v2309, %v1505
        %v2362 = vmul.f32 %v2310, %v1510
        %v2363 = vmul.f32 %v2311, %v1515
        %v2364 = vmul.f32 %v2312, %v1520
        %v2365 = vmul.f32 %v2313, %v1525
        %v2366 = vmul.f32 %v2314, %v1530
        %v2367 = vmul.f32 %v2315, %v1535
        %v2368 = vmul.f32 %v2316, %v1540
        %v2369 = vmul.f32 %v2317, %v1545
        %v2370 = vmul.f32 %v2318, %v1550
        %v2371 = vmul.f32 %v2319, %v1555
        %v2372 = vmul.f32 %v2320, %v1560
        %v2373 = vmul.f32 %v2321, %v1565
        %v2374 = vmul.f32 %v2322, %v1570
        %v2375 = vmul.f32 %v2323, %v1575
        %v2376 = vmul.f32 %v2324, %v1580
        %v2377 = vmul.f32 %v2325, %v1585
        %v2378 = vmul.f32 %v2326, %v1590
        %v2379 = vmul.f32 %v2327, %v1595
        %v2380 = vmul.f32 %v2328, %v1600
        %v2381 = vmul.f32 %v2329, %v1605
        %v2382 = vmul.f32 %v2330, %v1610
        %v2383 = vmul.f32 %v2331, %v1615
        %v2384 = vpack.c.bf16 %v2353, %v2352
        %v2385 = vpack.c.bf16 %v2355, %v2354
        %v2386 = vpack.c.bf16 %v2357, %v2356
        %v2387 = vpack.c.bf16 %v2359, %v2358
        %v2388 = vpack.c.bf16 %v2361, %v2360
        %v2389 = vpack.c.bf16 %v2363, %v2362
        %v2390 = vpack.c.bf16 %v2365, %v2364
        %v2391 = vpack.c.bf16 %v2367, %v2366
        %v2392 = vpack.c.bf16 %v2369, %v2368
        %v2393 = vpack.c.bf16 %v2371, %v2370
        %v2394 = vpack.c.bf16 %v2373, %v2372
        %v2395 = vpack.c.bf16 %v2375, %v2374
        %v2396 = vpack.c.bf16 %v2377, %v2376
        %v2397 = vpack.c.bf16 %v2379, %v2378
        %v2398 = vpack.c.bf16 %v2381, %v2380
        %v2399 = vpack.c.bf16 %v2383, %v2382
        %2400 = vmatprep.subr.bf16.mxu0 0
        %2401 = vmatpush1.bf16.msra.mxu0 %v2384
        %2402 = vmatprep.subr.bf16.mxu0 0
        %2403 = vmatpush1.bf16.msra.mxu0 %v2385
        %2404 = vmatprep.subr.bf16.mxu0 0
        %2405 = vmatpush1.bf16.msra.mxu0 %v2386
        %2406 = vmatprep.subr.bf16.mxu0 0
        %2407 = vmatpush1.bf16.msra.mxu0 %v2387
        %2408 = vmatprep.subr.bf16.mxu0 0
        %2409 = vmatpush1.bf16.msra.mxu0 %v2388
        %2410 = vmatprep.subr.bf16.mxu0 0
        %2411 = vmatpush1.bf16.msra.mxu0 %v2389
        %2412 = vmatprep.subr.bf16.mxu0 0
        %2413 = vmatpush1.bf16.msra.mxu0 %v2390
        %2414 = vmatprep.subr.bf16.mxu0 0
        %2415 = vmatpush1.bf16.msra.mxu0 %v2391
        %2416 = vmatprep.subr.bf16.mxu0 0
        %2417 = vmatpush1.bf16.msra.mxu0 0
        %2418 = vmatprep.subr.bf16.mxu0 0
        %2419 = vmatpush1.bf16.msra.mxu0 0
        %2420 = vmatprep.subr.bf16.mxu0 0
        %2421 = vmatpush1.bf16.msra.mxu0 0
        %2422 = vmatprep.subr.bf16.mxu0 0
        %2423 = vmatpush1.bf16.msra.mxu0 0
        %2424 = vmatprep.subr.bf16.mxu0 0
        %2425 = vmatpush1.bf16.msra.mxu0 0
        %2426 = vmatprep.subr.bf16.mxu0 0
        %2427 = vmatpush1.bf16.msra.mxu0 0
        %2428 = vmatprep.subr.bf16.mxu0 0
        %2429 = vmatpush1.bf16.msra.mxu0 0
        %2430 = vmatprep.subr.bf16.mxu0 0
        %2431 = vmatpush1.bf16.msra.mxu0 0
        %2432 = vmatprep.mubr.bf16.mxu0 0
        %2433 = vmatmul.mubr.bf16.gmra.mrb[0].mxu0 %v491
        %v2434 = vpop.f32.mrb[0].mxu0
        %v2435 = vadd.f32 0.0, %v2434
        %v2436 = vpop.f32.mrb[0].mxu0
        %v2437 = vpop.f32.mrb[0].mxu0
        %v2438 = vadd.f32 0.0, %v2437
        %v2439 = vpop.f32.mrb[0].mxu0
        %2440 = vmatprep.mubr.bf16.mxu0 0
        %2441 = vmatmul.mubr.bf16.gmra.mrb[0].mxu0 %v492
        %v2442 = vpop.f32.mrb[0].mxu0
        %v2443 = vadd.f32 0.0, %v2442
        %v2444 = vpop.f32.mrb[0].mxu0
        %v2445 = vpop.f32.mrb[0].mxu0
        %v2446 = vadd.f32 0.0, %v2445
        %v2447 = vpop.f32.mrb[0].mxu0
        %2448 = vmatprep.mubr.bf16.mxu0 0
        %2449 = vmatmul.mubr.bf16.gmra.mrb[0].mxu0 %v493
        %v2450 = vpop.f32.mrb[0].mxu0
        %v2451 = vadd.f32 0.0, %v2450
        %v2452 = vpop.f32.mrb[0].mxu0
        %v2453 = vpop.f32.mrb[0].mxu0
        %v2454 = vadd.f32 0.0, %v2453
        %v2455 = vpop.f32.mrb[0].mxu0
        %2456 = vmatprep.mubr.bf16.mxu0 0
        %2457 = vmatmul.mubr.bf16.gmra.mrb[0].mxu0 %v494
        %v2458 = vpop.f32.mrb[0].mxu0
        %v2459 = vadd.f32 0.0, %v2458
        %v2460 = vpop.f32.mrb[0].mxu0
        %v2461 = vpop.f32.mrb[0].mxu0
        %v2462 = vadd.f32 0.0, %v2461
        %v2463 = vpop.f32.mrb[0].mxu0
        %2464 = vmatprep.mubr.bf16.mxu0 0
        %2465 = vmatmul.mubr.bf16.gmra.mrb[0].mxu0 %v495
        %v2466 = vpop.f32.mrb[0].mxu0
        %v2467 = vadd.f32 0.0, %v2466
        %v2468 = vpop.f32.mrb[0].mxu0
        %v2469 = vpop.f32.mrb[0].mxu0
        %v2470 = vadd.f32 0.0, %v2469
        %v2471 = vpop.f32.mrb[0].mxu0
        %2472 = vmatprep.mubr.bf16.mxu0 0
        %2473 = vmatmul.mubr.bf16.gmra.mrb[0].mxu0 %v496
        %v2474 = vpop.f32.mrb[0].mxu0
        %v2475 = vadd.f32 0.0, %v2474
        %v2476 = vpop.f32.mrb[0].mxu0
        %v2477 = vpop.f32.mrb[0].mxu0
        %v2478 = vadd.f32 0.0, %v2477
        %v2479 = vpop.f32.mrb[0].mxu0
        %2480 = vmatprep.mubr.bf16.mxu0 0
        %2481 = vmatmul.mubr.bf16.gmra.mrb[0].mxu0 %v497
        %v2482 = vpop.f32.mrb[0].mxu0
        %v2483 = vadd.f32 0.0, %v2482
        %v2484 = vpop.f32.mrb[0].mxu0
        %v2485 = vpop.f32.mrb[0].mxu0
        %v2486 = vadd.f32 0.0, %v2485
        %v2487 = vpop.f32.mrb[0].mxu0
        %2488 = vmatprep.mubr.bf16.mxu0 0
        %2489 = vmatmul.mubr.bf16.gmra.mrb[0].mxu0 %v498
        %v2490 = vpop.f32.mrb[0].mxu0
        %v2491 = vadd.f32 0.0, %v2490
        %v2492 = vpop.f32.mrb[0].mxu0
        %v2493 = vpop.f32.mrb[0].mxu0
        %v2494 = vadd.f32 0.0, %v2493
        %v2495 = vpop.f32.mrb[0].mxu0
        %2496 = vdwg.mxu0
        %2497 = vmatprep.subr.bf16.mxu0 0
        %2498 = vmatpush1.bf16.msra.mxu0 %v2392
        %2499 = vmatprep.subr.bf16.mxu0 0
        %2500 = vmatpush1.bf16.msra.mxu0 %v2393
        %2501 = vmatprep.subr.bf16.mxu0 0
        %2502 = vmatpush1.bf16.msra.mxu0 %v2394
        %2503 = vmatprep.subr.bf16.mxu0 0
        %2504 = vmatpush1.bf16.msra.mxu0 %v2395
        %2505 = vmatprep.subr.bf16.mxu0 0
        %2506 = vmatpush1.bf16.msra.mxu0 %v2396
        %2507 = vmatprep.subr.bf16.mxu0 0
        %2508 = vmatpush1.bf16.msra.mxu0 %v2397
        %2509 = vmatprep.subr.bf16.mxu0 0
        %2510 = vmatpush1.bf16.msra.mxu0 %v2398
        %2511 = vmatprep.subr.bf16.mxu0 0
        %2512 = vmatpush1.bf16.msra.mxu0 %v2399
        %2513 = vmatprep.subr.bf16.mxu0 0
        %2514 = vmatpush1.bf16.msra.mxu0 0
        %2515 = vmatprep.subr.bf16.mxu0 0
        %2516 = vmatpush1.bf16.msra.mxu0 0
        %2517 = vmatprep.subr.bf16.mxu0 0
        %2518 = vmatpush1.bf16.msra.mxu0 0
        %2519 = vmatprep.subr.bf16.mxu0 0
        %2520 = vmatpush1.bf16.msra.mxu0 0
        %2521 = vmatprep.subr.bf16.mxu0 0
        %2522 = vmatpush1.bf16.msra.mxu0 0
        %2523 = vmatprep.subr.bf16.mxu0 0
        %2524 = vmatpush1.bf16.msra.mxu0 0
        %2525 = vmatprep.subr.bf16.mxu0 0
        %2526 = vmatpush1.bf16.msra.mxu0 0
        %2527 = vmatprep.subr.bf16.mxu0 0
        %2528 = vmatpush1.bf16.msra.mxu0 0
        %2529 = vmatprep.mubr.bf16.mxu0 0
        %2530 = vmatmul.mubr.bf16.gmra.mrb[0].mxu0 %v766
        %v2531 = vpop.f32.mrb[0].mxu0
        %v2532 = vadd.f32 0.0, %v2531
        %v2533 = vpop.f32.mrb[0].mxu0
        %v2534 = vpop.f32.mrb[0].mxu0
        %v2535 = vadd.f32 0.0, %v2534
        %v2536 = vpop.f32.mrb[0].mxu0
        %2537 = vmatprep.mubr.bf16.mxu0 0
        %2538 = vmatmul.mubr.bf16.gmra.mrb[0].mxu0 %v767
        %v2539 = vpop.f32.mrb[0].mxu0
        %v2540 = vadd.f32 0.0, %v2539
        %v2541 = vpop.f32.mrb[0].mxu0
        %v2542 = vpop.f32.mrb[0].mxu0
        %v2543 = vadd.f32 0.0, %v2542
        %v2544 = vpop.f32.mrb[0].mxu0
        %2545 = vmatprep.mubr.bf16.mxu0 0
        %2546 = vmatmul.mubr.bf16.gmra.mrb[0].mxu0 %v768
        %v2547 = vpop.f32.mrb[0].mxu0
        %v2548 = vadd.f32 0.0, %v2547
        %v2549 = vpop.f32.mrb[0].mxu0
        %v2550 = vpop.f32.mrb[0].mxu0
        %v2551 = vadd.f32 0.0, %v2550
        %v2552 = vpop.f32.mrb[0].mxu0
        %2553 = vmatprep.mubr.bf16.mxu0 0
        %2554 = vmatmul.mubr.bf16.gmra.mrb[0].mxu0 %v769
        %v2555 = vpop.f32.mrb[0].mxu0
        %v2556 = vadd.f32 0.0, %v2555
        %v2557 = vpop.f32.mrb[0].mxu0
        %v2558 = vpop.f32.mrb[0].mxu0
        %v2559 = vadd.f32 0.0, %v2558
        %v2560 = vpop.f32.mrb[0].mxu0
        %2561 = vmatprep.mubr.bf16.mxu0 0
        %2562 = vmatmul.mubr.bf16.gmra.mrb[0].mxu0 %v770
        %v2563 = vpop.f32.mrb[0].mxu0
        %v2564 = vadd.f32 0.0, %v2563
        %v2565 = vpop.f32.mrb[0].mxu0
        %v2566 = vpop.f32.mrb[0].mxu0
        %v2567 = vadd.f32 0.0, %v2566
        %v2568 = vpop.f32.mrb[0].mxu0
        %2569 = vmatprep.mubr.bf16.mxu0 0
        %2570 = vmatmul.mubr.bf16.gmra.mrb[0].mxu0 %v771
        %v2571 = vpop.f32.mrb[0].mxu0
        %v2572 = vadd.f32 0.0, %v2571
        %v2573 = vpop.f32.mrb[0].mxu0
        %v2574 = vpop.f32.mrb[0].mxu0
        %v2575 = vadd.f32 0.0, %v2574
        %v2576 = vpop.f32.mrb[0].mxu0
        %2577 = vmatprep.mubr.bf16.mxu0 0
        %2578 = vmatmul.mubr.bf16.gmra.mrb[0].mxu0 %v772
        %v2579 = vpop.f32.mrb[0].mxu0
        %v2580 = vadd.f32 0.0, %v2579
        %v2581 = vpop.f32.mrb[0].mxu0
        %v2582 = vpop.f32.mrb[0].mxu0
        %v2583 = vadd.f32 0.0, %v2582
        %v2584 = vpop.f32.mrb[0].mxu0
        %2585 = vmatprep.mubr.bf16.mxu0 0
        %2586 = vmatmul.mubr.bf16.gmra.mrb[0].mxu0 %v773
        %v2587 = vpop.f32.mrb[0].mxu0
        %v2588 = vadd.f32 0.0, %v2587
        %v2589 = vpop.f32.mrb[0].mxu0
        %v2590 = vpop.f32.mrb[0].mxu0
        %v2591 = vadd.f32 0.0, %v2590
        %v2592 = vpop.f32.mrb[0].mxu0
        %2593 = vdwg.mxu0
        %v2594 = vmul.f32 %v2435, %v1862
        %v2595 = vmul.f32 %v2438, %v1867
        %v2596 = vmul.f32 %v2443, %v1872
        %v2597 = vmul.f32 %v2446, %v1877
        %v2598 = vmul.f32 %v2451, %v1882
        %v2599 = vmul.f32 %v2454, %v1887
        %v2600 = vmul.f32 %v2459, %v1892
        %v2601 = vmul.f32 %v2462, %v1897
        %v2602 = vmul.f32 %v2467, %v1902
        %v2603 = vmul.f32 %v2470, %v1907
        %v2604 = vmul.f32 %v2475, %v1912
        %v2605 = vmul.f32 %v2478, %v1917
        %v2606 = vmul.f32 %v2483, %v1922
        %v2607 = vmul.f32 %v2486, %v1927
        %v2608 = vmul.f32 %v2491, %v1932
        %v2609 = vmul.f32 %v2494, %v1937
        %v2610 = vmul.f32 %v2532, %v1942
        %v2611 = vmul.f32 %v2535, %v1947
        %v2612 = vmul.f32 %v2540, %v1952
        %v2613 = vmul.f32 %v2543, %v1957
        %v2614 = vmul.f32 %v2548, %v1962
        %v2615 = vmul.f32 %v2551, %v1967
        %v2616 = vmul.f32 %v2556, %v1972
        %v2617 = vmul.f32 %v2559, %v1977
        %v2618 = vmul.f32 %v2564, %v1982
        %v2619 = vmul.f32 %v2567, %v1987
        %v2620 = vmul.f32 %v2572, %v1992
        %v2621 = vmul.f32 %v2575, %v1997
        %v2622 = vmul.f32 %v2580, %v2002
        %v2623 = vmul.f32 %v2583, %v2007
        %v2624 = vmul.f32 %v2588, %v2012
        %v2625 = vmul.f32 %v2591, %v2017
        %v2626 = vpack.c.bf16 %v2595, %v2594
        %v2627 = vpack.c.bf16 %v2597, %v2596
        %v2628 = vpack.c.bf16 %v2599, %v2598
        %v2629 = vpack.c.bf16 %v2601, %v2600
        %v2630 = vpack.c.bf16 %v2603, %v2602
        %v2631 = vpack.c.bf16 %v2605, %v2604
        %v2632 = vpack.c.bf16 %v2607, %v2606
        %v2633 = vpack.c.bf16 %v2609, %v2608
        %v2634 = vpack.c.bf16 %v2611, %v2610
        %v2635 = vpack.c.bf16 %v2613, %v2612
        %v2636 = vpack.c.bf16 %v2615, %v2614
        %v2637 = vpack.c.bf16 %v2617, %v2616
        %v2638 = vpack.c.bf16 %v2619, %v2618
        %v2639 = vpack.c.bf16 %v2621, %v2620
        %v2640 = vpack.c.bf16 %v2623, %v2622
        %v2641 = vpack.c.bf16 %v2625, %v2624
        %s2642 = scalar_lea.vmem %s4, 16
        %v2643 = vld [vmem:[%s2642] sm:$0xf]
        %v2644 = vld [vmem:[%s2642 + $0x4] sm:$0xf]
        %v2645 = vld [vmem:[%s2642 + $0x8] sm:$0xf]
        %v2646 = vld [vmem:[%s2642 + $0xc] sm:$0xf]
        %s2647 = scalar_lea.vmem %s5, 1
        %v2648 = vld [vmem:[%s2647] sm:$0x1]
        %v2650 = vlaneseq
        %v2651 = vshrl.u32 %v2650, 7
        %v2652 = vsub.s32 0, %v2651
        %v2653 = vrot.slane %v2648, %v2652
        %v2659 = vunpack.c.l.b16 %v2643
        %v2660 = vunpack.c.l.b16 %v2644
        %v2661 = vunpack.c.l.b16 %v2645
        %v2662 = vunpack.c.l.b16 %v2646
        %v2663 = vpack.c.b16 %v2660, %v2659
        %v2664 = vpack.c.b16 %v2662, %v2661
        %v2668 = vsel %vm2090, %v2626, 0
        %v2671 = vsel %vm2090, %v2627, 0
        %v2674 = vsel %vm2090, %v2628, 0
        %v2677 = vsel %vm2090, %v2629, 0
        %v2680 = vsel %vm2090, %v2630, 0
        %v2683 = vsel %vm2090, %v2631, 0
        %v2686 = vsel %vm2090, %v2632, 0
        %v2689 = vsel %vm2090, %v2633, 0
        %v2692 = vsel %vm2090, %v2634, 0
        %v2695 = vsel %vm2090, %v2635, 0
        %v2698 = vsel %vm2090, %v2636, 0
        %v2701 = vsel %vm2090, %v2637, 0
        %v2704 = vsel %vm2090, %v2638, 0
        %v2707 = vsel %vm2090, %v2639, 0
        %v2710 = vsel %vm2090, %v2640, 0
        %v2713 = vsel %vm2090, %v2641, 0
        %2715 = vmatprep.subr.bf16.mxu0 0
        %2716 = vmatpush1.bf16.msra.mxu0 %v2663
        %2717 = vmatprep.subr.bf16.mxu0 0
        %2718 = vmatpush1.bf16.msra.mxu0 %v2664
        %2719 = vmatprep.subr.bf16.mxu0 0
        %2720 = vmatpush1.bf16.msra.mxu0 0
        %2721 = vmatprep.subr.bf16.mxu0 0
        %2722 = vmatpush1.bf16.msra.mxu0 0
        %2723 = vmatprep.subr.bf16.mxu0 0
        %2724 = vmatpush1.bf16.msra.mxu0 0
        %2725 = vmatprep.subr.bf16.mxu0 0
        %2726 = vmatpush1.bf16.msra.mxu0 0
        %2727 = vmatprep.subr.bf16.mxu0 0
        %2728 = vmatpush1.bf16.msra.mxu0 0
        %2729 = vmatprep.subr.bf16.mxu0 0
        %2730 = vmatpush1.bf16.msra.mxu0 0
        %2731 = vmatprep.subr.bf16.mxu0 0
        %2732 = vmatpush1.bf16.msra.mxu0 0
        %2733 = vmatprep.subr.bf16.mxu0 0
        %2734 = vmatpush1.bf16.msra.mxu0 0
        %2735 = vmatprep.subr.bf16.mxu0 0
        %2736 = vmatpush1.bf16.msra.mxu0 0
        %2737 = vmatprep.subr.bf16.mxu0 0
        %2738 = vmatpush1.bf16.msra.mxu0 0
        %2739 = vmatprep.subr.bf16.mxu0 0
        %2740 = vmatpush1.bf16.msra.mxu0 0
        %2741 = vmatprep.subr.bf16.mxu0 0
        %2742 = vmatpush1.bf16.msra.mxu0 0
        %2743 = vmatprep.subr.bf16.mxu0 0
        %2744 = vmatpush1.bf16.msra.mxu0 0
        %2745 = vmatprep.subr.bf16.mxu0 0
        %2746 = vmatpush1.bf16.msra.mxu0 0
        %2747 = vmatprep.mubr.bf16.mxu0 0
        %2748 = vmatmul.mubr.bf16.gmra.mrb[0].mxu0 %v2668
        %v2749 = vpop.f32.mrb[0].mxu0
        %v2750 = vadd.f32 %v2653, %v2749
        %v2751 = vpop.f32.mrb[0].mxu0
        %v2752 = vpop.f32.mrb[0].mxu0
        %v2753 = vadd.f32 %v2653, %v2752
        %v2754 = vpop.f32.mrb[0].mxu0
        %2755 = vmatprep.mubr.bf16.mxu0 0
        %2756 = vmatmul.mubr.bf16.gmra.mrb[0].mxu0 %v2671
        %v2757 = vpop.f32.mrb[0].mxu0
        %v2758 = vadd.f32 %v2653, %v2757
        %v2759 = vpop.f32.mrb[0].mxu0
        %v2760 = vpop.f32.mrb[0].mxu0
        %v2761 = vadd.f32 %v2653, %v2760
        %v2762 = vpop.f32.mrb[0].mxu0
        %2763 = vmatprep.mubr.bf16.mxu0 0
        %2764 = vmatmul.mubr.bf16.gmra.mrb[0].mxu0 %v2674
        %v2765 = vpop.f32.mrb[0].mxu0
        %v2766 = vadd.f32 %v2653, %v2765
        %v2767 = vpop.f32.mrb[0].mxu0
        %v2768 = vpop.f32.mrb[0].mxu0
        %v2769 = vadd.f32 %v2653, %v2768
        %v2770 = vpop.f32.mrb[0].mxu0
        %2771 = vmatprep.mubr.bf16.mxu0 0
        %2772 = vmatmul.mubr.bf16.gmra.mrb[0].mxu0 %v2677
        %v2773 = vpop.f32.mrb[0].mxu0
        %v2774 = vadd.f32 %v2653, %v2773
        %v2775 = vpop.f32.mrb[0].mxu0
        %v2776 = vpop.f32.mrb[0].mxu0
        %v2777 = vadd.f32 %v2653, %v2776
        %v2778 = vpop.f32.mrb[0].mxu0
        %2779 = vmatprep.mubr.bf16.mxu0 0
        %2780 = vmatmul.mubr.bf16.gmra.mrb[0].mxu0 %v2680
        %v2781 = vpop.f32.mrb[0].mxu0
        %v2782 = vadd.f32 %v2653, %v2781
        %v2783 = vpop.f32.mrb[0].mxu0
        %v2784 = vpop.f32.mrb[0].mxu0
        %v2785 = vadd.f32 %v2653, %v2784
        %v2786 = vpop.f32.mrb[0].mxu0
        %2787 = vmatprep.mubr.bf16.mxu0 0
        %2788 = vmatmul.mubr.bf16.gmra.mrb[0].mxu0 %v2683
        %v2789 = vpop.f32.mrb[0].mxu0
        %v2790 = vadd.f32 %v2653, %v2789
        %v2791 = vpop.f32.mrb[0].mxu0
        %v2792 = vpop.f32.mrb[0].mxu0
        %v2793 = vadd.f32 %v2653, %v2792
        %v2794 = vpop.f32.mrb[0].mxu0
        %2795 = vmatprep.mubr.bf16.mxu0 0
        %2796 = vmatmul.mubr.bf16.gmra.mrb[0].mxu0 %v2686
        %v2797 = vpop.f32.mrb[0].mxu0
        %v2798 = vadd.f32 %v2653, %v2797
        %v2799 = vpop.f32.mrb[0].mxu0
        %v2800 = vpop.f32.mrb[0].mxu0
        %v2801 = vadd.f32 %v2653, %v2800
        %v2802 = vpop.f32.mrb[0].mxu0
        %2803 = vmatprep.mubr.bf16.mxu0 0
        %2804 = vmatmul.mubr.bf16.gmra.mrb[0].mxu0 %v2689
        %v2805 = vpop.f32.mrb[0].mxu0
        %v2806 = vadd.f32 %v2653, %v2805
        %v2807 = vpop.f32.mrb[0].mxu0
        %v2808 = vpop.f32.mrb[0].mxu0
        %v2809 = vadd.f32 %v2653, %v2808
        %v2810 = vpop.f32.mrb[0].mxu0
        %2811 = vmatprep.mubr.bf16.mxu0 0
        %2812 = vmatmul.mubr.bf16.gmra.mrb[0].mxu0 %v2692
        %v2813 = vpop.f32.mrb[0].mxu0
        %v2814 = vadd.f32 %v2653, %v2813
        %v2815 = vpop.f32.mrb[0].mxu0
        %v2816 = vpop.f32.mrb[0].mxu0
        %v2817 = vadd.f32 %v2653, %v2816
        %v2818 = vpop.f32.mrb[0].mxu0
        %2819 = vmatprep.mubr.bf16.mxu0 0
        %2820 = vmatmul.mubr.bf16.gmra.mrb[0].mxu0 %v2695
        %v2821 = vpop.f32.mrb[0].mxu0
        %v2822 = vadd.f32 %v2653, %v2821
        %v2823 = vpop.f32.mrb[0].mxu0
        %v2824 = vpop.f32.mrb[0].mxu0
        %v2825 = vadd.f32 %v2653, %v2824
        %v2826 = vpop.f32.mrb[0].mxu0
        %2827 = vmatprep.mubr.bf16.mxu0 0
        %2828 = vmatmul.mubr.bf16.gmra.mrb[0].mxu0 %v2698
        %v2829 = vpop.f32.mrb[0].mxu0
        %v2830 = vadd.f32 %v2653, %v2829
        %v2831 = vpop.f32.mrb[0].mxu0
        %v2832 = vpop.f32.mrb[0].mxu0
        %v2833 = vadd.f32 %v2653, %v2832
        %v2834 = vpop.f32.mrb[0].mxu0
        %2835 = vmatprep.mubr.bf16.mxu0 0
        %2836 = vmatmul.mubr.bf16.gmra.mrb[0].mxu0 %v2701
        %v2837 = vpop.f32.mrb[0].mxu0
        %v2838 = vadd.f32 %v2653, %v2837
        %v2839 = vpop.f32.mrb[0].mxu0
        %v2840 = vpop.f32.mrb[0].mxu0
        %v2841 = vadd.f32 %v2653, %v2840
        %v2842 = vpop.f32.mrb[0].mxu0
        %2843 = vmatprep.mubr.bf16.mxu0 0
        %2844 = vmatmul.mubr.bf16.gmra.mrb[0].mxu0 %v2704
        %v2845 = vpop.f32.mrb[0].mxu0
        %v2846 = vadd.f32 %v2653, %v2845
        %v2847 = vpop.f32.mrb[0].mxu0
        %v2848 = vpop.f32.mrb[0].mxu0
        %v2849 = vadd.f32 %v2653, %v2848
        %v2850 = vpop.f32.mrb[0].mxu0
        %2851 = vmatprep.mubr.bf16.mxu0 0
        %2852 = vmatmul.mubr.bf16.gmra.mrb[0].mxu0 %v2707
        %v2853 = vpop.f32.mrb[0].mxu0
        %v2854 = vadd.f32 %v2653, %v2853
        %v2855 = vpop.f32.mrb[0].mxu0
        %v2856 = vpop.f32.mrb[0].mxu0
        %v2857 = vadd.f32 %v2653, %v2856
        %v2858 = vpop.f32.mrb[0].mxu0
        %2859 = vmatprep.mubr.bf16.mxu0 0
        %2860 = vmatmul.mubr.bf16.gmra.mrb[0].mxu0 %v2710
        %v2861 = vpop.f32.mrb[0].mxu0
        %v2862 = vadd.f32 %v2653, %v2861
        %v2863 = vpop.f32.mrb[0].mxu0
        %v2864 = vpop.f32.mrb[0].mxu0
        %v2865 = vadd.f32 %v2653, %v2864
        %v2866 = vpop.f32.mrb[0].mxu0
        %2867 = vmatprep.mubr.bf16.mxu0 0
        %2868 = vmatmul.mubr.bf16.gmra.mrb[0].mxu0 %v2713
        %v2869 = vpop.f32.mrb[0].mxu0
        %v2870 = vadd.f32 %v2653, %v2869
        %v2871 = vpop.f32.mrb[0].mxu0
        %v2872 = vpop.f32.mrb[0].mxu0
        %v2873 = vadd.f32 %v2653, %v2872
        %v2874 = vpop.f32.mrb[0].mxu0
        %2875 = vdwg.mxu0
        %v2876 = vmax.f32 %v2750, 0.0
        %v2877 = vmax.f32 %v2753, 0.0
        %v2878 = vmax.f32 %v2758, 0.0
        %v2879 = vmax.f32 %v2761, 0.0
        %v2880 = vmax.f32 %v2766, 0.0
        %v2881 = vmax.f32 %v2769, 0.0
        %v2882 = vmax.f32 %v2774, 0.0
        %v2883 = vmax.f32 %v2777, 0.0
        %v2884 = vmax.f32 %v2782, 0.0
        %v2885 = vmax.f32 %v2785, 0.0
        %v2886 = vmax.f32 %v2790, 0.0
        %v2887 = vmax.f32 %v2793, 0.0
        %v2888 = vmax.f32 %v2798, 0.0
        %v2889 = vmax.f32 %v2801, 0.0
        %v2890 = vmax.f32 %v2806, 0.0
        %v2891 = vmax.f32 %v2809, 0.0
        %v2892 = vmax.f32 %v2814, 0.0
        %v2893 = vmax.f32 %v2817, 0.0
        %v2894 = vmax.f32 %v2822, 0.0
        %v2895 = vmax.f32 %v2825, 0.0
        %v2896 = vmax.f32 %v2830, 0.0
        %v2897 = vmax.f32 %v2833, 0.0
        %v2898 = vmax.f32 %v2838, 0.0
        %v2899 = vmax.f32 %v2841, 0.0
        %v2900 = vmax.f32 %v2846, 0.0
        %v2901 = vmax.f32 %v2849, 0.0
        %v2902 = vmax.f32 %v2854, 0.0
        %v2903 = vmax.f32 %v2857, 0.0
        %v2904 = vmax.f32 %v2862, 0.0
        %v2905 = vmax.f32 %v2865, 0.0
        %v2906 = vmax.f32 %v2870, 0.0
        %v2907 = vmax.f32 %v2873, 0.0
        %v2908 = vpack.c.bf16 %v2877, %v2876
        %v2909 = vpack.c.bf16 %v2879, %v2878
        %v2910 = vpack.c.bf16 %v2881, %v2880
        %v2911 = vpack.c.bf16 %v2883, %v2882
        %v2912 = vpack.c.bf16 %v2885, %v2884
        %v2913 = vpack.c.bf16 %v2887, %v2886
        %v2914 = vpack.c.bf16 %v2889, %v2888
        %v2915 = vpack.c.bf16 %v2891, %v2890
        %v2916 = vpack.c.bf16 %v2893, %v2892
        %v2917 = vpack.c.bf16 %v2895, %v2894
        %v2918 = vpack.c.bf16 %v2897, %v2896
        %v2919 = vpack.c.bf16 %v2899, %v2898
        %v2920 = vpack.c.bf16 %v2901, %v2900
        %v2921 = vpack.c.bf16 %v2903, %v2902
        %v2922 = vpack.c.bf16 %v2905, %v2904
        %v2923 = vpack.c.bf16 %v2907, %v2906
        %v2924 = vld [vmem:[%s6 + $0x10] sm:$0xf]
        %v2925 = vld [vmem:[%s6 + $0x14] sm:$0xf]
        %v2926 = vld [vmem:[%s6 + $0x18] sm:$0xf]
        %v2927 = vld [vmem:[%s6 + $0x1c] sm:$0xf]
        %v2932 = vunpack.c.l.b16 %v2924
        %v2933 = vunpack.c.l.b16 %v2925
        %v2934 = vunpack.c.l.b16 %v2926
        %v2935 = vunpack.c.l.b16 %v2927
        %v2936 = vpack.c.b16 %v2933, %v2932
        %v2937 = vpack.c.b16 %v2935, %v2934
        %v2941 = vsel %vm2090, %v2908, 0
        %v2944 = vsel %vm2090, %v2909, 0
        %v2947 = vsel %vm2090, %v2910, 0
        %v2950 = vsel %vm2090, %v2911, 0
        %v2953 = vsel %vm2090, %v2912, 0
        %v2956 = vsel %vm2090, %v2913, 0
        %v2959 = vsel %vm2090, %v2914, 0
        %v2962 = vsel %vm2090, %v2915, 0
        %v2965 = vsel %vm2090, %v2916, 0
        %v2968 = vsel %vm2090, %v2917, 0
        %v2971 = vsel %vm2090, %v2918, 0
        %v2974 = vsel %vm2090, %v2919, 0
        %v2977 = vsel %vm2090, %v2920, 0
        %v2980 = vsel %vm2090, %v2921, 0
        %v2983 = vsel %vm2090, %v2922, 0
        %v2986 = vsel %vm2090, %v2923, 0
        %2988 = vmatprep.subr.bf16.mxu0 0
        %2989 = vmatpush1.bf16.msra.mxu0 %v2936
        %2990 = vmatprep.subr.bf16.mxu0 0
        %2991 = vmatpush1.bf16.msra.mxu0 %v2937
        %2992 = vmatprep.subr.bf16.mxu0 0
        %2993 = vmatpush1.bf16.msra.mxu0 0
        %2994 = vmatprep.subr.bf16.mxu0 0
        %2995 = vmatpush1.bf16.msra.mxu0 0
        %2996 = vmatprep.subr.bf16.mxu0 0
        %2997 = vmatpush1.bf16.msra.mxu0 0
        %2998 = vmatprep.subr.bf16.mxu0 0
        %2999 = vmatpush1.bf16.msra.mxu0 0
        %3000 = vmatprep.subr.bf16.mxu0 0
        %3001 = vmatpush1.bf16.msra.mxu0 0
        %3002 = vmatprep.subr.bf16.mxu0 0
        %3003 = vmatpush1.bf16.msra.mxu0 0
        %3004 = vmatprep.subr.bf16.mxu0 0
        %3005 = vmatpush1.bf16.msra.mxu0 0
        %3006 = vmatprep.subr.bf16.mxu0 0
        %3007 = vmatpush1.bf16.msra.mxu0 0
        %3008 = vmatprep.subr.bf16.mxu0 0
        %3009 = vmatpush1.bf16.msra.mxu0 0
        %3010 = vmatprep.subr.bf16.mxu0 0
        %3011 = vmatpush1.bf16.msra.mxu0 0
        %3012 = vmatprep.subr.bf16.mxu0 0
        %3013 = vmatpush1.bf16.msra.mxu0 0
        %3014 = vmatprep.subr.bf16.mxu0 0
        %3015 = vmatpush1.bf16.msra.mxu0 0
        %3016 = vmatprep.subr.bf16.mxu0 0
        %3017 = vmatpush1.bf16.msra.mxu0 0
        %3018 = vmatprep.subr.bf16.mxu0 0
        %3019 = vmatpush1.bf16.msra.mxu0 0
        %3020 = vmatprep.mubr.bf16.mxu0 0
        %3021 = vmatmul.mubr.bf16.gmra.mrb[0].mxu0 %v2941
        %v3022 = vpop.f32.mrb[0].mxu0
        %v3023 = vadd.f32 0.0, %v3022
        %v3024 = vpop.f32.mrb[0].mxu0
        %v3025 = vpop.f32.mrb[0].mxu0
        %v3026 = vadd.f32 0.0, %v3025
        %v3027 = vpop.f32.mrb[0].mxu0
        %3028 = vmatprep.mubr.bf16.mxu0 0
        %3029 = vmatmul.mubr.bf16.gmra.mrb[0].mxu0 %v2944
        %v3030 = vpop.f32.mrb[0].mxu0
        %v3031 = vadd.f32 0.0, %v3030
        %v3032 = vpop.f32.mrb[0].mxu0
        %v3033 = vpop.f32.mrb[0].mxu0
        %v3034 = vadd.f32 0.0, %v3033
        %v3035 = vpop.f32.mrb[0].mxu0
        %3036 = vmatprep.mubr.bf16.mxu0 0
        %3037 = vmatmul.mubr.bf16.gmra.mrb[0].mxu0 %v2947
        %v3038 = vpop.f32.mrb[0].mxu0
        %v3039 = vadd.f32 0.0, %v3038
        %v3040 = vpop.f32.mrb[0].mxu0
        %v3041 = vpop.f32.mrb[0].mxu0
        %v3042 = vadd.f32 0.0, %v3041
        %v3043 = vpop.f32.mrb[0].mxu0
        %3044 = vmatprep.mubr.bf16.mxu0 0
        %3045 = vmatmul.mubr.bf16.gmra.mrb[0].mxu0 %v2950
        %v3046 = vpop.f32.mrb[0].mxu0
        %v3047 = vadd.f32 0.0, %v3046
        %v3048 = vpop.f32.mrb[0].mxu0
        %v3049 = vpop.f32.mrb[0].mxu0
        %v3050 = vadd.f32 0.0, %v3049
        %v3051 = vpop.f32.mrb[0].mxu0
        %3052 = vmatprep.mubr.bf16.mxu0 0
        %3053 = vmatmul.mubr.bf16.gmra.mrb[0].mxu0 %v2953
        %v3054 = vpop.f32.mrb[0].mxu0
        %v3055 = vadd.f32 0.0, %v3054
        %v3056 = vpop.f32.mrb[0].mxu0
        %v3057 = vpop.f32.mrb[0].mxu0
        %v3058 = vadd.f32 0.0, %v3057
        %v3059 = vpop.f32.mrb[0].mxu0
        %3060 = vmatprep.mubr.bf16.mxu0 0
        %3061 = vmatmul.mubr.bf16.gmra.mrb[0].mxu0 %v2956
        %v3062 = vpop.f32.mrb[0].mxu0
        %v3063 = vadd.f32 0.0, %v3062
        %v3064 = vpop.f32.mrb[0].mxu0
        %v3065 = vpop.f32.mrb[0].mxu0
        %v3066 = vadd.f32 0.0, %v3065
        %v3067 = vpop.f32.mrb[0].mxu0
        %3068 = vmatprep.mubr.bf16.mxu0 0
        %3069 = vmatmul.mubr.bf16.gmra.mrb[0].mxu0 %v2959
        %v3070 = vpop.f32.mrb[0].mxu0
        %v3071 = vadd.f32 0.0, %v3070
        %v3072 = vpop.f32.mrb[0].mxu0
        %v3073 = vpop.f32.mrb[0].mxu0
        %v3074 = vadd.f32 0.0, %v3073
        %v3075 = vpop.f32.mrb[0].mxu0
        %3076 = vmatprep.mubr.bf16.mxu0 0
        %3077 = vmatmul.mubr.bf16.gmra.mrb[0].mxu0 %v2962
        %v3078 = vpop.f32.mrb[0].mxu0
        %v3079 = vadd.f32 0.0, %v3078
        %v3080 = vpop.f32.mrb[0].mxu0
        %v3081 = vpop.f32.mrb[0].mxu0
        %v3082 = vadd.f32 0.0, %v3081
        %v3083 = vpop.f32.mrb[0].mxu0
        %3084 = vmatprep.mubr.bf16.mxu0 0
        %3085 = vmatmul.mubr.bf16.gmra.mrb[0].mxu0 %v2965
        %v3086 = vpop.f32.mrb[0].mxu0
        %v3087 = vadd.f32 0.0, %v3086
        %v3088 = vpop.f32.mrb[0].mxu0
        %v3089 = vpop.f32.mrb[0].mxu0
        %v3090 = vadd.f32 0.0, %v3089
        %v3091 = vpop.f32.mrb[0].mxu0
        %3092 = vmatprep.mubr.bf16.mxu0 0
        %3093 = vmatmul.mubr.bf16.gmra.mrb[0].mxu0 %v2968
        %v3094 = vpop.f32.mrb[0].mxu0
        %v3095 = vadd.f32 0.0, %v3094
        %v3096 = vpop.f32.mrb[0].mxu0
        %v3097 = vpop.f32.mrb[0].mxu0
        %v3098 = vadd.f32 0.0, %v3097
        %v3099 = vpop.f32.mrb[0].mxu0
        %3100 = vmatprep.mubr.bf16.mxu0 0
        %3101 = vmatmul.mubr.bf16.gmra.mrb[0].mxu0 %v2971
        %v3102 = vpop.f32.mrb[0].mxu0
        %v3103 = vadd.f32 0.0, %v3102
        %v3104 = vpop.f32.mrb[0].mxu0
        %v3105 = vpop.f32.mrb[0].mxu0
        %v3106 = vadd.f32 0.0, %v3105
        %v3107 = vpop.f32.mrb[0].mxu0
        %3108 = vmatprep.mubr.bf16.mxu0 0
        %3109 = vmatmul.mubr.bf16.gmra.mrb[0].mxu0 %v2974
        %v3110 = vpop.f32.mrb[0].mxu0
        %v3111 = vadd.f32 0.0, %v3110
        %v3112 = vpop.f32.mrb[0].mxu0
        %v3113 = vpop.f32.mrb[0].mxu0
        %v3114 = vadd.f32 0.0, %v3113
        %v3115 = vpop.f32.mrb[0].mxu0
        %3116 = vmatprep.mubr.bf16.mxu0 0
        %3117 = vmatmul.mubr.bf16.gmra.mrb[0].mxu0 %v2977
        %v3118 = vpop.f32.mrb[0].mxu0
        %v3119 = vadd.f32 0.0, %v3118
        %v3120 = vpop.f32.mrb[0].mxu0
        %v3121 = vpop.f32.mrb[0].mxu0
        %v3122 = vadd.f32 0.0, %v3121
        %v3123 = vpop.f32.mrb[0].mxu0
        %3124 = vmatprep.mubr.bf16.mxu0 0
        %3125 = vmatmul.mubr.bf16.gmra.mrb[0].mxu0 %v2980
        %v3126 = vpop.f32.mrb[0].mxu0
        %v3127 = vadd.f32 0.0, %v3126
        %v3128 = vpop.f32.mrb[0].mxu0
        %v3129 = vpop.f32.mrb[0].mxu0
        %v3130 = vadd.f32 0.0, %v3129
        %v3131 = vpop.f32.mrb[0].mxu0
        %3132 = vmatprep.mubr.bf16.mxu0 0
        %3133 = vmatmul.mubr.bf16.gmra.mrb[0].mxu0 %v2983
        %v3134 = vpop.f32.mrb[0].mxu0
        %v3135 = vadd.f32 0.0, %v3134
        %v3136 = vpop.f32.mrb[0].mxu0
        %v3137 = vpop.f32.mrb[0].mxu0
        %v3138 = vadd.f32 0.0, %v3137
        %v3139 = vpop.f32.mrb[0].mxu0
        %3140 = vmatprep.mubr.bf16.mxu0 0
        %3141 = vmatmul.mubr.bf16.gmra.mrb[0].mxu0 %v2986
        %v3142 = vpop.f32.mrb[0].mxu0
        %v3143 = vadd.f32 0.0, %v3142
        %v3144 = vpop.f32.mrb[0].mxu0
        %v3145 = vpop.f32.mrb[0].mxu0
        %v3146 = vadd.f32 0.0, %v3145
        %v3147 = vpop.f32.mrb[0].mxu0
        %3148 = vdwg.mxu0
        %v3153 = vunpack.c.l.b16 %v2348
        %v3154 = vunpack.c.l.b16 %v2349
        %v3155 = vunpack.c.l.b16 %v2350
        %v3156 = vunpack.c.l.b16 %v2351
        %v3157 = vpack.c.b16 %v3154, %v3153
        %v3158 = vpack.c.b16 %v3156, %v3155
        %v3162 = vsel %vm2090, %v2332, 0
        %v3165 = vsel %vm2090, %v2333, 0
        %v3168 = vsel %vm2090, %v2334, 0
        %v3171 = vsel %vm2090, %v2335, 0
        %v3174 = vsel %vm2090, %v2336, 0
        %v3177 = vsel %vm2090, %v2337, 0
        %v3180 = vsel %vm2090, %v2338, 0
        %v3183 = vsel %vm2090, %v2339, 0
        %v3186 = vsel %vm2090, %v2340, 0
        %v3189 = vsel %vm2090, %v2341, 0
        %v3192 = vsel %vm2090, %v2342, 0
        %v3195 = vsel %vm2090, %v2343, 0
        %v3198 = vsel %vm2090, %v2344, 0
        %v3201 = vsel %vm2090, %v2345, 0
        %v3204 = vsel %vm2090, %v2346, 0
        %v3207 = vsel %vm2090, %v2347, 0
        %3209 = vmatprep.subr.bf16.mxu0 0
        %3210 = vmatpush1.bf16.msra.mxu0 %v3157
        %3211 = vmatprep.subr.bf16.mxu0 0
        %3212 = vmatpush1.bf16.msra.mxu0 %v3158
        %3213 = vmatprep.subr.bf16.mxu0 0
        %3214 = vmatpush1.bf16.msra.mxu0 0
        %3215 = vmatprep.subr.bf16.mxu0 0
        %3216 = vmatpush1.bf16.msra.mxu0 0
        %3217 = vmatprep.subr.bf16.mxu0 0
        %3218 = vmatpush1.bf16.msra.mxu0 0
        %3219 = vmatprep.subr.bf16.mxu0 0
        %3220 = vmatpush1.bf16.msra.mxu0 0
        %3221 = vmatprep.subr.bf16.mxu0 0
        %3222 = vmatpush1.bf16.msra.mxu0 0
        %3223 = vmatprep.subr.bf16.mxu0 0
        %3224 = vmatpush1.bf16.msra.mxu0 0
        %3225 = vmatprep.subr.bf16.mxu0 0
        %3226 = vmatpush1.bf16.msra.mxu0 0
        %3227 = vmatprep.subr.bf16.mxu0 0
        %3228 = vmatpush1.bf16.msra.mxu0 0
        %3229 = vmatprep.subr.bf16.mxu0 0
        %3230 = vmatpush1.bf16.msra.mxu0 0
        %3231 = vmatprep.subr.bf16.mxu0 0
        %3232 = vmatpush1.bf16.msra.mxu0 0
        %3233 = vmatprep.subr.bf16.mxu0 0
        %3234 = vmatpush1.bf16.msra.mxu0 0
        %3235 = vmatprep.subr.bf16.mxu0 0
        %3236 = vmatpush1.bf16.msra.mxu0 0
        %3237 = vmatprep.subr.bf16.mxu0 0
        %3238 = vmatpush1.bf16.msra.mxu0 0
        %3239 = vmatprep.subr.bf16.mxu0 0
        %3240 = vmatpush1.bf16.msra.mxu0 0
        %3241 = vmatprep.mubr.bf16.mxu0 0
        %3242 = vmatmul.mubr.bf16.gmra.mrb[0].mxu0 %v3162
        %v3243 = vpop.f32.mrb[0].mxu0
        %v3244 = vadd.f32 %v3023, %v3243
        %v3245 = vpop.f32.mrb[0].mxu0
        %v3246 = vpop.f32.mrb[0].mxu0
        %v3247 = vadd.f32 %v3026, %v3246
        %v3248 = vpop.f32.mrb[0].mxu0
        %3249 = vmatprep.mubr.bf16.mxu0 0
        %3250 = vmatmul.mubr.bf16.gmra.mrb[0].mxu0 %v3165
        %v3251 = vpop.f32.mrb[0].mxu0
        %v3252 = vadd.f32 %v3031, %v3251
        %v3253 = vpop.f32.mrb[0].mxu0
        %v3254 = vpop.f32.mrb[0].mxu0
        %v3255 = vadd.f32 %v3034, %v3254
        %v3256 = vpop.f32.mrb[0].mxu0
        %3257 = vmatprep.mubr.bf16.mxu0 0
        %3258 = vmatmul.mubr.bf16.gmra.mrb[0].mxu0 %v3168
        %v3259 = vpop.f32.mrb[0].mxu0
        %v3260 = vadd.f32 %v3039, %v3259
        %v3261 = vpop.f32.mrb[0].mxu0
        %v3262 = vpop.f32.mrb[0].mxu0
        %v3263 = vadd.f32 %v3042, %v3262
        %v3264 = vpop.f32.mrb[0].mxu0
        %3265 = vmatprep.mubr.bf16.mxu0 0
        %3266 = vmatmul.mubr.bf16.gmra.mrb[0].mxu0 %v3171
        %v3267 = vpop.f32.mrb[0].mxu0
        %v3268 = vadd.f32 %v3047, %v3267
        %v3269 = vpop.f32.mrb[0].mxu0
        %v3270 = vpop.f32.mrb[0].mxu0
        %v3271 = vadd.f32 %v3050, %v3270
        %v3272 = vpop.f32.mrb[0].mxu0
        %3273 = vmatprep.mubr.bf16.mxu0 0
        %3274 = vmatmul.mubr.bf16.gmra.mrb[0].mxu0 %v3174
        %v3275 = vpop.f32.mrb[0].mxu0
        %v3276 = vadd.f32 %v3055, %v3275
        %v3277 = vpop.f32.mrb[0].mxu0
        %v3278 = vpop.f32.mrb[0].mxu0
        %v3279 = vadd.f32 %v3058, %v3278
        %v3280 = vpop.f32.mrb[0].mxu0
        %3281 = vmatprep.mubr.bf16.mxu0 0
        %3282 = vmatmul.mubr.bf16.gmra.mrb[0].mxu0 %v3177
        %v3283 = vpop.f32.mrb[0].mxu0
        %v3284 = vadd.f32 %v3063, %v3283
        %v3285 = vpop.f32.mrb[0].mxu0
        %v3286 = vpop.f32.mrb[0].mxu0
        %v3287 = vadd.f32 %v3066, %v3286
        %v3288 = vpop.f32.mrb[0].mxu0
        %3289 = vmatprep.mubr.bf16.mxu0 0
        %3290 = vmatmul.mubr.bf16.gmra.mrb[0].mxu0 %v3180
        %v3291 = vpop.f32.mrb[0].mxu0
        %v3292 = vadd.f32 %v3071, %v3291
        %v3293 = vpop.f32.mrb[0].mxu0
        %v3294 = vpop.f32.mrb[0].mxu0
        %v3295 = vadd.f32 %v3074, %v3294
        %v3296 = vpop.f32.mrb[0].mxu0
        %3297 = vmatprep.mubr.bf16.mxu0 0
        %3298 = vmatmul.mubr.bf16.gmra.mrb[0].mxu0 %v3183
        %v3299 = vpop.f32.mrb[0].mxu0
        %v3300 = vadd.f32 %v3079, %v3299
        %v3301 = vpop.f32.mrb[0].mxu0
        %v3302 = vpop.f32.mrb[0].mxu0
        %v3303 = vadd.f32 %v3082, %v3302
        %v3304 = vpop.f32.mrb[0].mxu0
        %3305 = vmatprep.mubr.bf16.mxu0 0
        %3306 = vmatmul.mubr.bf16.gmra.mrb[0].mxu0 %v3186
        %v3307 = vpop.f32.mrb[0].mxu0
        %v3308 = vadd.f32 %v3087, %v3307
        %v3309 = vpop.f32.mrb[0].mxu0
        %v3310 = vpop.f32.mrb[0].mxu0
        %v3311 = vadd.f32 %v3090, %v3310
        %v3312 = vpop.f32.mrb[0].mxu0
        %3313 = vmatprep.mubr.bf16.mxu0 0
        %3314 = vmatmul.mubr.bf16.gmra.mrb[0].mxu0 %v3189
        %v3315 = vpop.f32.mrb[0].mxu0
        %v3316 = vadd.f32 %v3095, %v3315
        %v3317 = vpop.f32.mrb[0].mxu0
        %v3318 = vpop.f32.mrb[0].mxu0
        %v3319 = vadd.f32 %v3098, %v3318
        %v3320 = vpop.f32.mrb[0].mxu0
        %3321 = vmatprep.mubr.bf16.mxu0 0
        %3322 = vmatmul.mubr.bf16.gmra.mrb[0].mxu0 %v3192
        %v3323 = vpop.f32.mrb[0].mxu0
        %v3324 = vadd.f32 %v3103, %v3323
        %v3325 = vpop.f32.mrb[0].mxu0
        %v3326 = vpop.f32.mrb[0].mxu0
        %v3327 = vadd.f32 %v3106, %v3326
        %v3328 = vpop.f32.mrb[0].mxu0
        %3329 = vmatprep.mubr.bf16.mxu0 0
        %3330 = vmatmul.mubr.bf16.gmra.mrb[0].mxu0 %v3195
        %v3331 = vpop.f32.mrb[0].mxu0
        %v3332 = vadd.f32 %v3111, %v3331
        %v3333 = vpop.f32.mrb[0].mxu0
        %v3334 = vpop.f32.mrb[0].mxu0
        %v3335 = vadd.f32 %v3114, %v3334
        %v3336 = vpop.f32.mrb[0].mxu0
        %3337 = vmatprep.mubr.bf16.mxu0 0
        %3338 = vmatmul.mubr.bf16.gmra.mrb[0].mxu0 %v3198
        %v3339 = vpop.f32.mrb[0].mxu0
        %v3340 = vadd.f32 %v3119, %v3339
        %v3341 = vpop.f32.mrb[0].mxu0
        %v3342 = vpop.f32.mrb[0].mxu0
        %v3343 = vadd.f32 %v3122, %v3342
        %v3344 = vpop.f32.mrb[0].mxu0
        %3345 = vmatprep.mubr.bf16.mxu0 0
        %3346 = vmatmul.mubr.bf16.gmra.mrb[0].mxu0 %v3201
        %v3347 = vpop.f32.mrb[0].mxu0
        %v3348 = vadd.f32 %v3127, %v3347
        %v3349 = vpop.f32.mrb[0].mxu0
        %v3350 = vpop.f32.mrb[0].mxu0
        %v3351 = vadd.f32 %v3130, %v3350
        %v3352 = vpop.f32.mrb[0].mxu0
        %3353 = vmatprep.mubr.bf16.mxu0 0
        %3354 = vmatmul.mubr.bf16.gmra.mrb[0].mxu0 %v3204
        %v3355 = vpop.f32.mrb[0].mxu0
        %v3356 = vadd.f32 %v3135, %v3355
        %v3357 = vpop.f32.mrb[0].mxu0
        %v3358 = vpop.f32.mrb[0].mxu0
        %v3359 = vadd.f32 %v3138, %v3358
        %v3360 = vpop.f32.mrb[0].mxu0
        %3361 = vmatprep.mubr.bf16.mxu0 0
        %3362 = vmatmul.mubr.bf16.gmra.mrb[0].mxu0 %v3207
        %v3363 = vpop.f32.mrb[0].mxu0
        %v3364 = vadd.f32 %v3143, %v3363
        %v3365 = vpop.f32.mrb[0].mxu0
        %v3366 = vpop.f32.mrb[0].mxu0
        %v3367 = vadd.f32 %v3146, %v3366
        %v3368 = vpop.f32.mrb[0].mxu0
        %3369 = vdwg.mxu0
        %v3370 = vmul.f32 %v2876, %v1460
        %v3371 = vmul.f32 %v2877, %v1465
        %v3372 = vmul.f32 %v2878, %v1470
        %v3373 = vmul.f32 %v2879, %v1475
        %v3374 = vmul.f32 %v2880, %v1480
        %v3375 = vmul.f32 %v2881, %v1485
        %v3376 = vmul.f32 %v2882, %v1490
        %v3377 = vmul.f32 %v2883, %v1495
        %v3378 = vmul.f32 %v2884, %v1500
        %v3379 = vmul.f32 %v2885, %v1505
        %v3380 = vmul.f32 %v2886, %v1510
        %v3381 = vmul.f32 %v2887, %v1515
        %v3382 = vmul.f32 %v2888, %v1520
        %v3383 = vmul.f32 %v2889, %v1525
        %v3384 = vmul.f32 %v2890, %v1530
        %v3385 = vmul.f32 %v2891, %v1535
        %v3386 = vmul.f32 %v2892, %v1540
        %v3387 = vmul.f32 %v2893, %v1545
        %v3388 = vmul.f32 %v2894, %v1550
        %v3389 = vmul.f32 %v2895, %v1555
        %v3390 = vmul.f32 %v2896, %v1560
        %v3391 = vmul.f32 %v2897, %v1565
        %v3392 = vmul.f32 %v2898, %v1570
        %v3393 = vmul.f32 %v2899, %v1575
        %v3394 = vmul.f32 %v2900, %v1580
        %v3395 = vmul.f32 %v2901, %v1585
        %v3396 = vmul.f32 %v2902, %v1590
        %v3397 = vmul.f32 %v2903, %v1595
        %v3398 = vmul.f32 %v2904, %v1600
        %v3399 = vmul.f32 %v2905, %v1605
        %v3400 = vmul.f32 %v2906, %v1610
        %v3401 = vmul.f32 %v2907, %v1615
        %v3402 = vpack.c.bf16 %v3371, %v3370
        %v3403 = vpack.c.bf16 %v3373, %v3372
        %v3404 = vpack.c.bf16 %v3375, %v3374
        %v3405 = vpack.c.bf16 %v3377, %v3376
        %v3406 = vpack.c.bf16 %v3379, %v3378
        %v3407 = vpack.c.bf16 %v3381, %v3380
        %v3408 = vpack.c.bf16 %v3383, %v3382
        %v3409 = vpack.c.bf16 %v3385, %v3384
        %v3410 = vpack.c.bf16 %v3387, %v3386
        %v3411 = vpack.c.bf16 %v3389, %v3388
        %v3412 = vpack.c.bf16 %v3391, %v3390
        %v3413 = vpack.c.bf16 %v3393, %v3392
        %v3414 = vpack.c.bf16 %v3395, %v3394
        %v3415 = vpack.c.bf16 %v3397, %v3396
        %v3416 = vpack.c.bf16 %v3399, %v3398
        %v3417 = vpack.c.bf16 %v3401, %v3400
        %3418 = vmatprep.subr.bf16.mxu0 0
        %3419 = vmatpush1.bf16.msra.mxu0 %v3402
        %3420 = vmatprep.subr.bf16.mxu0 0
        %3421 = vmatpush1.bf16.msra.mxu0 %v3403
        %3422 = vmatprep.subr.bf16.mxu0 0
        %3423 = vmatpush1.bf16.msra.mxu0 %v3404
        %3424 = vmatprep.subr.bf16.mxu0 0
        %3425 = vmatpush1.bf16.msra.mxu0 %v3405
        %3426 = vmatprep.subr.bf16.mxu0 0
        %3427 = vmatpush1.bf16.msra.mxu0 %v3406
        %3428 = vmatprep.subr.bf16.mxu0 0
        %3429 = vmatpush1.bf16.msra.mxu0 %v3407
        %3430 = vmatprep.subr.bf16.mxu0 0
        %3431 = vmatpush1.bf16.msra.mxu0 %v3408
        %3432 = vmatprep.subr.bf16.mxu0 0
        %3433 = vmatpush1.bf16.msra.mxu0 %v3409
        %3434 = vmatprep.subr.bf16.mxu0 0
        %3435 = vmatpush1.bf16.msra.mxu0 0
        %3436 = vmatprep.subr.bf16.mxu0 0
        %3437 = vmatpush1.bf16.msra.mxu0 0
        %3438 = vmatprep.subr.bf16.mxu0 0
        %3439 = vmatpush1.bf16.msra.mxu0 0
        %3440 = vmatprep.subr.bf16.mxu0 0
        %3441 = vmatpush1.bf16.msra.mxu0 0
        %3442 = vmatprep.subr.bf16.mxu0 0
        %3443 = vmatpush1.bf16.msra.mxu0 0
        %3444 = vmatprep.subr.bf16.mxu0 0
        %3445 = vmatpush1.bf16.msra.mxu0 0
        %3446 = vmatprep.subr.bf16.mxu0 0
        %3447 = vmatpush1.bf16.msra.mxu0 0
        %3448 = vmatprep.subr.bf16.mxu0 0
        %3449 = vmatpush1.bf16.msra.mxu0 0
        %3450 = vmatprep.mubr.bf16.mxu0 0
        %3451 = vmatmul.mubr.bf16.gmra.mrb[0].mxu0 %v491
        %v3452 = vpop.f32.mrb[0].mxu0
        %v3453 = vadd.f32 0.0, %v3452
        %v3454 = vpop.f32.mrb[0].mxu0
        %v3455 = vpop.f32.mrb[0].mxu0
        %v3456 = vadd.f32 0.0, %v3455
        %v3457 = vpop.f32.mrb[0].mxu0
        %3458 = vmatprep.mubr.bf16.mxu0 0
        %3459 = vmatmul.mubr.bf16.gmra.mrb[0].mxu0 %v492
        %v3460 = vpop.f32.mrb[0].mxu0
        %v3461 = vadd.f32 0.0, %v3460
        %v3462 = vpop.f32.mrb[0].mxu0
        %v3463 = vpop.f32.mrb[0].mxu0
        %v3464 = vadd.f32 0.0, %v3463
        %v3465 = vpop.f32.mrb[0].mxu0
        %3466 = vmatprep.mubr.bf16.mxu0 0
        %3467 = vmatmul.mubr.bf16.gmra.mrb[0].mxu0 %v493
        %v3468 = vpop.f32.mrb[0].mxu0
        %v3469 = vadd.f32 0.0, %v3468
        %v3470 = vpop.f32.mrb[0].mxu0
        %v3471 = vpop.f32.mrb[0].mxu0
        %v3472 = vadd.f32 0.0, %v3471
        %v3473 = vpop.f32.mrb[0].mxu0
        %3474 = vmatprep.mubr.bf16.mxu0 0
        %3475 = vmatmul.mubr.bf16.gmra.mrb[0].mxu0 %v494
        %v3476 = vpop.f32.mrb[0].mxu0
        %v3477 = vadd.f32 0.0, %v3476
        %v3478 = vpop.f32.mrb[0].mxu0
        %v3479 = vpop.f32.mrb[0].mxu0
        %v3480 = vadd.f32 0.0, %v3479
        %v3481 = vpop.f32.mrb[0].mxu0
        %3482 = vmatprep.mubr.bf16.mxu0 0
        %3483 = vmatmul.mubr.bf16.gmra.mrb[0].mxu0 %v495
        %v3484 = vpop.f32.mrb[0].mxu0
        %v3485 = vadd.f32 0.0, %v3484
        %v3486 = vpop.f32.mrb[0].mxu0
        %v3487 = vpop.f32.mrb[0].mxu0
        %v3488 = vadd.f32 0.0, %v3487
        %v3489 = vpop.f32.mrb[0].mxu0
        %3490 = vmatprep.mubr.bf16.mxu0 0
        %3491 = vmatmul.mubr.bf16.gmra.mrb[0].mxu0 %v496
        %v3492 = vpop.f32.mrb[0].mxu0
        %v3493 = vadd.f32 0.0, %v3492
        %v3494 = vpop.f32.mrb[0].mxu0
        %v3495 = vpop.f32.mrb[0].mxu0
        %v3496 = vadd.f32 0.0, %v3495
        %v3497 = vpop.f32.mrb[0].mxu0
        %3498 = vmatprep.mubr.bf16.mxu0 0
        %3499 = vmatmul.mubr.bf16.gmra.mrb[0].mxu0 %v497
        %v3500 = vpop.f32.mrb[0].mxu0
        %v3501 = vadd.f32 0.0, %v3500
        %v3502 = vpop.f32.mrb[0].mxu0
        %v3503 = vpop.f32.mrb[0].mxu0
        %v3504 = vadd.f32 0.0, %v3503
        %v3505 = vpop.f32.mrb[0].mxu0
        %3506 = vmatprep.mubr.bf16.mxu0 0
        %3507 = vmatmul.mubr.bf16.gmra.mrb[0].mxu0 %v498
        %v3508 = vpop.f32.mrb[0].mxu0
        %v3509 = vadd.f32 0.0, %v3508
        %v3510 = vpop.f32.mrb[0].mxu0
        %v3511 = vpop.f32.mrb[0].mxu0
        %v3512 = vadd.f32 0.0, %v3511
        %v3513 = vpop.f32.mrb[0].mxu0
        %3514 = vdwg.mxu0
        %3515 = vmatprep.subr.bf16.mxu0 0
        %3516 = vmatpush1.bf16.msra.mxu0 %v3410
        %3517 = vmatprep.subr.bf16.mxu0 0
        %3518 = vmatpush1.bf16.msra.mxu0 %v3411
        %3519 = vmatprep.subr.bf16.mxu0 0
        %3520 = vmatpush1.bf16.msra.mxu0 %v3412
        %3521 = vmatprep.subr.bf16.mxu0 0
        %3522 = vmatpush1.bf16.msra.mxu0 %v3413
        %3523 = vmatprep.subr.bf16.mxu0 0
        %3524 = vmatpush1.bf16.msra.mxu0 %v3414
        %3525 = vmatprep.subr.bf16.mxu0 0
        %3526 = vmatpush1.bf16.msra.mxu0 %v3415
        %3527 = vmatprep.subr.bf16.mxu0 0
        %3528 = vmatpush1.bf16.msra.mxu0 %v3416
        %3529 = vmatprep.subr.bf16.mxu0 0
        %3530 = vmatpush1.bf16.msra.mxu0 %v3417
        %3531 = vmatprep.subr.bf16.mxu0 0
        %3532 = vmatpush1.bf16.msra.mxu0 0
        %3533 = vmatprep.subr.bf16.mxu0 0
        %3534 = vmatpush1.bf16.msra.mxu0 0
        %3535 = vmatprep.subr.bf16.mxu0 0
        %3536 = vmatpush1.bf16.msra.mxu0 0
        %3537 = vmatprep.subr.bf16.mxu0 0
        %3538 = vmatpush1.bf16.msra.mxu0 0
        %3539 = vmatprep.subr.bf16.mxu0 0
        %3540 = vmatpush1.bf16.msra.mxu0 0
        %3541 = vmatprep.subr.bf16.mxu0 0
        %3542 = vmatpush1.bf16.msra.mxu0 0
        %3543 = vmatprep.subr.bf16.mxu0 0
        %3544 = vmatpush1.bf16.msra.mxu0 0
        %3545 = vmatprep.subr.bf16.mxu0 0
        %3546 = vmatpush1.bf16.msra.mxu0 0
        %3547 = vmatprep.mubr.bf16.mxu0 0
        %3548 = vmatmul.mubr.bf16.gmra.mrb[0].mxu0 %v766
        %v3549 = vpop.f32.mrb[0].mxu0
        %v3550 = vadd.f32 0.0, %v3549
        %v3551 = vpop.f32.mrb[0].mxu0
        %v3552 = vpop.f32.mrb[0].mxu0
        %v3553 = vadd.f32 0.0, %v3552
        %v3554 = vpop.f32.mrb[0].mxu0
        %3555 = vmatprep.mubr.bf16.mxu0 0
        %3556 = vmatmul.mubr.bf16.gmra.mrb[0].mxu0 %v767
        %v3557 = vpop.f32.mrb[0].mxu0
        %v3558 = vadd.f32 0.0, %v3557
        %v3559 = vpop.f32.mrb[0].mxu0
        %v3560 = vpop.f32.mrb[0].mxu0
        %v3561 = vadd.f32 0.0, %v3560
        %v3562 = vpop.f32.mrb[0].mxu0
        %3563 = vmatprep.mubr.bf16.mxu0 0
        %3564 = vmatmul.mubr.bf16.gmra.mrb[0].mxu0 %v768
        %v3565 = vpop.f32.mrb[0].mxu0
        %v3566 = vadd.f32 0.0, %v3565
        %v3567 = vpop.f32.mrb[0].mxu0
        %v3568 = vpop.f32.mrb[0].mxu0
        %v3569 = vadd.f32 0.0, %v3568
        %v3570 = vpop.f32.mrb[0].mxu0
        %3571 = vmatprep.mubr.bf16.mxu0 0
        %3572 = vmatmul.mubr.bf16.gmra.mrb[0].mxu0 %v769
        %v3573 = vpop.f32.mrb[0].mxu0
        %v3574 = vadd.f32 0.0, %v3573
        %v3575 = vpop.f32.mrb[0].mxu0
        %v3576 = vpop.f32.mrb[0].mxu0
        %v3577 = vadd.f32 0.0, %v3576
        %v3578 = vpop.f32.mrb[0].mxu0
        %3579 = vmatprep.mubr.bf16.mxu0 0
        %3580 = vmatmul.mubr.bf16.gmra.mrb[0].mxu0 %v770
        %v3581 = vpop.f32.mrb[0].mxu0
        %v3582 = vadd.f32 0.0, %v3581
        %v3583 = vpop.f32.mrb[0].mxu0
        %v3584 = vpop.f32.mrb[0].mxu0
        %v3585 = vadd.f32 0.0, %v3584
        %v3586 = vpop.f32.mrb[0].mxu0
        %3587 = vmatprep.mubr.bf16.mxu0 0
        %3588 = vmatmul.mubr.bf16.gmra.mrb[0].mxu0 %v771
        %v3589 = vpop.f32.mrb[0].mxu0
        %v3590 = vadd.f32 0.0, %v3589
        %v3591 = vpop.f32.mrb[0].mxu0
        %v3592 = vpop.f32.mrb[0].mxu0
        %v3593 = vadd.f32 0.0, %v3592
        %v3594 = vpop.f32.mrb[0].mxu0
        %3595 = vmatprep.mubr.bf16.mxu0 0
        %3596 = vmatmul.mubr.bf16.gmra.mrb[0].mxu0 %v772
        %v3597 = vpop.f32.mrb[0].mxu0
        %v3598 = vadd.f32 0.0, %v3597
        %v3599 = vpop.f32.mrb[0].mxu0
        %v3600 = vpop.f32.mrb[0].mxu0
        %v3601 = vadd.f32 0.0, %v3600
        %v3602 = vpop.f32.mrb[0].mxu0
        %3603 = vmatprep.mubr.bf16.mxu0 0
        %3604 = vmatmul.mubr.bf16.gmra.mrb[0].mxu0 %v773
        %v3605 = vpop.f32.mrb[0].mxu0
        %v3606 = vadd.f32 0.0, %v3605
        %v3607 = vpop.f32.mrb[0].mxu0
        %v3608 = vpop.f32.mrb[0].mxu0
        %v3609 = vadd.f32 0.0, %v3608
        %v3610 = vpop.f32.mrb[0].mxu0
        %3611 = vdwg.mxu0
        %v3612 = vmul.f32 %v3453, %v1862
        %v3613 = vmul.f32 %v3456, %v1867
        %v3614 = vmul.f32 %v3461, %v1872
        %v3615 = vmul.f32 %v3464, %v1877
        %v3616 = vmul.f32 %v3469, %v1882
        %v3617 = vmul.f32 %v3472, %v1887
        %v3618 = vmul.f32 %v3477, %v1892
        %v3619 = vmul.f32 %v3480, %v1897
        %v3620 = vmul.f32 %v3485, %v1902
        %v3621 = vmul.f32 %v3488, %v1907
        %v3622 = vmul.f32 %v3493, %v1912
        %v3623 = vmul.f32 %v3496, %v1917
        %v3624 = vmul.f32 %v3501, %v1922
        %v3625 = vmul.f32 %v3504, %v1927
        %v3626 = vmul.f32 %v3509, %v1932
        %v3627 = vmul.f32 %v3512, %v1937
        %v3628 = vmul.f32 %v3550, %v1942
        %v3629 = vmul.f32 %v3553, %v1947
        %v3630 = vmul.f32 %v3558, %v1952
        %v3631 = vmul.f32 %v3561, %v1957
        %v3632 = vmul.f32 %v3566, %v1962
        %v3633 = vmul.f32 %v3569, %v1967
        %v3634 = vmul.f32 %v3574, %v1972
        %v3635 = vmul.f32 %v3577, %v1977
        %v3636 = vmul.f32 %v3582, %v1982
        %v3637 = vmul.f32 %v3585, %v1987
        %v3638 = vmul.f32 %v3590, %v1992
        %v3639 = vmul.f32 %v3593, %v1997
        %v3640 = vmul.f32 %v3598, %v2002
        %v3641 = vmul.f32 %v3601, %v2007
        %v3642 = vmul.f32 %v3606, %v2012
        %v3643 = vmul.f32 %v3609, %v2017
        %v3644 = vpack.c.bf16 %v3613, %v3612
        %v3645 = vpack.c.bf16 %v3615, %v3614
        %v3646 = vpack.c.bf16 %v3617, %v3616
        %v3647 = vpack.c.bf16 %v3619, %v3618
        %v3648 = vpack.c.bf16 %v3621, %v3620
        %v3649 = vpack.c.bf16 %v3623, %v3622
        %v3650 = vpack.c.bf16 %v3625, %v3624
        %v3651 = vpack.c.bf16 %v3627, %v3626
        %v3652 = vpack.c.bf16 %v3629, %v3628
        %v3653 = vpack.c.bf16 %v3631, %v3630
        %v3654 = vpack.c.bf16 %v3633, %v3632
        %v3655 = vpack.c.bf16 %v3635, %v3634
        %v3656 = vpack.c.bf16 %v3637, %v3636
        %v3657 = vpack.c.bf16 %v3639, %v3638
        %v3658 = vpack.c.bf16 %v3641, %v3640
        %v3659 = vpack.c.bf16 %v3643, %v3642
        %s3660 = scalar_lea.vmem %s4, 32
        %v3661 = vld [vmem:[%s3660] sm:$0xf]
        %v3662 = vld [vmem:[%s3660 + $0x4] sm:$0xf]
        %v3663 = vld [vmem:[%s3660 + $0x8] sm:$0xf]
        %v3664 = vld [vmem:[%s3660 + $0xc] sm:$0xf]
        %s3665 = scalar_lea.vmem %s5, 2
        %v3666 = vld [vmem:[%s3665] sm:$0x1]
        %v3668 = vlaneseq
        %v3669 = vshrl.u32 %v3668, 7
        %v3670 = vsub.s32 0, %v3669
        %v3671 = vrot.slane %v3666, %v3670
        %v3677 = vunpack.c.l.b16 %v3661
        %v3678 = vunpack.c.l.b16 %v3662
        %v3679 = vunpack.c.l.b16 %v3663
        %v3680 = vunpack.c.l.b16 %v3664
        %v3681 = vpack.c.b16 %v3678, %v3677
        %v3682 = vpack.c.b16 %v3680, %v3679
        %v3686 = vsel %vm2090, %v3644, 0
        %v3689 = vsel %vm2090, %v3645, 0
        %v3692 = vsel %vm2090, %v3646, 0
        %v3695 = vsel %vm2090, %v3647, 0
        %v3698 = vsel %vm2090, %v3648, 0
        %v3701 = vsel %vm2090, %v3649, 0
        %v3704 = vsel %vm2090, %v3650, 0
        %v3707 = vsel %vm2090, %v3651, 0
        %v3710 = vsel %vm2090, %v3652, 0
        %v3713 = vsel %vm2090, %v3653, 0
        %v3716 = vsel %vm2090, %v3654, 0
        %v3719 = vsel %vm2090, %v3655, 0
        %v3722 = vsel %vm2090, %v3656, 0
        %v3725 = vsel %vm2090, %v3657, 0
        %v3728 = vsel %vm2090, %v3658, 0
        %v3731 = vsel %vm2090, %v3659, 0
        %3733 = vmatprep.subr.bf16.mxu0 0
        %3734 = vmatpush1.bf16.msra.mxu0 %v3681
        %3735 = vmatprep.subr.bf16.mxu0 0
        %3736 = vmatpush1.bf16.msra.mxu0 %v3682
        %3737 = vmatprep.subr.bf16.mxu0 0
        %3738 = vmatpush1.bf16.msra.mxu0 0
        %3739 = vmatprep.subr.bf16.mxu0 0
        %3740 = vmatpush1.bf16.msra.mxu0 0
        %3741 = vmatprep.subr.bf16.mxu0 0
        %3742 = vmatpush1.bf16.msra.mxu0 0
        %3743 = vmatprep.subr.bf16.mxu0 0
        %3744 = vmatpush1.bf16.msra.mxu0 0
        %3745 = vmatprep.subr.bf16.mxu0 0
        %3746 = vmatpush1.bf16.msra.mxu0 0
        %3747 = vmatprep.subr.bf16.mxu0 0
        %3748 = vmatpush1.bf16.msra.mxu0 0
        %3749 = vmatprep.subr.bf16.mxu0 0
        %3750 = vmatpush1.bf16.msra.mxu0 0
        %3751 = vmatprep.subr.bf16.mxu0 0
        %3752 = vmatpush1.bf16.msra.mxu0 0
        %3753 = vmatprep.subr.bf16.mxu0 0
        %3754 = vmatpush1.bf16.msra.mxu0 0
        %3755 = vmatprep.subr.bf16.mxu0 0
        %3756 = vmatpush1.bf16.msra.mxu0 0
        %3757 = vmatprep.subr.bf16.mxu0 0
        %3758 = vmatpush1.bf16.msra.mxu0 0
        %3759 = vmatprep.subr.bf16.mxu0 0
        %3760 = vmatpush1.bf16.msra.mxu0 0
        %3761 = vmatprep.subr.bf16.mxu0 0
        %3762 = vmatpush1.bf16.msra.mxu0 0
        %3763 = vmatprep.subr.bf16.mxu0 0
        %3764 = vmatpush1.bf16.msra.mxu0 0
        %3765 = vmatprep.mubr.bf16.mxu0 0
        %3766 = vmatmul.mubr.bf16.gmra.mrb[0].mxu0 %v3686
        %v3767 = vpop.f32.mrb[0].mxu0
        %v3768 = vadd.f32 %v3671, %v3767
        %v3769 = vpop.f32.mrb[0].mxu0
        %v3770 = vpop.f32.mrb[0].mxu0
        %v3771 = vadd.f32 %v3671, %v3770
        %v3772 = vpop.f32.mrb[0].mxu0
        %3773 = vmatprep.mubr.bf16.mxu0 0
        %3774 = vmatmul.mubr.bf16.gmra.mrb[0].mxu0 %v3689
        %v3775 = vpop.f32.mrb[0].mxu0
        %v3776 = vadd.f32 %v3671, %v3775
        %v3777 = vpop.f32.mrb[0].mxu0
        %v3778 = vpop.f32.mrb[0].mxu0
        %v3779 = vadd.f32 %v3671, %v3778
        %v3780 = vpop.f32.mrb[0].mxu0
        %3781 = vmatprep.mubr.bf16.mxu0 0
        %3782 = vmatmul.mubr.bf16.gmra.mrb[0].mxu0 %v3692
        %v3783 = vpop.f32.mrb[0].mxu0
        %v3784 = vadd.f32 %v3671, %v3783
        %v3785 = vpop.f32.mrb[0].mxu0
        %v3786 = vpop.f32.mrb[0].mxu0
        %v3787 = vadd.f32 %v3671, %v3786
        %v3788 = vpop.f32.mrb[0].mxu0
        %3789 = vmatprep.mubr.bf16.mxu0 0
        %3790 = vmatmul.mubr.bf16.gmra.mrb[0].mxu0 %v3695
        %v3791 = vpop.f32.mrb[0].mxu0
        %v3792 = vadd.f32 %v3671, %v3791
        %v3793 = vpop.f32.mrb[0].mxu0
        %v3794 = vpop.f32.mrb[0].mxu0
        %v3795 = vadd.f32 %v3671, %v3794
        %v3796 = vpop.f32.mrb[0].mxu0
        %3797 = vmatprep.mubr.bf16.mxu0 0
        %3798 = vmatmul.mubr.bf16.gmra.mrb[0].mxu0 %v3698
        %v3799 = vpop.f32.mrb[0].mxu0
        %v3800 = vadd.f32 %v3671, %v3799
        %v3801 = vpop.f32.mrb[0].mxu0
        %v3802 = vpop.f32.mrb[0].mxu0
        %v3803 = vadd.f32 %v3671, %v3802
        %v3804 = vpop.f32.mrb[0].mxu0
        %3805 = vmatprep.mubr.bf16.mxu0 0
        %3806 = vmatmul.mubr.bf16.gmra.mrb[0].mxu0 %v3701
        %v3807 = vpop.f32.mrb[0].mxu0
        %v3808 = vadd.f32 %v3671, %v3807
        %v3809 = vpop.f32.mrb[0].mxu0
        %v3810 = vpop.f32.mrb[0].mxu0
        %v3811 = vadd.f32 %v3671, %v3810
        %v3812 = vpop.f32.mrb[0].mxu0
        %3813 = vmatprep.mubr.bf16.mxu0 0
        %3814 = vmatmul.mubr.bf16.gmra.mrb[0].mxu0 %v3704
        %v3815 = vpop.f32.mrb[0].mxu0
        %v3816 = vadd.f32 %v3671, %v3815
        %v3817 = vpop.f32.mrb[0].mxu0
        %v3818 = vpop.f32.mrb[0].mxu0
        %v3819 = vadd.f32 %v3671, %v3818
        %v3820 = vpop.f32.mrb[0].mxu0
        %3821 = vmatprep.mubr.bf16.mxu0 0
        %3822 = vmatmul.mubr.bf16.gmra.mrb[0].mxu0 %v3707
        %v3823 = vpop.f32.mrb[0].mxu0
        %v3824 = vadd.f32 %v3671, %v3823
        %v3825 = vpop.f32.mrb[0].mxu0
        %v3826 = vpop.f32.mrb[0].mxu0
        %v3827 = vadd.f32 %v3671, %v3826
        %v3828 = vpop.f32.mrb[0].mxu0
        %3829 = vmatprep.mubr.bf16.mxu0 0
        %3830 = vmatmul.mubr.bf16.gmra.mrb[0].mxu0 %v3710
        %v3831 = vpop.f32.mrb[0].mxu0
        %v3832 = vadd.f32 %v3671, %v3831
        %v3833 = vpop.f32.mrb[0].mxu0
        %v3834 = vpop.f32.mrb[0].mxu0
        %v3835 = vadd.f32 %v3671, %v3834
        %v3836 = vpop.f32.mrb[0].mxu0
        %3837 = vmatprep.mubr.bf16.mxu0 0
        %3838 = vmatmul.mubr.bf16.gmra.mrb[0].mxu0 %v3713
        %v3839 = vpop.f32.mrb[0].mxu0
        %v3840 = vadd.f32 %v3671, %v3839
        %v3841 = vpop.f32.mrb[0].mxu0
        %v3842 = vpop.f32.mrb[0].mxu0
        %v3843 = vadd.f32 %v3671, %v3842
        %v3844 = vpop.f32.mrb[0].mxu0
        %3845 = vmatprep.mubr.bf16.mxu0 0
        %3846 = vmatmul.mubr.bf16.gmra.mrb[0].mxu0 %v3716
        %v3847 = vpop.f32.mrb[0].mxu0
        %v3848 = vadd.f32 %v3671, %v3847
        %v3849 = vpop.f32.mrb[0].mxu0
        %v3850 = vpop.f32.mrb[0].mxu0
        %v3851 = vadd.f32 %v3671, %v3850
        %v3852 = vpop.f32.mrb[0].mxu0
        %3853 = vmatprep.mubr.bf16.mxu0 0
        %3854 = vmatmul.mubr.bf16.gmra.mrb[0].mxu0 %v3719
        %v3855 = vpop.f32.mrb[0].mxu0
        %v3856 = vadd.f32 %v3671, %v3855
        %v3857 = vpop.f32.mrb[0].mxu0
        %v3858 = vpop.f32.mrb[0].mxu0
        %v3859 = vadd.f32 %v3671, %v3858
        %v3860 = vpop.f32.mrb[0].mxu0
        %3861 = vmatprep.mubr.bf16.mxu0 0
        %3862 = vmatmul.mubr.bf16.gmra.mrb[0].mxu0 %v3722
        %v3863 = vpop.f32.mrb[0].mxu0
        %v3864 = vadd.f32 %v3671, %v3863
        %v3865 = vpop.f32.mrb[0].mxu0
        %v3866 = vpop.f32.mrb[0].mxu0
        %v3867 = vadd.f32 %v3671, %v3866
        %v3868 = vpop.f32.mrb[0].mxu0
        %3869 = vmatprep.mubr.bf16.mxu0 0
        %3870 = vmatmul.mubr.bf16.gmra.mrb[0].mxu0 %v3725
        %v3871 = vpop.f32.mrb[0].mxu0
        %v3872 = vadd.f32 %v3671, %v3871
        %v3873 = vpop.f32.mrb[0].mxu0
        %v3874 = vpop.f32.mrb[0].mxu0
        %v3875 = vadd.f32 %v3671, %v3874
        %v3876 = vpop.f32.mrb[0].mxu0
        %3877 = vmatprep.mubr.bf16.mxu0 0
        %3878 = vmatmul.mubr.bf16.gmra.mrb[0].mxu0 %v3728
        %v3879 = vpop.f32.mrb[0].mxu0
        %v3880 = vadd.f32 %v3671, %v3879
        %v3881 = vpop.f32.mrb[0].mxu0
        %v3882 = vpop.f32.mrb[0].mxu0
        %v3883 = vadd.f32 %v3671, %v3882
        %v3884 = vpop.f32.mrb[0].mxu0
        %3885 = vmatprep.mubr.bf16.mxu0 0
        %3886 = vmatmul.mubr.bf16.gmra.mrb[0].mxu0 %v3731
        %v3887 = vpop.f32.mrb[0].mxu0
        %v3888 = vadd.f32 %v3671, %v3887
        %v3889 = vpop.f32.mrb[0].mxu0
        %v3890 = vpop.f32.mrb[0].mxu0
        %v3891 = vadd.f32 %v3671, %v3890
        %v3892 = vpop.f32.mrb[0].mxu0
        %3893 = vdwg.mxu0
        %v3894 = vmax.f32 %v3768, 0.0
        %v3895 = vmax.f32 %v3771, 0.0
        %v3896 = vmax.f32 %v3776, 0.0
        %v3897 = vmax.f32 %v3779, 0.0
        %v3898 = vmax.f32 %v3784, 0.0
        %v3899 = vmax.f32 %v3787, 0.0
        %v3900 = vmax.f32 %v3792, 0.0
        %v3901 = vmax.f32 %v3795, 0.0
        %v3902 = vmax.f32 %v3800, 0.0
        %v3903 = vmax.f32 %v3803, 0.0
        %v3904 = vmax.f32 %v3808, 0.0
        %v3905 = vmax.f32 %v3811, 0.0
        %v3906 = vmax.f32 %v3816, 0.0
        %v3907 = vmax.f32 %v3819, 0.0
        %v3908 = vmax.f32 %v3824, 0.0
        %v3909 = vmax.f32 %v3827, 0.0
        %v3910 = vmax.f32 %v3832, 0.0
        %v3911 = vmax.f32 %v3835, 0.0
        %v3912 = vmax.f32 %v3840, 0.0
        %v3913 = vmax.f32 %v3843, 0.0
        %v3914 = vmax.f32 %v3848, 0.0
        %v3915 = vmax.f32 %v3851, 0.0
        %v3916 = vmax.f32 %v3856, 0.0
        %v3917 = vmax.f32 %v3859, 0.0
        %v3918 = vmax.f32 %v3864, 0.0
        %v3919 = vmax.f32 %v3867, 0.0
        %v3920 = vmax.f32 %v3872, 0.0
        %v3921 = vmax.f32 %v3875, 0.0
        %v3922 = vmax.f32 %v3880, 0.0
        %v3923 = vmax.f32 %v3883, 0.0
        %v3924 = vmax.f32 %v3888, 0.0
        %v3925 = vmax.f32 %v3891, 0.0
        %v3926 = vpack.c.bf16 %v3895, %v3894
        %v3927 = vpack.c.bf16 %v3897, %v3896
        %v3928 = vpack.c.bf16 %v3899, %v3898
        %v3929 = vpack.c.bf16 %v3901, %v3900
        %v3930 = vpack.c.bf16 %v3903, %v3902
        %v3931 = vpack.c.bf16 %v3905, %v3904
        %v3932 = vpack.c.bf16 %v3907, %v3906
        %v3933 = vpack.c.bf16 %v3909, %v3908
        %v3934 = vpack.c.bf16 %v3911, %v3910
        %v3935 = vpack.c.bf16 %v3913, %v3912
        %v3936 = vpack.c.bf16 %v3915, %v3914
        %v3937 = vpack.c.bf16 %v3917, %v3916
        %v3938 = vpack.c.bf16 %v3919, %v3918
        %v3939 = vpack.c.bf16 %v3921, %v3920
        %v3940 = vpack.c.bf16 %v3923, %v3922
        %v3941 = vpack.c.bf16 %v3925, %v3924
        %v3942 = vld [vmem:[%s6 + $0x20] sm:$0xf]
        %v3943 = vld [vmem:[%s6 + $0x24] sm:$0xf]
        %v3944 = vld [vmem:[%s6 + $0x28] sm:$0xf]
        %v3945 = vld [vmem:[%s6 + $0x2c] sm:$0xf]
        %v3950 = vunpack.c.l.b16 %v3942
        %v3951 = vunpack.c.l.b16 %v3943
        %v3952 = vunpack.c.l.b16 %v3944
        %v3953 = vunpack.c.l.b16 %v3945
        %v3954 = vpack.c.b16 %v3951, %v3950
        %v3955 = vpack.c.b16 %v3953, %v3952
        %v3959 = vsel %vm2090, %v3926, 0
        %v3962 = vsel %vm2090, %v3927, 0
        %v3965 = vsel %vm2090, %v3928, 0
        %v3968 = vsel %vm2090, %v3929, 0
        %v3971 = vsel %vm2090, %v3930, 0
        %v3974 = vsel %vm2090, %v3931, 0
        %v3977 = vsel %vm2090, %v3932, 0
        %v3980 = vsel %vm2090, %v3933, 0
        %v3983 = vsel %vm2090, %v3934, 0
        %v3986 = vsel %vm2090, %v3935, 0
        %v3989 = vsel %vm2090, %v3936, 0
        %v3992 = vsel %vm2090, %v3937, 0
        %v3995 = vsel %vm2090, %v3938, 0
        %v3998 = vsel %vm2090, %v3939, 0
        %v4001 = vsel %vm2090, %v3940, 0
        %v4004 = vsel %vm2090, %v3941, 0
        %4006 = vmatprep.subr.bf16.mxu0 0
        %4007 = vmatpush1.bf16.msra.mxu0 %v3954
        %4008 = vmatprep.subr.bf16.mxu0 0
        %4009 = vmatpush1.bf16.msra.mxu0 %v3955
        %4010 = vmatprep.subr.bf16.mxu0 0
        %4011 = vmatpush1.bf16.msra.mxu0 0
        %4012 = vmatprep.subr.bf16.mxu0 0
        %4013 = vmatpush1.bf16.msra.mxu0 0
        %4014 = vmatprep.subr.bf16.mxu0 0
        %4015 = vmatpush1.bf16.msra.mxu0 0
        %4016 = vmatprep.subr.bf16.mxu0 0
        %4017 = vmatpush1.bf16.msra.mxu0 0
        %4018 = vmatprep.subr.bf16.mxu0 0
        %4019 = vmatpush1.bf16.msra.mxu0 0
        %4020 = vmatprep.subr.bf16.mxu0 0
        %4021 = vmatpush1.bf16.msra.mxu0 0
        %4022 = vmatprep.subr.bf16.mxu0 0
        %4023 = vmatpush1.bf16.msra.mxu0 0
        %4024 = vmatprep.subr.bf16.mxu0 0
        %4025 = vmatpush1.bf16.msra.mxu0 0
        %4026 = vmatprep.subr.bf16.mxu0 0
        %4027 = vmatpush1.bf16.msra.mxu0 0
        %4028 = vmatprep.subr.bf16.mxu0 0
        %4029 = vmatpush1.bf16.msra.mxu0 0
        %4030 = vmatprep.subr.bf16.mxu0 0
        %4031 = vmatpush1.bf16.msra.mxu0 0
        %4032 = vmatprep.subr.bf16.mxu0 0
        %4033 = vmatpush1.bf16.msra.mxu0 0
        %4034 = vmatprep.subr.bf16.mxu0 0
        %4035 = vmatpush1.bf16.msra.mxu0 0
        %4036 = vmatprep.subr.bf16.mxu0 0
        %4037 = vmatpush1.bf16.msra.mxu0 0
        %4038 = vmatprep.mubr.bf16.mxu0 0
        %4039 = vmatmul.mubr.bf16.gmra.mrb[0].mxu0 %v3959
        %v4040 = vpop.f32.mrb[0].mxu0
        %v4041 = vadd.f32 0.0, %v4040
        %v4042 = vpop.f32.mrb[0].mxu0
        %v4043 = vpop.f32.mrb[0].mxu0
        %v4044 = vadd.f32 0.0, %v4043
        %v4045 = vpop.f32.mrb[0].mxu0
        %4046 = vmatprep.mubr.bf16.mxu0 0
        %4047 = vmatmul.mubr.bf16.gmra.mrb[0].mxu0 %v3962
        %v4048 = vpop.f32.mrb[0].mxu0
        %v4049 = vadd.f32 0.0, %v4048
        %v4050 = vpop.f32.mrb[0].mxu0
        %v4051 = vpop.f32.mrb[0].mxu0
        %v4052 = vadd.f32 0.0, %v4051
        %v4053 = vpop.f32.mrb[0].mxu0
        %4054 = vmatprep.mubr.bf16.mxu0 0
        %4055 = vmatmul.mubr.bf16.gmra.mrb[0].mxu0 %v3965
        %v4056 = vpop.f32.mrb[0].mxu0
        %v4057 = vadd.f32 0.0, %v4056
        %v4058 = vpop.f32.mrb[0].mxu0
        %v4059 = vpop.f32.mrb[0].mxu0
        %v4060 = vadd.f32 0.0, %v4059
        %v4061 = vpop.f32.mrb[0].mxu0
        %4062 = vmatprep.mubr.bf16.mxu0 0
        %4063 = vmatmul.mubr.bf16.gmra.mrb[0].mxu0 %v3968
        %v4064 = vpop.f32.mrb[0].mxu0
        %v4065 = vadd.f32 0.0, %v4064
        %v4066 = vpop.f32.mrb[0].mxu0
        %v4067 = vpop.f32.mrb[0].mxu0
        %v4068 = vadd.f32 0.0, %v4067
        %v4069 = vpop.f32.mrb[0].mxu0
        %4070 = vmatprep.mubr.bf16.mxu0 0
        %4071 = vmatmul.mubr.bf16.gmra.mrb[0].mxu0 %v3971
        %v4072 = vpop.f32.mrb[0].mxu0
        %v4073 = vadd.f32 0.0, %v4072
        %v4074 = vpop.f32.mrb[0].mxu0
        %v4075 = vpop.f32.mrb[0].mxu0
        %v4076 = vadd.f32 0.0, %v4075
        %v4077 = vpop.f32.mrb[0].mxu0
        %4078 = vmatprep.mubr.bf16.mxu0 0
        %4079 = vmatmul.mubr.bf16.gmra.mrb[0].mxu0 %v3974
        %v4080 = vpop.f32.mrb[0].mxu0
        %v4081 = vadd.f32 0.0, %v4080
        %v4082 = vpop.f32.mrb[0].mxu0
        %v4083 = vpop.f32.mrb[0].mxu0
        %v4084 = vadd.f32 0.0, %v4083
        %v4085 = vpop.f32.mrb[0].mxu0
        %4086 = vmatprep.mubr.bf16.mxu0 0
        %4087 = vmatmul.mubr.bf16.gmra.mrb[0].mxu0 %v3977
        %v4088 = vpop.f32.mrb[0].mxu0
        %v4089 = vadd.f32 0.0, %v4088
        %v4090 = vpop.f32.mrb[0].mxu0
        %v4091 = vpop.f32.mrb[0].mxu0
        %v4092 = vadd.f32 0.0, %v4091
        %v4093 = vpop.f32.mrb[0].mxu0
        %4094 = vmatprep.mubr.bf16.mxu0 0
        %4095 = vmatmul.mubr.bf16.gmra.mrb[0].mxu0 %v3980
        %v4096 = vpop.f32.mrb[0].mxu0
        %v4097 = vadd.f32 0.0, %v4096
        %v4098 = vpop.f32.mrb[0].mxu0
        %v4099 = vpop.f32.mrb[0].mxu0
        %v4100 = vadd.f32 0.0, %v4099
        %v4101 = vpop.f32.mrb[0].mxu0
        %4102 = vmatprep.mubr.bf16.mxu0 0
        %4103 = vmatmul.mubr.bf16.gmra.mrb[0].mxu0 %v3983
        %v4104 = vpop.f32.mrb[0].mxu0
        %v4105 = vadd.f32 0.0, %v4104
        %v4106 = vpop.f32.mrb[0].mxu0
        %v4107 = vpop.f32.mrb[0].mxu0
        %v4108 = vadd.f32 0.0, %v4107
        %v4109 = vpop.f32.mrb[0].mxu0
        %4110 = vmatprep.mubr.bf16.mxu0 0
        %4111 = vmatmul.mubr.bf16.gmra.mrb[0].mxu0 %v3986
        %v4112 = vpop.f32.mrb[0].mxu0
        %v4113 = vadd.f32 0.0, %v4112
        %v4114 = vpop.f32.mrb[0].mxu0
        %v4115 = vpop.f32.mrb[0].mxu0
        %v4116 = vadd.f32 0.0, %v4115
        %v4117 = vpop.f32.mrb[0].mxu0
        %4118 = vmatprep.mubr.bf16.mxu0 0
        %4119 = vmatmul.mubr.bf16.gmra.mrb[0].mxu0 %v3989
        %v4120 = vpop.f32.mrb[0].mxu0
        %v4121 = vadd.f32 0.0, %v4120
        %v4122 = vpop.f32.mrb[0].mxu0
        %v4123 = vpop.f32.mrb[0].mxu0
        %v4124 = vadd.f32 0.0, %v4123
        %v4125 = vpop.f32.mrb[0].mxu0
        %4126 = vmatprep.mubr.bf16.mxu0 0
        %4127 = vmatmul.mubr.bf16.gmra.mrb[0].mxu0 %v3992
        %v4128 = vpop.f32.mrb[0].mxu0
        %v4129 = vadd.f32 0.0, %v4128
        %v4130 = vpop.f32.mrb[0].mxu0
        %v4131 = vpop.f32.mrb[0].mxu0
        %v4132 = vadd.f32 0.0, %v4131
        %v4133 = vpop.f32.mrb[0].mxu0
        %4134 = vmatprep.mubr.bf16.mxu0 0
        %4135 = vmatmul.mubr.bf16.gmra.mrb[0].mxu0 %v3995
        %v4136 = vpop.f32.mrb[0].mxu0
        %v4137 = vadd.f32 0.0, %v4136
        %v4138 = vpop.f32.mrb[0].mxu0
        %v4139 = vpop.f32.mrb[0].mxu0
        %v4140 = vadd.f32 0.0, %v4139
        %v4141 = vpop.f32.mrb[0].mxu0
        %4142 = vmatprep.mubr.bf16.mxu0 0
        %4143 = vmatmul.mubr.bf16.gmra.mrb[0].mxu0 %v3998
        %v4144 = vpop.f32.mrb[0].mxu0
        %v4145 = vadd.f32 0.0, %v4144
        %v4146 = vpop.f32.mrb[0].mxu0
        %v4147 = vpop.f32.mrb[0].mxu0
        %v4148 = vadd.f32 0.0, %v4147
        %v4149 = vpop.f32.mrb[0].mxu0
        %4150 = vmatprep.mubr.bf16.mxu0 0
        %4151 = vmatmul.mubr.bf16.gmra.mrb[0].mxu0 %v4001
        %v4152 = vpop.f32.mrb[0].mxu0
        %v4153 = vadd.f32 0.0, %v4152
        %v4154 = vpop.f32.mrb[0].mxu0
        %v4155 = vpop.f32.mrb[0].mxu0
        %v4156 = vadd.f32 0.0, %v4155
        %v4157 = vpop.f32.mrb[0].mxu0
        %4158 = vmatprep.mubr.bf16.mxu0 0
        %4159 = vmatmul.mubr.bf16.gmra.mrb[0].mxu0 %v4004
        %v4160 = vpop.f32.mrb[0].mxu0
        %v4161 = vadd.f32 0.0, %v4160
        %v4162 = vpop.f32.mrb[0].mxu0
        %v4163 = vpop.f32.mrb[0].mxu0
        %v4164 = vadd.f32 0.0, %v4163
        %v4165 = vpop.f32.mrb[0].mxu0
        %4166 = vdwg.mxu0
        %v4167 = vadd.f32 %v3244, %v4041
        %v4168 = vadd.f32 %v3247, %v4044
        %v4169 = vadd.f32 %v3252, %v4049
        %v4170 = vadd.f32 %v3255, %v4052
        %v4171 = vadd.f32 %v3260, %v4057
        %v4172 = vadd.f32 %v3263, %v4060
        %v4173 = vadd.f32 %v3268, %v4065
        %v4174 = vadd.f32 %v3271, %v4068
        %v4175 = vadd.f32 %v3276, %v4073
        %v4176 = vadd.f32 %v3279, %v4076
        %v4177 = vadd.f32 %v3284, %v4081
        %v4178 = vadd.f32 %v3287, %v4084
        %v4179 = vadd.f32 %v3292, %v4089
        %v4180 = vadd.f32 %v3295, %v4092
        %v4181 = vadd.f32 %v3300, %v4097
        %v4182 = vadd.f32 %v3303, %v4100
        %v4183 = vadd.f32 %v3308, %v4105
        %v4184 = vadd.f32 %v3311, %v4108
        %v4185 = vadd.f32 %v3316, %v4113
        %v4186 = vadd.f32 %v3319, %v4116
        %v4187 = vadd.f32 %v3324, %v4121
        %v4188 = vadd.f32 %v3327, %v4124
        %v4189 = vadd.f32 %v3332, %v4129
        %v4190 = vadd.f32 %v3335, %v4132
        %v4191 = vadd.f32 %v3340, %v4137
        %v4192 = vadd.f32 %v3343, %v4140
        %v4193 = vadd.f32 %v3348, %v4145
        %v4194 = vadd.f32 %v3351, %v4148
        %v4195 = vadd.f32 %v3356, %v4153
        %v4196 = vadd.f32 %v3359, %v4156
        %v4197 = vadd.f32 %v3364, %v4161
        %v4198 = vadd.f32 %v3367, %v4164
        %v4199 = vld [vmem:[%s7] sm:$0x1]
        %v4201 = vlaneseq
        %v4202 = vshrl.u32 %v4201, 7
        %v4203 = vsub.s32 0, %v4202
        %v4204 = vrot.slane %v4199, %v4203
        %v4206 = vadd.f32 %v4167, %v4204
        %v4207 = vadd.f32 %v4168, %v4204
        %v4208 = vadd.f32 %v4169, %v4204
        %v4209 = vadd.f32 %v4170, %v4204
        %v4210 = vadd.f32 %v4171, %v4204
        %v4211 = vadd.f32 %v4172, %v4204
        %v4212 = vadd.f32 %v4173, %v4204
        %v4213 = vadd.f32 %v4174, %v4204
        %v4214 = vadd.f32 %v4175, %v4204
        %v4215 = vadd.f32 %v4176, %v4204
        %v4216 = vadd.f32 %v4177, %v4204
        %v4217 = vadd.f32 %v4178, %v4204
        %v4218 = vadd.f32 %v4179, %v4204
        %v4219 = vadd.f32 %v4180, %v4204
        %v4220 = vadd.f32 %v4181, %v4204
        %v4221 = vadd.f32 %v4182, %v4204
        %v4222 = vadd.f32 %v4183, %v4204
        %v4223 = vadd.f32 %v4184, %v4204
        %v4224 = vadd.f32 %v4185, %v4204
        %v4225 = vadd.f32 %v4186, %v4204
        %v4226 = vadd.f32 %v4187, %v4204
        %v4227 = vadd.f32 %v4188, %v4204
        %v4228 = vadd.f32 %v4189, %v4204
        %v4229 = vadd.f32 %v4190, %v4204
        %v4230 = vadd.f32 %v4191, %v4204
        %v4231 = vadd.f32 %v4192, %v4204
        %v4232 = vadd.f32 %v4193, %v4204
        %v4233 = vadd.f32 %v4194, %v4204
        %v4234 = vadd.f32 %v4195, %v4204
        %v4235 = vadd.f32 %v4196, %v4204
        %v4236 = vadd.f32 %v4197, %v4204
        %v4237 = vadd.f32 %v4198, %v4204
        %v4238 = vmax.f32 %v4206, 0.0
        %v4239 = vmax.f32 %v4207, 0.0
        %v4240 = vmax.f32 %v4208, 0.0
        %v4241 = vmax.f32 %v4209, 0.0
        %v4242 = vmax.f32 %v4210, 0.0
        %v4243 = vmax.f32 %v4211, 0.0
        %v4244 = vmax.f32 %v4212, 0.0
        %v4245 = vmax.f32 %v4213, 0.0
        %v4246 = vmax.f32 %v4214, 0.0
        %v4247 = vmax.f32 %v4215, 0.0
        %v4248 = vmax.f32 %v4216, 0.0
        %v4249 = vmax.f32 %v4217, 0.0
        %v4250 = vmax.f32 %v4218, 0.0
        %v4251 = vmax.f32 %v4219, 0.0
        %v4252 = vmax.f32 %v4220, 0.0
        %v4253 = vmax.f32 %v4221, 0.0
        %v4254 = vmax.f32 %v4222, 0.0
        %v4255 = vmax.f32 %v4223, 0.0
        %v4256 = vmax.f32 %v4224, 0.0
        %v4257 = vmax.f32 %v4225, 0.0
        %v4258 = vmax.f32 %v4226, 0.0
        %v4259 = vmax.f32 %v4227, 0.0
        %v4260 = vmax.f32 %v4228, 0.0
        %v4261 = vmax.f32 %v4229, 0.0
        %v4262 = vmax.f32 %v4230, 0.0
        %v4263 = vmax.f32 %v4231, 0.0
        %v4264 = vmax.f32 %v4232, 0.0
        %v4265 = vmax.f32 %v4233, 0.0
        %v4266 = vmax.f32 %v4234, 0.0
        %v4267 = vmax.f32 %v4235, 0.0
        %v4268 = vmax.f32 %v4236, 0.0
        %v4269 = vmax.f32 %v4237, 0.0
        %v4270 = vpack.c.bf16 %v4239, %v4238
        %v4271 = vpack.c.bf16 %v4241, %v4240
        %v4272 = vpack.c.bf16 %v4243, %v4242
        %v4273 = vpack.c.bf16 %v4245, %v4244
        %v4274 = vpack.c.bf16 %v4247, %v4246
        %v4275 = vpack.c.bf16 %v4249, %v4248
        %v4276 = vpack.c.bf16 %v4251, %v4250
        %v4277 = vpack.c.bf16 %v4253, %v4252
        %v4278 = vpack.c.bf16 %v4255, %v4254
        %v4279 = vpack.c.bf16 %v4257, %v4256
        %v4280 = vpack.c.bf16 %v4259, %v4258
        %v4281 = vpack.c.bf16 %v4261, %v4260
        %v4282 = vpack.c.bf16 %v4263, %v4262
        %v4283 = vpack.c.bf16 %v4265, %v4264
        %v4284 = vpack.c.bf16 %v4267, %v4266
        %v4285 = vpack.c.bf16 %v4269, %v4268
        %v4286 = vld [vmem:[%s8] sm:$0xf]
        %v4287 = vld [vmem:[%s8 + $0x4] sm:$0xf]
        %v4288 = vld [vmem:[%s8 + $0x8] sm:$0xf]
        %v4289 = vld [vmem:[%s8 + $0xc] sm:$0xf]
        %v4290 = vld [vmem:[%s8 + $0x10] sm:$0xf]
        %v4291 = vld [vmem:[%s8 + $0x14] sm:$0xf]
        %v4292 = vld [vmem:[%s8 + $0x18] sm:$0xf]
        %v4293 = vld [vmem:[%s8 + $0x1c] sm:$0xf]
        %v4294 = vld [vmem:[%s9] sm:$0x1]
        %v4296 = vlaneseq
        %v4297 = vshrl.u32 %v4296, 7
        %v4298 = vsub.s32 0, %v4297
        %v4299 = vrot.slane %v4294, %v4298
        %v4309 = vunpack.c.l.b16 %v4286
        %v4310 = vunpack.c.l.b16 %v4287
        %v4311 = vunpack.c.l.b16 %v4288
        %v4312 = vunpack.c.l.b16 %v4289
        %v4313 = vunpack.c.l.b16 %v4290
        %v4314 = vunpack.c.l.b16 %v4291
        %v4315 = vunpack.c.l.b16 %v4292
        %v4316 = vunpack.c.l.b16 %v4293
        %v4317 = vpack.c.b16 %v4310, %v4309
        %v4318 = vpack.c.b16 %v4312, %v4311
        %v4319 = vpack.c.b16 %v4314, %v4313
        %v4320 = vpack.c.b16 %v4316, %v4315
        %vm4325 = vcmask 523264
        %v4327 = vsel %vm4325, %v4270, 0
        %v4330 = vsel %vm4325, %v4271, 0
        %v4333 = vsel %vm4325, %v4272, 0
        %v4336 = vsel %vm4325, %v4273, 0
        %v4339 = vsel %vm4325, %v4274, 0
        %v4342 = vsel %vm4325, %v4275, 0
        %v4345 = vsel %vm4325, %v4276, 0
        %v4348 = vsel %vm4325, %v4277, 0
        %v4351 = vsel %vm4325, %v4278, 0
        %v4354 = vsel %vm4325, %v4279, 0
        %v4357 = vsel %vm4325, %v4280, 0
        %v4360 = vsel %vm4325, %v4281, 0
        %v4363 = vsel %vm4325, %v4282, 0
        %v4366 = vsel %vm4325, %v4283, 0
        %v4369 = vsel %vm4325, %v4284, 0
        %v4372 = vsel %vm4325, %v4285, 0
        %4374 = vmatprep.subr.bf16.mxu0 0
        %4375 = vmatpush1.bf16.msra.mxu0 %v4317
        %4376 = vmatprep.subr.bf16.mxu0 0
        %4377 = vmatpush1.bf16.msra.mxu0 %v4318
        %4378 = vmatprep.subr.bf16.mxu0 0
        %4379 = vmatpush1.bf16.msra.mxu0 %v4319
        %4380 = vmatprep.subr.bf16.mxu0 0
        %4381 = vmatpush1.bf16.msra.mxu0 %v4320
        %4382 = vmatprep.subr.bf16.mxu0 0
        %4383 = vmatpush1.bf16.msra.mxu0 0
        %4384 = vmatprep.subr.bf16.mxu0 0
        %4385 = vmatpush1.bf16.msra.mxu0 0
        %4386 = vmatprep.subr.bf16.mxu0 0
        %4387 = vmatpush1.bf16.msra.mxu0 0
        %4388 = vmatprep.subr.bf16.mxu0 0
        %4389 = vmatpush1.bf16.msra.mxu0 0
        %4390 = vmatprep.subr.bf16.mxu0 0
        %4391 = vmatpush1.bf16.msra.mxu0 0
        %4392 = vmatprep.subr.bf16.mxu0 0
        %4393 = vmatpush1.bf16.msra.mxu0 0
        %4394 = vmatprep.subr.bf16.mxu0 0
        %4395 = vmatpush1.bf16.msra.mxu0 0
        %4396 = vmatprep.subr.bf16.mxu0 0
        %4397 = vmatpush1.bf16.msra.mxu0 0
        %4398 = vmatprep.subr.bf16.mxu0 0
        %4399 = vmatpush1.bf16.msra.mxu0 0
        %4400 = vmatprep.subr.bf16.mxu0 0
        %4401 = vmatpush1.bf16.msra.mxu0 0
        %4402 = vmatprep.subr.bf16.mxu0 0
        %4403 = vmatpush1.bf16.msra.mxu0 0
        %4404 = vmatprep.subr.bf16.mxu0 0
        %4405 = vmatpush1.bf16.msra.mxu0 0
        %4406 = vmatprep.mubr.bf16.mxu0 0
        %4407 = vmatmul.mubr.bf16.gmra.mrb[0].mxu0 %v4327
        %v4408 = vpop.f32.mrb[0].mxu0
        %v4409 = vadd.f32 %v4299, %v4408
        %v4410 = vpop.f32.mrb[0].mxu0
        %v4411 = vpop.f32.mrb[0].mxu0
        %v4412 = vadd.f32 %v4299, %v4411
        %v4413 = vpop.f32.mrb[0].mxu0
        %4414 = vmatprep.mubr.bf16.mxu0 0
        %4415 = vmatmul.mubr.bf16.gmra.mrb[0].mxu0 %v4330
        %v4416 = vpop.f32.mrb[0].mxu0
        %v4417 = vadd.f32 %v4299, %v4416
        %v4418 = vpop.f32.mrb[0].mxu0
        %v4419 = vpop.f32.mrb[0].mxu0
        %v4420 = vadd.f32 %v4299, %v4419
        %v4421 = vpop.f32.mrb[0].mxu0
        %4422 = vmatprep.mubr.bf16.mxu0 0
        %4423 = vmatmul.mubr.bf16.gmra.mrb[0].mxu0 %v4333
        %v4424 = vpop.f32.mrb[0].mxu0
        %v4425 = vadd.f32 %v4299, %v4424
        %v4426 = vpop.f32.mrb[0].mxu0
        %v4427 = vpop.f32.mrb[0].mxu0
        %v4428 = vadd.f32 %v4299, %v4427
        %v4429 = vpop.f32.mrb[0].mxu0
        %4430 = vmatprep.mubr.bf16.mxu0 0
        %4431 = vmatmul.mubr.bf16.gmra.mrb[0].mxu0 %v4336
        %v4432 = vpop.f32.mrb[0].mxu0
        %v4433 = vadd.f32 %v4299, %v4432
        %v4434 = vpop.f32.mrb[0].mxu0
        %v4435 = vpop.f32.mrb[0].mxu0
        %v4436 = vadd.f32 %v4299, %v4435
        %v4437 = vpop.f32.mrb[0].mxu0
        %4438 = vmatprep.mubr.bf16.mxu0 0
        %4439 = vmatmul.mubr.bf16.gmra.mrb[0].mxu0 %v4339
        %v4440 = vpop.f32.mrb[0].mxu0
        %v4441 = vadd.f32 %v4299, %v4440
        %v4442 = vpop.f32.mrb[0].mxu0
        %v4443 = vpop.f32.mrb[0].mxu0
        %v4444 = vadd.f32 %v4299, %v4443
        %v4445 = vpop.f32.mrb[0].mxu0
        %4446 = vmatprep.mubr.bf16.mxu0 0
        %4447 = vmatmul.mubr.bf16.gmra.mrb[0].mxu0 %v4342
        %v4448 = vpop.f32.mrb[0].mxu0
        %v4449 = vadd.f32 %v4299, %v4448
        %v4450 = vpop.f32.mrb[0].mxu0
        %v4451 = vpop.f32.mrb[0].mxu0
        %v4452 = vadd.f32 %v4299, %v4451
        %v4453 = vpop.f32.mrb[0].mxu0
        %4454 = vmatprep.mubr.bf16.mxu0 0
        %4455 = vmatmul.mubr.bf16.gmra.mrb[0].mxu0 %v4345
        %v4456 = vpop.f32.mrb[0].mxu0
        %v4457 = vadd.f32 %v4299, %v4456
        %v4458 = vpop.f32.mrb[0].mxu0
        %v4459 = vpop.f32.mrb[0].mxu0
        %v4460 = vadd.f32 %v4299, %v4459
        %v4461 = vpop.f32.mrb[0].mxu0
        %4462 = vmatprep.mubr.bf16.mxu0 0
        %4463 = vmatmul.mubr.bf16.gmra.mrb[0].mxu0 %v4348
        %v4464 = vpop.f32.mrb[0].mxu0
        %v4465 = vadd.f32 %v4299, %v4464
        %v4466 = vpop.f32.mrb[0].mxu0
        %v4467 = vpop.f32.mrb[0].mxu0
        %v4468 = vadd.f32 %v4299, %v4467
        %v4469 = vpop.f32.mrb[0].mxu0
        %4470 = vmatprep.mubr.bf16.mxu0 0
        %4471 = vmatmul.mubr.bf16.gmra.mrb[0].mxu0 %v4351
        %v4472 = vpop.f32.mrb[0].mxu0
        %v4473 = vadd.f32 %v4299, %v4472
        %v4474 = vpop.f32.mrb[0].mxu0
        %v4475 = vpop.f32.mrb[0].mxu0
        %v4476 = vadd.f32 %v4299, %v4475
        %v4477 = vpop.f32.mrb[0].mxu0
        %4478 = vmatprep.mubr.bf16.mxu0 0
        %4479 = vmatmul.mubr.bf16.gmra.mrb[0].mxu0 %v4354
        %v4480 = vpop.f32.mrb[0].mxu0
        %v4481 = vadd.f32 %v4299, %v4480
        %v4482 = vpop.f32.mrb[0].mxu0
        %v4483 = vpop.f32.mrb[0].mxu0
        %v4484 = vadd.f32 %v4299, %v4483
        %v4485 = vpop.f32.mrb[0].mxu0
        %4486 = vmatprep.mubr.bf16.mxu0 0
        %4487 = vmatmul.mubr.bf16.gmra.mrb[0].mxu0 %v4357
        %v4488 = vpop.f32.mrb[0].mxu0
        %v4489 = vadd.f32 %v4299, %v4488
        %v4490 = vpop.f32.mrb[0].mxu0
        %v4491 = vpop.f32.mrb[0].mxu0
        %v4492 = vadd.f32 %v4299, %v4491
        %v4493 = vpop.f32.mrb[0].mxu0
        %4494 = vmatprep.mubr.bf16.mxu0 0
        %4495 = vmatmul.mubr.bf16.gmra.mrb[0].mxu0 %v4360
        %v4496 = vpop.f32.mrb[0].mxu0
        %v4497 = vadd.f32 %v4299, %v4496
        %v4498 = vpop.f32.mrb[0].mxu0
        %v4499 = vpop.f32.mrb[0].mxu0
        %v4500 = vadd.f32 %v4299, %v4499
        %v4501 = vpop.f32.mrb[0].mxu0
        %4502 = vmatprep.mubr.bf16.mxu0 0
        %4503 = vmatmul.mubr.bf16.gmra.mrb[0].mxu0 %v4363
        %v4504 = vpop.f32.mrb[0].mxu0
        %v4505 = vadd.f32 %v4299, %v4504
        %v4506 = vpop.f32.mrb[0].mxu0
        %v4507 = vpop.f32.mrb[0].mxu0
        %v4508 = vadd.f32 %v4299, %v4507
        %v4509 = vpop.f32.mrb[0].mxu0
        %4510 = vmatprep.mubr.bf16.mxu0 0
        %4511 = vmatmul.mubr.bf16.gmra.mrb[0].mxu0 %v4366
        %v4512 = vpop.f32.mrb[0].mxu0
        %v4513 = vadd.f32 %v4299, %v4512
        %v4514 = vpop.f32.mrb[0].mxu0
        %v4515 = vpop.f32.mrb[0].mxu0
        %v4516 = vadd.f32 %v4299, %v4515
        %v4517 = vpop.f32.mrb[0].mxu0
        %4518 = vmatprep.mubr.bf16.mxu0 0
        %4519 = vmatmul.mubr.bf16.gmra.mrb[0].mxu0 %v4369
        %v4520 = vpop.f32.mrb[0].mxu0
        %v4521 = vadd.f32 %v4299, %v4520
        %v4522 = vpop.f32.mrb[0].mxu0
        %v4523 = vpop.f32.mrb[0].mxu0
        %v4524 = vadd.f32 %v4299, %v4523
        %v4525 = vpop.f32.mrb[0].mxu0
        %4526 = vmatprep.mubr.bf16.mxu0 0
        %4527 = vmatmul.mubr.bf16.gmra.mrb[0].mxu0 %v4372
        %v4528 = vpop.f32.mrb[0].mxu0
        %v4529 = vadd.f32 %v4299, %v4528
        %v4530 = vpop.f32.mrb[0].mxu0
        %v4531 = vpop.f32.mrb[0].mxu0
        %v4532 = vadd.f32 %v4299, %v4531
        %v4533 = vpop.f32.mrb[0].mxu0
        %4534 = vdwg.mxu0
        %v4535 = vmax.f32 %v4409, 0.0
        %v4536 = vmax.f32 %v4412, 0.0
        %v4537 = vmax.f32 %v4417, 0.0
        %v4538 = vmax.f32 %v4420, 0.0
        %v4539 = vmax.f32 %v4425, 0.0
        %v4540 = vmax.f32 %v4428, 0.0
        %v4541 = vmax.f32 %v4433, 0.0
        %v4542 = vmax.f32 %v4436, 0.0
        %v4543 = vmax.f32 %v4441, 0.0
        %v4544 = vmax.f32 %v4444, 0.0
        %v4545 = vmax.f32 %v4449, 0.0
        %v4546 = vmax.f32 %v4452, 0.0
        %v4547 = vmax.f32 %v4457, 0.0
        %v4548 = vmax.f32 %v4460, 0.0
        %v4549 = vmax.f32 %v4465, 0.0
        %v4550 = vmax.f32 %v4468, 0.0
        %v4551 = vmax.f32 %v4473, 0.0
        %v4552 = vmax.f32 %v4476, 0.0
        %v4553 = vmax.f32 %v4481, 0.0
        %v4554 = vmax.f32 %v4484, 0.0
        %v4555 = vmax.f32 %v4489, 0.0
        %v4556 = vmax.f32 %v4492, 0.0
        %v4557 = vmax.f32 %v4497, 0.0
        %v4558 = vmax.f32 %v4500, 0.0
        %v4559 = vmax.f32 %v4505, 0.0
        %v4560 = vmax.f32 %v4508, 0.0
        %v4561 = vmax.f32 %v4513, 0.0
        %v4562 = vmax.f32 %v4516, 0.0
        %v4563 = vmax.f32 %v4521, 0.0
        %v4564 = vmax.f32 %v4524, 0.0
        %v4565 = vmax.f32 %v4529, 0.0
        %v4566 = vmax.f32 %v4532, 0.0
        %v4567 = vld [vmem:[%s10] sm:$0x1]
        %v4568 = vpack.c.bf16 %v4536, %v4535
        %v4569 = vpack.c.bf16 %v4538, %v4537
        %v4570 = vpack.c.bf16 %v4540, %v4539
        %v4571 = vpack.c.bf16 %v4542, %v4541
        %v4572 = vpack.c.bf16 %v4544, %v4543
        %v4573 = vpack.c.bf16 %v4546, %v4545
        %v4574 = vpack.c.bf16 %v4548, %v4547
        %v4575 = vpack.c.bf16 %v4550, %v4549
        %v4576 = vpack.c.bf16 %v4552, %v4551
        %v4577 = vpack.c.bf16 %v4554, %v4553
        %v4578 = vpack.c.bf16 %v4556, %v4555
        %v4579 = vpack.c.bf16 %v4558, %v4557
        %v4580 = vpack.c.bf16 %v4560, %v4559
        %v4581 = vpack.c.bf16 %v4562, %v4561
        %v4582 = vpack.c.bf16 %v4564, %v4563
        %v4583 = vpack.c.bf16 %v4566, %v4565
        %v4584 = vld [vmem:[#allocation2] sm:$0x1]
        %4586 = vset.pattern.permute.xlu0 0
        %4587 = vperm.xlu0 %4586, %v4584
        %v4588 = vpop.permute.xlu0 %4587
        %v4590 = vlaneseq
        %v4591 = vshrl.u32 %v4590, 7
        %v4592 = vsub.s32 0, %v4591
        %v4593 = vrot.slane %v4588, %v4592
        %v4595 = vsel %vm2090, %v4567, 0
        %v4598 = vsel %vm2090, %v4568, 0
        %v4601 = vsel %vm2090, %v4569, 0
        %v4604 = vsel %vm2090, %v4570, 0
        %v4607 = vsel %vm2090, %v4571, 0
        %v4610 = vsel %vm2090, %v4572, 0
        %v4613 = vsel %vm2090, %v4573, 0
        %v4616 = vsel %vm2090, %v4574, 0
        %v4619 = vsel %vm2090, %v4575, 0
        %v4622 = vsel %vm2090, %v4576, 0
        %v4625 = vsel %vm2090, %v4577, 0
        %v4628 = vsel %vm2090, %v4578, 0
        %v4631 = vsel %vm2090, %v4579, 0
        %v4634 = vsel %vm2090, %v4580, 0
        %v4637 = vsel %vm2090, %v4581, 0
        %v4640 = vsel %vm2090, %v4582, 0
        %v4643 = vsel %vm2090, %v4583, 0
        %4645 = vmatprep.subr.bf16.mxu0 0
        %4646 = vmatpush1.bf16.xpose.msra.mxu0 %v4598
        %4647 = vmatprep.subr.bf16.mxu0 0
        %4648 = vmatpush1.bf16.xpose.msra.mxu0 %v4601
        %4649 = vmatprep.subr.bf16.mxu0 0
        %4650 = vmatpush1.bf16.xpose.msra.mxu0 %v4604
        %4651 = vmatprep.subr.bf16.mxu0 0
        %4652 = vmatpush1.bf16.xpose.msra.mxu0 %v4607
        %4653 = vmatprep.subr.bf16.mxu0 0
        %4654 = vmatpush1.bf16.xpose.msra.mxu0 %v4610
        %4655 = vmatprep.subr.bf16.mxu0 0
        %4656 = vmatpush1.bf16.xpose.msra.mxu0 %v4613
        %4657 = vmatprep.subr.bf16.mxu0 0
        %4658 = vmatpush1.bf16.xpose.msra.mxu0 %v4616
        %4659 = vmatprep.subr.bf16.mxu0 0
        %4660 = vmatpush1.bf16.xpose.msra.mxu0 %v4619
        %4661 = vmatprep.subr.bf16.mxu0 0
        %4662 = vmatpush1.bf16.xpose.msra.mxu0 %v4622
        %4663 = vmatprep.subr.bf16.mxu0 0
        %4664 = vmatpush1.bf16.xpose.msra.mxu0 %v4625
        %4665 = vmatprep.subr.bf16.mxu0 0
        %4666 = vmatpush1.bf16.xpose.msra.mxu0 %v4628
        %4667 = vmatprep.subr.bf16.mxu0 0
        %4668 = vmatpush1.bf16.xpose.msra.mxu0 %v4631
        %4669 = vmatprep.subr.bf16.mxu0 0
        %4670 = vmatpush1.bf16.xpose.msra.mxu0 %v4634
        %4671 = vmatprep.subr.bf16.mxu0 0
        %4672 = vmatpush1.bf16.xpose.msra.mxu0 %v4637
        %4673 = vmatprep.subr.bf16.mxu0 0
        %4674 = vmatpush1.bf16.xpose.msra.mxu0 %v4640
        %4675 = vmatprep.subr.bf16.mxu0 0
        %4676 = vmatpush1.bf16.xpose.msra.mxu0 %v4643
        %4677 = vmatprep.mubr.bf16.mxu0 0
        %4678 = vmatmul.mubr.bf16.gmra.mrb[0].mxu0 %v4595
        %v4679 = vpop.f32.mrb[0].mxu0
        %v4680 = vadd.f32 %v4593, %v4679
        %v4681 = vpop.f32.mrb[0].mxu0
        %v4682 = vadd.f32 %v4593, %v4681
        %v4683 = vpop.f32.mrb[0].mxu0
        %v4684 = vpop.f32.mrb[0].mxu0
        %4685 = vdwg.mxu0
        %v4686 = vxor.u32 %v4680, 2147483648
        %v4687 = vxor.u32 %v4682, 2147483648
        %v4688 = vmul.f32 %v4686, 1.442695
        %v4689 = vpow.pop %v4688
        %v4690 = vmul.f32 %v4687, 1.442695
        %v4691 = vpow.pop %v4690
        %v4692 = vadd.f32 %v4689, 1.0
        %v4693 = vadd.f32 %v4691, 1.0
        %v4694 = vrcp.pop %v4692
        %v4695 = vmul.f32 1.0, %v4694
        %v4696 = vrcp.pop %v4693
        %v4697 = vmul.f32 1.0, %v4696
        %v4700 = vcombine.low %v4695, %v4697
        %v4702 = vunpack.c.l.s4 1966171168
        %v4703 = vunpack.c.0.s8 %v4702
        %v4704 = vlaneseq
        %v4705 = vshrl.u32 %v4704, 7
        %v4706 = vsub.s32 %v4703, %v4705
        %v4707 = vrot.slane %v4700, %v4706
        %v4709 = vunpack.c.l.s4 1966171168
        %v4710 = vunpack.c.0.s8 %v4709
        %v4711 = vlaneseq
        %v4712 = vshrl.u32 %v4711, 7
        %v4713 = vsub.s32 %v4710, %v4712
        %v4714 = vrot.slane %v4707, %v4713
        %v4716 = vlaneseq
        %vm4717 = vcmp.ge.s32.totalorder %v4716, 0
        %vm4718 = vcmp.lt.s32.totalorder %v4716, 256
        %vm4719 = vmand %vm4717, %vm4718
        %4720 = vst.msk [vmem:[%s427] sm:$0x3] %vm4719, %v4714
        %s4721 = sand.u32 %s298, 1
        %s4722 = scalar_lea.sflag [#allocation4], %s4721
        %s4723 = sand.u32 %s298, 1
        %s4724 = smul.addr %s4723, 2
        %s4725 = scalar_lea.vmem [#allocation3], %s4724
        // Predicated region
        $region69: #{wo_attention_prediction.1} parent=67 // pred_check
          %p4726 = pneg %p308
        $region70: #{wo_attention_prediction.1} parent=67 // pred_check_branch
          %4728 = sbr.rel (%p4726) target = $region72
        $region71: #{wo_attention_prediction.1} parent=67 // pred_region
          %s4730 = ssub.s32 32, 32
          %4731 = vsyncadd %s4722, %s4730
          %s4732 = smul.addr %s28, 2
          %s4733 = smul.addr %s4732, 16
          %s4734 = scalar_lea.hbm %s12, %s4733
          %s4736 = sshll.u32 %s4725, 4
          %s4737 = int_to_ptr.vmem [resolvable:$true] %s4736
          %4739 = dma.vmem_to_hbm [thread:$0]  %s4737, 32, %s4734, %s4722
        $region72: #{wo_attention_prediction.1} parent=67 // pred_fallthru
          _
      $region68: #{wo_attention_prediction.1} parent=5 // pred_fallthru
        _
      %p4740 = scmp.le.s32.totalorder 2, %s23
      // Predicated region
      $region73: #{wo_attention_prediction.1} parent=5 // pred_check
        %p4741 = pneg %p4740
      $region74: #{wo_attention_prediction.1} parent=5 // pred_check_branch
        %4743 = sbr.rel (%p4741) target = $region76
      $region75: #{wo_attention_prediction.1} parent=5 // pred_region
        %s4744 = ssub.s32 %s23, 2
        // Predicated region
        $region77: #{wo_attention_prediction.1} parent=75 // pred_check
          %p4745 = pneg %p314
        $region78: #{wo_attention_prediction.1} parent=75 // pred_check_branch
          %4747 = sbr.rel (%p4745) target = $region80
        $region79: #{wo_attention_prediction.1} parent=75 // pred_region
          %s4748 = sand.u32 %s299, 1
          %s4749 = scalar_lea.sflag [#allocation4], %s4748
          %s4750 = sand.u32 %s299, 1
          %s4751 = smul.addr %s4750, 2
          %s4752 = scalar_lea.vmem [#allocation3], %s4751
          %4753 = dma.done %s4749, 32
        $region80: #{wo_attention_prediction.1} parent=75 // pred_fallthru
          _
      $region76: #{wo_attention_prediction.1} parent=5 // pred_fallthru
        _
    $region6: #{wo_attention_prediction.1} parent=1 // loop_footer
      %s27 = sadd.s32 1, %s23
    $region7: #{wo_attention_prediction.1} parent=1 // loop_footer_branch
      %22 = sbr.rel target = $region3
    $region8: #{wo_attention_prediction.1} parent=1 // loop_exit
      _
    %4754 = vsyncpa [#allocation4], 1
    %s4755 = scalar_lea.sflag [#allocation4], 1
    %4756 = vsyncpa %s4755, 1

</llo_original>
